<compile_context>
chip_gen: v5e
topology: v5e:2x2
jax: 0.10.0
libtpu: 0.0.40
codegen_flags: <defaults>
</compile_context>

<pallas_src>
import numpy as np

import jax
import jax.numpy as jnp
from jax.experimental import pallas as pl
from jax.experimental.pallas import tpu as pltpu


# --------------------------------------------------------------------------
# Fixed network geometry (Net's fc1 = 16*5*5 forces a 3x32x32 input).
# --------------------------------------------------------------------------
KS = 5                        # conv kernel size
C1, CO1 = 3, 6                # conv1 in/out channels
H1 = W1 = 32                  # input spatial size
HO1 = H1 - KS + 1             # 28   conv1 output spatial
HQ1 = WQ1 = HO1 // 2          # 14   after pool1
C2, CO2 = CO1, 16             # conv2 in/out channels
HO2 = HQ1 - KS + 1            # 10   conv2 output spatial
HQ2 = WQ2 = HO2 // 2          # 5    after pool2
NF1, NF2, NCLS = 120, 84, 10  # fc sizes
LANE = 128                    # one pooling-parity column block padded to 128 lanes
ROW1 = 32                     # per-image sublane pitch of pool1 staging scratch
ROW2 = 16                     # per-image sublane pitch of pool2 staging scratch


# --------------------------------------------------------------------------
# The fused kernel (runs once; everything lives in VMEM)
# --------------------------------------------------------------------------
def _net_kernel(x_ref, w1b_ref, w2b_ref, wfc1_ref, wfc2_ref, wfc3_ref, bpk_ref,
                o_ref, s1_ref, s2_ref):
    def mm(a, b):
        return jnp.dot(a, b, preferred_element_type=jnp.float32)

    nimg = x_ref.shape[0]
    b1 = bpk_ref[0:1, :]                    # (1, 256) conv1 bias row
    b2 = bpk_ref[1:2, :]                    # (1, 256) conv2 bias row
    bf1 = bpk_ref[2:3, 0:LANE]              # (1, 128) fc1 bias (padded)
    bf2 = bpk_ref[2:3, LANE:2 * LANE]       # (1, 128) fc2 bias (padded)
    bf3 = bpk_ref[3:4, 0:LANE]              # (1, 128) fc3 bias (padded)

    for n in range(nimg):                   # tiny static batch: unrolled, images independent
        # ---- conv1 + ReLU: channels folded into K -> 5 GEMMs (28,128)x(128,256)
        acc1 = mm(x_ref[n, pl.ds(0, HO1), :], w1b_ref[0])
        for kh in range(1, KS):
            acc1 = acc1 + mm(x_ref[n, pl.ds(kh, HO1), :], w1b_ref[kh])
        r1 = jnp.maximum(acc1 + b1, 0.0)                               # (28, 256)
        # pool1: W = aligned half/half lane max, H = stride-2 scratch reads + max
        s1_ref[n * ROW1:n * ROW1 + HO1, :] = jnp.maximum(r1[:, :LANE], r1[:, LANE:])
        p1 = jnp.maximum(s1_ref[pl.ds(n * ROW1, HQ1, stride=2), :],
                         s1_ref[pl.ds(n * ROW1 + 1, HQ1, stride=2), :])  # (14, 128)

        # ---- conv2 + ReLU: 5 GEMMs (10,128)x(128,256) ---------------------------
        acc2 = mm(p1[0:HO2, :], w2b_ref[0])
        for kh in range(1, KS):
            acc2 = acc2 + mm(p1[kh:kh + HO2, :], w2b_ref[kh])
        r2 = jnp.maximum(acc2 + b2, 0.0)                               # (10, 256)
        # pool2: W-max now; the H direction is fused into the fc1 LHS reads below
        s2_ref[n * ROW2:n * ROW2 + HO2, :] = jnp.maximum(r2[:, :LANE], r2[:, LANE:])

    # ---- fc1 (400->120): batch folded into M; pool2-H fused into strided reads --
    accf = None
    for h in range(HQ2):
        lhs = jnp.maximum(s2_ref[pl.ds(2 * h, nimg, stride=ROW2), :],
                          s2_ref[pl.ds(2 * h + 1, nimg, stride=ROW2), :])  # (N, 128)
        t = mm(lhs, wfc1_ref[h])
        accf = t if accf is None else accf + t
    f1 = jnp.maximum(accf + bf1, 0.0)                                  # (N, 128)
    f2 = jnp.maximum(mm(f1, wfc2_ref[...]) + bf2, 0.0)                 # (N, 128)
    # lane-dense logits slab (cols 10..127 are exactly zero by weight padding)
    o_ref[...] = mm(f2, wfc3_ref[...]) + bf3                           # (N, 128)


def _full_block(shape):
    """BlockSpec covering the whole array (grid=(1,))."""
    nd = len(shape)
    return pl.BlockSpec(shape, lambda i, _nd=nd: (0,) * _nd)


def net_forward(x_nchw, p):
    """x_nchw: (N, 3, 32, 32) f32 -> logits (N, 10) f32."""
    n = x_nchw.shape[0]
    # lane-dense input slab: lane = c*32 + w, zero-padded 96 -> 128 lanes
    xs = jnp.transpose(x_nchw, (0, 2, 1, 3)).reshape(n, H1, C1 * W1)
    xs = jnp.pad(xs, ((0, 0), (0, 0), (0, LANE - C1 * W1)))
    ins = (xs, p["w1b"], p["w2b"], p["wfc1"], p["wfc2"], p["wfc3"], p["bpack"])
    out = pl.pallas_call(
        _net_kernel,
        out_shape=jax.ShapeDtypeStruct((n, LANE), jnp.float32),
        grid=(1,),
        in_specs=[_full_block(a.shape) for a in ins],
        out_specs=_full_block((n, LANE)),
        scratch_shapes=[pltpu.VMEM((n * ROW1, LANE), jnp.float32),   # pool1 staging
                        pltpu.VMEM((n * ROW2, LANE), jnp.float32)],  # pool2 staging
    )(*ins)
    return out[:, :NCLS]


# --------------------------------------------------------------------------
# One-time weight re-layout (host-side numpy, outside the jitted forward)
# --------------------------------------------------------------------------
def prepare_params(params):
    w1 = np.asarray(params["conv1_w"], np.float32)   # (6, 3, 5, 5)
    b1 = np.asarray(params["conv1_b"], np.float32)   # (6,)
    w2 = np.asarray(params["conv2_w"], np.float32)   # (16, 6, 5, 5)
    b2 = np.asarray(params["conv2_b"], np.float32)   # (16,)
    f1w = np.asarray(params["fc1_w"], np.float32)    # (120, 400)
    f1b = np.asarray(params["fc1_b"], np.float32)
    f2w = np.asarray(params["fc2_w"], np.float32)    # (84, 120)
    f2b = np.asarray(params["fc2_b"], np.float32)
    f3w = np.asarray(params["fc3_w"], np.float32)    # (10, 84)
    f3b = np.asarray(params["fc3_b"], np.float32)

    # conv1 banded weights: K lane = c*32 + w_in, out col = par*128 + wq*6 + co,
    # output column for spatial wo = 2*wq + par (pooling parity in separate 128-blocks)
    w1b = np.zeros((KS, LANE, 2 * LANE), np.float32)
    b1r = np.zeros((2 * LANE,), np.float32)
    for par in range(2):
        for wq in range(WQ1):
            wo = 2 * wq + par
            col = par * LANE + wq * CO1
            b1r[col:col + CO1] = b1
            for kh in range(KS):
                for kw in range(KS):
                    for c in range(C1):
                        w1b[kh, c * W1 + wo + kw, col:col + CO1] = w1[:, c, kh, kw]

    # conv2 banded weights: K lane = w_in*6 + c (pool1 layout), out col as above w/ CO2
    w2b = np.zeros((KS, LANE, 2 * LANE), np.float32)
    b2r = np.zeros((2 * LANE,), np.float32)
    for par in range(2):
        for wq in range(WQ2):
            wo = 2 * wq + par
            col = par * LANE + wq * CO2
            b2r[col:col + CO2] = b2
            for kh in range(KS):
                for kw in range(KS):
                    for c in range(C2):
                        w2b[kh, (wo + kw) * C2 + c, col:col + CO2] = w2[:, c, kh, kw]

    # fc1: rows = pool2 lane layout (w*16 + c), torch flatten index = c*25 + h*5 + w,
    # output padded to 128 lanes
    wfc1 = np.zeros((HQ2, LANE, LANE), np.float32)
    for h in range(HQ2):
        for w in range(WQ2):
            for c in range(CO2):
                wfc1[h, w * CO2 + c, :NF1] = f1w[:, c * (HQ2 * WQ2) + h * WQ2 + w]

    wfc2 = np.zeros((LANE, LANE), np.float32)
    wfc2[:NF1, :NF2] = f2w.T
    wfc3 = np.zeros((LANE, LANE), np.float32)
    wfc3[:NF2, :NCLS] = f3w.T

    # All tiny constants packed into ONE array (one DMA descriptor):
    #   row 0 = conv1 bias row (256), row 1 = conv2 bias row (256),
    #   row 2 = [fc1 bias (128) | fc2 bias (128)], row 3 = [fc3 bias (128) | 0]
    bpack = np.zeros((4, 2 * LANE), np.float32)
    bpack[0] = b1r
    bpack[1] = b2r
    bpack[2, :NF1] = f1b
    bpack[2, LANE:LANE + NF2] = f2b
    bpack[3, :NCLS] = f3b

    # Correctness depends on every padded lane/row/column being exactly zero
    # (padded input lanes, pooled-activation padding and fc padding all flow
    # through these zeros).  Guard against future edits.
    assert not w1b[:, C1 * W1:, :].any()
    assert not w1b[:, :, WQ1 * CO1:LANE].any() and not w1b[:, :, LANE + WQ1 * CO1:].any()
    assert not w2b[:, WQ1 * CO1:, :].any()
    assert not w2b[:, :, WQ2 * CO2:LANE].any() and not w2b[:, :, LANE + WQ2 * CO2:].any()
    assert not wfc1[:, WQ2 * CO2:, :].any() and not wfc1[:, :, NF1:].any()
    assert not wfc2[NF1:, :].any() and not wfc2[:, NF2:].any()
    assert not wfc3[NF2:, :].any() and not wfc3[:, NCLS:].any()
    assert not b1r[WQ1 * CO1:LANE].any() and not b1r[LANE + WQ1 * CO1:].any()
    assert not b2r[WQ2 * CO2:LANE].any() and not b2r[LANE + WQ2 * CO2:].any()

    prepped = {"w1b": w1b, "w2b": w2b, "wfc1": wfc1, "wfc2": wfc2,
               "wfc3": wfc3, "bpack": bpack}
    return {k: jnp.asarray(v) for k, v in prepped.items()}


# --------------------------------------------------------------------------
# Deterministic parameter init (PyTorch shape conventions)
# --------------------------------------------------------------------------
def init_params(key):
    ks = jax.random.split(key, 10)

    def w(k, shape, fan_in):
        return jax.random.normal(k, shape, jnp.float32) / jnp.sqrt(
            jnp.float32(fan_in))

    return {
        "conv1_w": w(ks[0], (6, 3, 5, 5), 3 * 5 * 5),
        "conv1_b": w(ks[1], (6,), 3 * 5 * 5),
        "conv2_w": w(ks[2], (16, 6, 5, 5), 6 * 5 * 5),
        "conv2_b": w(ks[3], (16,), 6 * 5 * 5),
        "fc1_w": w(ks[4], (120, 400), 400),   # (out, in) like nn.Linear
        "fc1_b": w(ks[5], (120,), 400),
        "fc2_w": w(ks[6], (84, 120), 120),
        "fc2_b": w(ks[7], (84,), 120),
        "fc3_w": w(ks[8], (10, 84), 84),
        "fc3_b": w(ks[9], (10,), 84),
    }


# --------------------------------------------------------------------------
# Independent pure-XLA reference (sanity check of the fused kernel)
# --------------------------------------------------------------------------
def _reference_forward(x, params):
    hp = jax.lax.Precision.HIGHEST
    dn = ("NCHW", "OIHW", "NCHW")
    y = jax.lax.conv_general_dilated(x, params["conv1_w"], (1, 1), "VALID",
                                     dimension_numbers=dn, precision=hp)
    y = jax.nn.relu(y + params["conv1_b"][None, :, None, None])
    y = jax.lax.reduce_window(y, jnp.float32(-jnp.inf), jax.lax.max,
                              (1, 1, 2, 2), (1, 1, 2, 2), "VALID")
    y = jax.lax.conv_general_dilated(y, params["conv2_w"], (1, 1), "VALID",
                                     dimension_numbers=dn, precision=hp)
    y = jax.nn.relu(y + params["conv2_b"][None, :, None, None])
    y = jax.lax.reduce_window(y, jnp.float32(-jnp.inf), jax.lax.max,
                              (1, 1, 2, 2), (1, 1, 2, 2), "VALID")
    v = y.reshape(y.shape[0], -1)                       # torch.flatten(x, 1)
    h = jax.nn.relu(jnp.dot(v, params["fc1_w"].T, precision=hp) + params["fc1_b"])
    h = jax.nn.relu(jnp.dot(h, params["fc2_w"].T, precision=hp) + params["fc2_b"])
    return jnp.dot(h, params["fc3_w"].T, precision=hp) + params["fc3_b"]


if __name__ == "__main__":
    key = jax.random.PRNGKey(0)
    kx, kp = jax.random.split(key)
    # Net's fc1 (16*5*5) forces a 3-channel 32x32 input; batch = 2.
    x = jax.random.normal(kx, (2, 3, 32, 32), jnp.float32)
    params = init_params(kp)
    prepped = prepare_params(params)          # one-time host-side weight re-layout

    out = jax.block_until_ready(jax.jit(net_forward)(x, prepped))
    assert out.shape == (2, NCLS) and out.dtype == jnp.float32

    ref = jax.block_until_ready(_reference_forward(x, params))
    # f32 end-to-end -> tight tolerance (was 5e-2; a real layout bug would be O(1))
    np.testing.assert_allclose(np.asarray(out), np.asarray(ref),
                               rtol=5e-4, atol=1e-5)
    print("KERNEL_OK")
</pallas_src>

<mosaic_0001>
module attributes {stable_mosaic.version = 11 : i64} {
  func.func @_net_kernel(%arg0: i32, %arg1: memref<2x32x128xf32, #tpu.memory_space<vmem>>, %arg2: memref<5x128x256xf32, #tpu.memory_space<vmem>>, %arg3: memref<5x128x256xf32, #tpu.memory_space<vmem>>, %arg4: memref<5x128x128xf32, #tpu.memory_space<vmem>>, %arg5: memref<128x128xf32, #tpu.memory_space<vmem>>, %arg6: memref<128x128xf32, #tpu.memory_space<vmem>>, %arg7: memref<4x256xf32, #tpu.memory_space<vmem>>, %arg8: memref<2x128xf32, #tpu.memory_space<vmem>>, %arg9: memref<64x128xf32, #tpu.memory_space<vmem>>, %arg10: memref<32x128xf32, #tpu.memory_space<vmem>>) attributes {dimension_semantics = [#tpu.dimension_semantics<arbitrary>], iteration_bounds = array<i64: 1>, scalar_prefetch = 0 : i64, scratch_operands = 2 : i64, tpu.core_type = #tpu.core_type<tc>, window_params = [{pipeline_mode = #tpu.pipeline_mode<synchronous>, transform_indices = @transform_0, window_bounds = array<i64: 2, 32, 128>}, {pipeline_mode = #tpu.pipeline_mode<synchronous>, transform_indices = @transform_1, window_bounds = array<i64: 5, 128, 256>}, {pipeline_mode = #tpu.pipeline_mode<synchronous>, transform_indices = @transform_2, window_bounds = array<i64: 5, 128, 256>}, {pipeline_mode = #tpu.pipeline_mode<synchronous>, transform_indices = @transform_3, window_bounds = array<i64: 5, 128, 128>}, {pipeline_mode = #tpu.pipeline_mode<synchronous>, transform_indices = @transform_4, window_bounds = array<i64: 128, 128>}, {pipeline_mode = #tpu.pipeline_mode<synchronous>, transform_indices = @transform_5, window_bounds = array<i64: 128, 128>}, {pipeline_mode = #tpu.pipeline_mode<synchronous>, transform_indices = @transform_6, window_bounds = array<i64: 4, 256>}, {pipeline_mode = #tpu.pipeline_mode<synchronous>, transform_indices = @transform_7, window_bounds = array<i64: 2, 128>}]} {
    %c0 = arith.constant 0 : index
    %c0_0 = arith.constant 0 : index
    %0 = vector.load %arg7[%c0, %c0_0] : memref<4x256xf32, #tpu.memory_space<vmem>>, vector<1x256xf32>
    %c1 = arith.constant 1 : index
    %c0_1 = arith.constant 0 : index
    %1 = vector.load %arg7[%c1, %c0_1] : memref<4x256xf32, #tpu.memory_space<vmem>>, vector<1x256xf32>
    %c2 = arith.constant 2 : index
    %c0_2 = arith.constant 0 : index
    %2 = vector.load %arg7[%c2, %c0_2] : memref<4x256xf32, #tpu.memory_space<vmem>>, vector<1x128xf32>
    %c2_3 = arith.constant 2 : index
    %c128 = arith.constant 128 : index
    %3 = vector.load %arg7[%c2_3, %c128] : memref<4x256xf32, #tpu.memory_space<vmem>>, vector<1x128xf32>
    %c3 = arith.constant 3 : index
    %c0_4 = arith.constant 0 : index
    %4 = vector.load %arg7[%c3, %c0_4] : memref<4x256xf32, #tpu.memory_space<vmem>>, vector<1x128xf32>
    %c0_5 = arith.constant 0 : index
    %c0_6 = arith.constant 0 : index
    %c0_7 = arith.constant 0 : index
    %5 = vector.load %arg1[%c0_5, %c0_6, %c0_7] : memref<2x32x128xf32, #tpu.memory_space<vmem>>, vector<1x28x128xf32>
    %6 = vector.shape_cast %5 : vector<1x28x128xf32> to vector<28x128xf32>
    %c0_8 = arith.constant 0 : index
    %c0_9 = arith.constant 0 : index
    %c0_10 = arith.constant 0 : index
    %7 = vector.load %arg2[%c0_8, %c0_9, %c0_10] : memref<5x128x256xf32, #tpu.memory_space<vmem>>, vector<1x128x256xf32>
    %8 = vector.shape_cast %7 : vector<1x128x256xf32> to vector<128x256xf32>
    %cst = arith.constant dense<0.000000e+00> : vector<28x256xf32>
    %9 = tpu.matmul %6, %8, %cst {dimension_numbers = #tpu.dot_dimension_numbers<[1], [0], [0], [1], [0, 0, 1, 1], [], []>} : vector<28x128xf32>, vector<128x256xf32>, vector<28x256xf32> -> vector<28x256xf32>
    %c0_11 = arith.constant 0 : index
    %c1_12 = arith.constant 1 : index
    %c0_13 = arith.constant 0 : index
    %10 = vector.load %arg1[%c0_11, %c1_12, %c0_13] : memref<2x32x128xf32, #tpu.memory_space<vmem>>, vector<1x28x128xf32>
    %11 = vector.shape_cast %10 : vector<1x28x128xf32> to vector<28x128xf32>
    %c1_14 = arith.constant 1 : index
    %c0_15 = arith.constant 0 : index
    %c0_16 = arith.constant 0 : index
    %12 = vector.load %arg2[%c1_14, %c0_15, %c0_16] : memref<5x128x256xf32, #tpu.memory_space<vmem>>, vector<1x128x256xf32>
    %13 = vector.shape_cast %12 : vector<1x128x256xf32> to vector<128x256xf32>
    %cst_17 = arith.constant dense<0.000000e+00> : vector<28x256xf32>
    %14 = tpu.matmul %11, %13, %cst_17 {dimension_numbers = #tpu.dot_dimension_numbers<[1], [0], [0], [1], [0, 0, 1, 1], [], []>} : vector<28x128xf32>, vector<128x256xf32>, vector<28x256xf32> -> vector<28x256xf32>
    %15 = arith.addf %9, %14 : vector<28x256xf32>
    %c0_18 = arith.constant 0 : index
    %c2_19 = arith.constant 2 : index
    %c0_20 = arith.constant 0 : index
    %16 = vector.load %arg1[%c0_18, %c2_19, %c0_20] : memref<2x32x128xf32, #tpu.memory_space<vmem>>, vector<1x28x128xf32>
    %17 = vector.shape_cast %16 : vector<1x28x128xf32> to vector<28x128xf32>
    %c2_21 = arith.constant 2 : index
    %c0_22 = arith.constant 0 : index
    %c0_23 = arith.constant 0 : index
    %18 = vector.load %arg2[%c2_21, %c0_22, %c0_23] : memref<5x128x256xf32, #tpu.memory_space<vmem>>, vector<1x128x256xf32>
    %19 = vector.shape_cast %18 : vector<1x128x256xf32> to vector<128x256xf32>
    %cst_24 = arith.constant dense<0.000000e+00> : vector<28x256xf32>
    %20 = tpu.matmul %17, %19, %cst_24 {dimension_numbers = #tpu.dot_dimension_numbers<[1], [0], [0], [1], [0, 0, 1, 1], [], []>} : vector<28x128xf32>, vector<128x256xf32>, vector<28x256xf32> -> vector<28x256xf32>
    %21 = arith.addf %15, %20 : vector<28x256xf32>
    %c0_25 = arith.constant 0 : index
    %c3_26 = arith.constant 3 : index
    %c0_27 = arith.constant 0 : index
    %22 = vector.load %arg1[%c0_25, %c3_26, %c0_27] : memref<2x32x128xf32, #tpu.memory_space<vmem>>, vector<1x28x128xf32>
    %23 = vector.shape_cast %22 : vector<1x28x128xf32> to vector<28x128xf32>
    %c3_28 = arith.constant 3 : index
    %c0_29 = arith.constant 0 : index
    %c0_30 = arith.constant 0 : index
    %24 = vector.load %arg2[%c3_28, %c0_29, %c0_30] : memref<5x128x256xf32, #tpu.memory_space<vmem>>, vector<1x128x256xf32>
    %25 = vector.shape_cast %24 : vector<1x128x256xf32> to vector<128x256xf32>
    %cst_31 = arith.constant dense<0.000000e+00> : vector<28x256xf32>
    %26 = tpu.matmul %23, %25, %cst_31 {dimension_numbers = #tpu.dot_dimension_numbers<[1], [0], [0], [1], [0, 0, 1, 1], [], []>} : vector<28x128xf32>, vector<128x256xf32>, vector<28x256xf32> -> vector<28x256xf32>
    %27 = arith.addf %21, %26 : vector<28x256xf32>
    %c0_32 = arith.constant 0 : index
    %c4 = arith.constant 4 : index
    %c0_33 = arith.constant 0 : index
    %28 = vector.load %arg1[%c0_32, %c4, %c0_33] : memref<2x32x128xf32, #tpu.memory_space<vmem>>, vector<1x28x128xf32>
    %29 = vector.shape_cast %28 : vector<1x28x128xf32> to vector<28x128xf32>
    %c4_34 = arith.constant 4 : index
    %c0_35 = arith.constant 0 : index
    %c0_36 = arith.constant 0 : index
    %30 = vector.load %arg2[%c4_34, %c0_35, %c0_36] : memref<5x128x256xf32, #tpu.memory_space<vmem>>, vector<1x128x256xf32>
    %31 = vector.shape_cast %30 : vector<1x128x256xf32> to vector<128x256xf32>
    %cst_37 = arith.constant dense<0.000000e+00> : vector<28x256xf32>
    %32 = tpu.matmul %29, %31, %cst_37 {dimension_numbers = #tpu.dot_dimension_numbers<[1], [0], [0], [1], [0, 0, 1, 1], [], []>} : vector<28x128xf32>, vector<128x256xf32>, vector<28x256xf32> -> vector<28x256xf32>
    %33 = arith.addf %27, %32 : vector<28x256xf32>
    %34 = vector.broadcast %0 : vector<1x256xf32> to vector<28x256xf32>
    %35 = arith.addf %33, %34 : vector<28x256xf32>
    %cst_38 = arith.constant 0.000000e+00 : f32
    %36 = vector.broadcast %cst_38 : f32 to vector<28x256xf32>
    %37 = arith.maximumf %35, %36 : vector<28x256xf32>
    %38 = vector.extract_strided_slice %37 {offsets = [0, 0], sizes = [28, 128], strides = [1, 1]} : vector<28x256xf32> to vector<28x128xf32>
    %39 = vector.extract_strided_slice %37 {offsets = [0, 128], sizes = [28, 128], strides = [1, 1]} : vector<28x256xf32> to vector<28x128xf32>
    %40 = arith.maximumf %38, %39 : vector<28x128xf32>
    %c0_39 = arith.constant 0 : index
    %c0_40 = arith.constant 0 : index
    %41 = vector.load %arg9[%c0_39, %c0_40] : memref<64x128xf32, #tpu.memory_space<vmem>>, vector<28x128xf32>
    tpu.vector_store %arg9[%c0_39, %c0_40], %40 {strides = array<i32>} : memref<64x128xf32, #tpu.memory_space<vmem>>, vector<28x128xf32>,
    %c0_41 = arith.constant 0 : index
    %c0_42 = arith.constant 0 : index
    %42 = tpu.strided_load %arg9[%c0_41, %c0_42] {strides = array<i32: 2, 1>} : memref<64x128xf32, #tpu.memory_space<vmem>>, vector<14x128xf32>
    %c1_43 = arith.constant 1 : index
    %c0_44 = arith.constant 0 : index
    %43 = tpu.strided_load %arg9[%c1_43, %c0_44] {strides = array<i32: 2, 1>} : memref<64x128xf32, #tpu.memory_space<vmem>>, vector<14x128xf32>
    %44 = arith.maximumf %42, %43 : vector<14x128xf32>
    %45 = vector.extract_strided_slice %44 {offsets = [0, 0], sizes = [10, 128], strides = [1, 1]} : vector<14x128xf32> to vector<10x128xf32>
    %c0_45 = arith.constant 0 : index
    %c0_46 = arith.constant 0 : index
    %c0_47 = arith.constant 0 : index
    %46 = vector.load %arg3[%c0_45, %c0_46, %c0_47] : memref<5x128x256xf32, #tpu.memory_space<vmem>>, vector<1x128x256xf32>
    %47 = vector.shape_cast %46 : vector<1x128x256xf32> to vector<128x256xf32>
    %cst_48 = arith.constant dense<0.000000e+00> : vector<10x256xf32>
    %48 = tpu.matmul %45, %47, %cst_48 {dimension_numbers = #tpu.dot_dimension_numbers<[1], [0], [0], [1], [0, 0, 1, 1], [], []>} : vector<10x128xf32>, vector<128x256xf32>, vector<10x256xf32> -> vector<10x256xf32>
    %49 = vector.extract_strided_slice %44 {offsets = [1, 0], sizes = [10, 128], strides = [1, 1]} : vector<14x128xf32> to vector<10x128xf32>
    %c1_49 = arith.constant 1 : index
    %c0_50 = arith.constant 0 : index
    %c0_51 = arith.constant 0 : index
    %50 = vector.load %arg3[%c1_49, %c0_50, %c0_51] : memref<5x128x256xf32, #tpu.memory_space<vmem>>, vector<1x128x256xf32>
    %51 = vector.shape_cast %50 : vector<1x128x256xf32> to vector<128x256xf32>
    %cst_52 = arith.constant dense<0.000000e+00> : vector<10x256xf32>
    %52 = tpu.matmul %49, %51, %cst_52 {dimension_numbers = #tpu.dot_dimension_numbers<[1], [0], [0], [1], [0, 0, 1, 1], [], []>} : vector<10x128xf32>, vector<128x256xf32>, vector<10x256xf32> -> vector<10x256xf32>
    %53 = arith.addf %48, %52 : vector<10x256xf32>
    %54 = vector.extract_strided_slice %44 {offsets = [2, 0], sizes = [10, 128], strides = [1, 1]} : vector<14x128xf32> to vector<10x128xf32>
    %c2_53 = arith.constant 2 : index
    %c0_54 = arith.constant 0 : index
    %c0_55 = arith.constant 0 : index
    %55 = vector.load %arg3[%c2_53, %c0_54, %c0_55] : memref<5x128x256xf32, #tpu.memory_space<vmem>>, vector<1x128x256xf32>
    %56 = vector.shape_cast %55 : vector<1x128x256xf32> to vector<128x256xf32>
    %cst_56 = arith.constant dense<0.000000e+00> : vector<10x256xf32>
    %57 = tpu.matmul %54, %56, %cst_56 {dimension_numbers = #tpu.dot_dimension_numbers<[1], [0], [0], [1], [0, 0, 1, 1], [], []>} : vector<10x128xf32>, vector<128x256xf32>, vector<10x256xf32> -> vector<10x256xf32>
    %58 = arith.addf %53, %57 : vector<10x256xf32>
    %59 = vector.extract_strided_slice %44 {offsets = [3, 0], sizes = [10, 128], strides = [1, 1]} : vector<14x128xf32> to vector<10x128xf32>
    %c3_57 = arith.constant 3 : index
    %c0_58 = arith.constant 0 : index
    %c0_59 = arith.constant 0 : index
    %60 = vector.load %arg3[%c3_57, %c0_58, %c0_59] : memref<5x128x256xf32, #tpu.memory_space<vmem>>, vector<1x128x256xf32>
    %61 = vector.shape_cast %60 : vector<1x128x256xf32> to vector<128x256xf32>
    %cst_60 = arith.constant dense<0.000000e+00> : vector<10x256xf32>
    %62 = tpu.matmul %59, %61, %cst_60 {dimension_numbers = #tpu.dot_dimension_numbers<[1], [0], [0], [1], [0, 0, 1, 1], [], []>} : vector<10x128xf32>, vector<128x256xf32>, vector<10x256xf32> -> vector<10x256xf32>
    %63 = arith.addf %58, %62 : vector<10x256xf32>
    %64 = vector.extract_strided_slice %44 {offsets = [4, 0], sizes = [10, 128], strides = [1, 1]} : vector<14x128xf32> to vector<10x128xf32>
    %c4_61 = arith.constant 4 : index
    %c0_62 = arith.constant 0 : index
    %c0_63 = arith.constant 0 : index
    %65 = vector.load %arg3[%c4_61, %c0_62, %c0_63] : memref<5x128x256xf32, #tpu.memory_space<vmem>>, vector<1x128x256xf32>
    %66 = vector.shape_cast %65 : vector<1x128x256xf32> to vector<128x256xf32>
    %cst_64 = arith.constant dense<0.000000e+00> : vector<10x256xf32>
    %67 = tpu.matmul %64, %66, %cst_64 {dimension_numbers = #tpu.dot_dimension_numbers<[1], [0], [0], [1], [0, 0, 1, 1], [], []>} : vector<10x128xf32>, vector<128x256xf32>, vector<10x256xf32> -> vector<10x256xf32>
    %68 = arith.addf %63, %67 : vector<10x256xf32>
    %69 = vector.broadcast %1 : vector<1x256xf32> to vector<10x256xf32>
    %70 = arith.addf %68, %69 : vector<10x256xf32>
    %cst_65 = arith.constant 0.000000e+00 : f32
    %71 = vector.broadcast %cst_65 : f32 to vector<10x256xf32>
    %72 = arith.maximumf %70, %71 : vector<10x256xf32>
    %73 = vector.extract_strided_slice %72 {offsets = [0, 0], sizes = [10, 128], strides = [1, 1]} : vector<10x256xf32> to vector<10x128xf32>
    %74 = vector.extract_strided_slice %72 {offsets = [0, 128], sizes = [10, 128], strides = [1, 1]} : vector<10x256xf32> to vector<10x128xf32>
    %75 = arith.maximumf %73, %74 : vector<10x128xf32>
    %c0_66 = arith.constant 0 : index
    %c0_67 = arith.constant 0 : index
    %76 = vector.load %arg10[%c0_66, %c0_67] : memref<32x128xf32, #tpu.memory_space<vmem>>, vector<10x128xf32>
    tpu.vector_store %arg10[%c0_66, %c0_67], %75 {strides = array<i32>} : memref<32x128xf32, #tpu.memory_space<vmem>>, vector<10x128xf32>,
    %c1_68 = arith.constant 1 : index
    %c0_69 = arith.constant 0 : index
    %c0_70 = arith.constant 0 : index
    %77 = vector.load %arg1[%c1_68, %c0_69, %c0_70] : memref<2x32x128xf32, #tpu.memory_space<vmem>>, vector<1x28x128xf32>
    %78 = vector.shape_cast %77 : vector<1x28x128xf32> to vector<28x128xf32>
    %c0_71 = arith.constant 0 : index
    %c0_72 = arith.constant 0 : index
    %c0_73 = arith.constant 0 : index
    %79 = vector.load %arg2[%c0_71, %c0_72, %c0_73] : memref<5x128x256xf32, #tpu.memory_space<vmem>>, vector<1x128x256xf32>
    %80 = vector.shape_cast %79 : vector<1x128x256xf32> to vector<128x256xf32>
    %cst_74 = arith.constant dense<0.000000e+00> : vector<28x256xf32>
    %81 = tpu.matmul %78, %80, %cst_74 {dimension_numbers = #tpu.dot_dimension_numbers<[1], [0], [0], [1], [0, 0, 1, 1], [], []>} : vector<28x128xf32>, vector<128x256xf32>, vector<28x256xf32> -> vector<28x256xf32>
    %c1_75 = arith.constant 1 : index
    %c1_76 = arith.constant 1 : index
    %c0_77 = arith.constant 0 : index
    %82 = vector.load %arg1[%c1_75, %c1_76, %c0_77] : memref<2x32x128xf32, #tpu.memory_space<vmem>>, vector<1x28x128xf32>
    %83 = vector.shape_cast %82 : vector<1x28x128xf32> to vector<28x128xf32>
    %c1_78 = arith.constant 1 : index
    %c0_79 = arith.constant 0 : index
    %c0_80 = arith.constant 0 : index
    %84 = vector.load %arg2[%c1_78, %c0_79, %c0_80] : memref<5x128x256xf32, #tpu.memory_space<vmem>>, vector<1x128x256xf32>
    %85 = vector.shape_cast %84 : vector<1x128x256xf32> to vector<128x256xf32>
    %cst_81 = arith.constant dense<0.000000e+00> : vector<28x256xf32>
    %86 = tpu.matmul %83, %85, %cst_81 {dimension_numbers = #tpu.dot_dimension_numbers<[1], [0], [0], [1], [0, 0, 1, 1], [], []>} : vector<28x128xf32>, vector<128x256xf32>, vector<28x256xf32> -> vector<28x256xf32>
    %87 = arith.addf %81, %86 : vector<28x256xf32>
    %c1_82 = arith.constant 1 : index
    %c2_83 = arith.constant 2 : index
    %c0_84 = arith.constant 0 : index
    %88 = vector.load %arg1[%c1_82, %c2_83, %c0_84] : memref<2x32x128xf32, #tpu.memory_space<vmem>>, vector<1x28x128xf32>
    %89 = vector.shape_cast %88 : vector<1x28x128xf32> to vector<28x128xf32>
    %c2_85 = arith.constant 2 : index
    %c0_86 = arith.constant 0 : index
    %c0_87 = arith.constant 0 : index
    %90 = vector.load %arg2[%c2_85, %c0_86, %c0_87] : memref<5x128x256xf32, #tpu.memory_space<vmem>>, vector<1x128x256xf32>
    %91 = vector.shape_cast %90 : vector<1x128x256xf32> to vector<128x256xf32>
    %cst_88 = arith.constant dense<0.000000e+00> : vector<28x256xf32>
    %92 = tpu.matmul %89, %91, %cst_88 {dimension_numbers = #tpu.dot_dimension_numbers<[1], [0], [0], [1], [0, 0, 1, 1], [], []>} : vector<28x128xf32>, vector<128x256xf32>, vector<28x256xf32> -> vector<28x256xf32>
    %93 = arith.addf %87, %92 : vector<28x256xf32>
    %c1_89 = arith.constant 1 : index
    %c3_90 = arith.constant 3 : index
    %c0_91 = arith.constant 0 : index
    %94 = vector.load %arg1[%c1_89, %c3_90, %c0_91] : memref<2x32x128xf32, #tpu.memory_space<vmem>>, vector<1x28x128xf32>
    %95 = vector.shape_cast %94 : vector<1x28x128xf32> to vector<28x128xf32>
    %c3_92 = arith.constant 3 : index
    %c0_93 = arith.constant 0 : index
    %c0_94 = arith.constant 0 : index
    %96 = vector.load %arg2[%c3_92, %c0_93, %c0_94] : memref<5x128x256xf32, #tpu.memory_space<vmem>>, vector<1x128x256xf32>
    %97 = vector.shape_cast %96 : vector<1x128x256xf32> to vector<128x256xf32>
    %cst_95 = arith.constant dense<0.000000e+00> : vector<28x256xf32>
    %98 = tpu.matmul %95, %97, %cst_95 {dimension_numbers = #tpu.dot_dimension_numbers<[1], [0], [0], [1], [0, 0, 1, 1], [], []>} : vector<28x128xf32>, vector<128x256xf32>, vector<28x256xf32> -> vector<28x256xf32>
    %99 = arith.addf %93, %98 : vector<28x256xf32>
    %c1_96 = arith.constant 1 : index
    %c4_97 = arith.constant 4 : index
    %c0_98 = arith.constant 0 : index
    %100 = vector.load %arg1[%c1_96, %c4_97, %c0_98] : memref<2x32x128xf32, #tpu.memory_space<vmem>>, vector<1x28x128xf32>
    %101 = vector.shape_cast %100 : vector<1x28x128xf32> to vector<28x128xf32>
    %c4_99 = arith.constant 4 : index
    %c0_100 = arith.constant 0 : index
    %c0_101 = arith.constant 0 : index
    %102 = vector.load %arg2[%c4_99, %c0_100, %c0_101] : memref<5x128x256xf32, #tpu.memory_space<vmem>>, vector<1x128x256xf32>
    %103 = vector.shape_cast %102 : vector<1x128x256xf32> to vector<128x256xf32>
    %cst_102 = arith.constant dense<0.000000e+00> : vector<28x256xf32>
    %104 = tpu.matmul %101, %103, %cst_102 {dimension_numbers = #tpu.dot_dimension_numbers<[1], [0], [0], [1], [0, 0, 1, 1], [], []>} : vector<28x128xf32>, vector<128x256xf32>, vector<28x256xf32> -> vector<28x256xf32>
    %105 = arith.addf %99, %104 : vector<28x256xf32>
    %106 = vector.broadcast %0 : vector<1x256xf32> to vector<28x256xf32>
    %107 = arith.addf %105, %106 : vector<28x256xf32>
    %cst_103 = arith.constant 0.000000e+00 : f32
    %108 = vector.broadcast %cst_103 : f32 to vector<28x256xf32>
    %109 = arith.maximumf %107, %108 : vector<28x256xf32>
    %110 = vector.extract_strided_slice %109 {offsets = [0, 0], sizes = [28, 128], strides = [1, 1]} : vector<28x256xf32> to vector<28x128xf32>
    %111 = vector.extract_strided_slice %109 {offsets = [0, 128], sizes = [28, 128], strides = [1, 1]} : vector<28x256xf32> to vector<28x128xf32>
    %112 = arith.maximumf %110, %111 : vector<28x128xf32>
    %c32 = arith.constant 32 : index
    %c0_104 = arith.constant 0 : index
    %113 = vector.load %arg9[%c32, %c0_104] : memref<64x128xf32, #tpu.memory_space<vmem>>, vector<28x128xf32>
    tpu.vector_store %arg9[%c32, %c0_104], %112 {strides = array<i32>} : memref<64x128xf32, #tpu.memory_space<vmem>>, vector<28x128xf32>,
    %c32_105 = arith.constant 32 : index
    %c0_106 = arith.constant 0 : index
    %114 = tpu.strided_load %arg9[%c32_105, %c0_106] {strides = array<i32: 2, 1>} : memref<64x128xf32, #tpu.memory_space<vmem>>, vector<14x128xf32>
    %c33 = arith.constant 33 : index
    %c0_107 = arith.constant 0 : index
    %115 = tpu.strided_load %arg9[%c33, %c0_107] {strides = array<i32: 2, 1>} : memref<64x128xf32, #tpu.memory_space<vmem>>, vector<14x128xf32>
    %116 = arith.maximumf %114, %115 : vector<14x128xf32>
    %117 = vector.extract_strided_slice %116 {offsets = [0, 0], sizes = [10, 128], strides = [1, 1]} : vector<14x128xf32> to vector<10x128xf32>
    %c0_108 = arith.constant 0 : index
    %c0_109 = arith.constant 0 : index
    %c0_110 = arith.constant 0 : index
    %118 = vector.load %arg3[%c0_108, %c0_109, %c0_110] : memref<5x128x256xf32, #tpu.memory_space<vmem>>, vector<1x128x256xf32>
    %119 = vector.shape_cast %118 : vector<1x128x256xf32> to vector<128x256xf32>
    %cst_111 = arith.constant dense<0.000000e+00> : vector<10x256xf32>
    %120 = tpu.matmul %117, %119, %cst_111 {dimension_numbers = #tpu.dot_dimension_numbers<[1], [0], [0], [1], [0, 0, 1, 1], [], []>} : vector<10x128xf32>, vector<128x256xf32>, vector<10x256xf32> -> vector<10x256xf32>
    %121 = vector.extract_strided_slice %116 {offsets = [1, 0], sizes = [10, 128], strides = [1, 1]} : vector<14x128xf32> to vector<10x128xf32>
    %c1_112 = arith.constant 1 : index
    %c0_113 = arith.constant 0 : index
    %c0_114 = arith.constant 0 : index
    %122 = vector.load %arg3[%c1_112, %c0_113, %c0_114] : memref<5x128x256xf32, #tpu.memory_space<vmem>>, vector<1x128x256xf32>
    %123 = vector.shape_cast %122 : vector<1x128x256xf32> to vector<128x256xf32>
    %cst_115 = arith.constant dense<0.000000e+00> : vector<10x256xf32>
    %124 = tpu.matmul %121, %123, %cst_115 {dimension_numbers = #tpu.dot_dimension_numbers<[1], [0], [0], [1], [0, 0, 1, 1], [], []>} : vector<10x128xf32>, vector<128x256xf32>, vector<10x256xf32> -> vector<10x256xf32>
    %125 = arith.addf %120, %124 : vector<10x256xf32>
    %126 = vector.extract_strided_slice %116 {offsets = [2, 0], sizes = [10, 128], strides = [1, 1]} : vector<14x128xf32> to vector<10x128xf32>
    %c2_116 = arith.constant 2 : index
    %c0_117 = arith.constant 0 : index
    %c0_118 = arith.constant 0 : index
    %127 = vector.load %arg3[%c2_116, %c0_117, %c0_118] : memref<5x128x256xf32, #tpu.memory_space<vmem>>, vector<1x128x256xf32>
    %128 = vector.shape_cast %127 : vector<1x128x256xf32> to vector<128x256xf32>
    %cst_119 = arith.constant dense<0.000000e+00> : vector<10x256xf32>
    %129 = tpu.matmul %126, %128, %cst_119 {dimension_numbers = #tpu.dot_dimension_numbers<[1], [0], [0], [1], [0, 0, 1, 1], [], []>} : vector<10x128xf32>, vector<128x256xf32>, vector<10x256xf32> -> vector<10x256xf32>
    %130 = arith.addf %125, %129 : vector<10x256xf32>
    %131 = vector.extract_strided_slice %116 {offsets = [3, 0], sizes = [10, 128], strides = [1, 1]} : vector<14x128xf32> to vector<10x128xf32>
    %c3_120 = arith.constant 3 : index
    %c0_121 = arith.constant 0 : index
    %c0_122 = arith.constant 0 : index
    %132 = vector.load %arg3[%c3_120, %c0_121, %c0_122] : memref<5x128x256xf32, #tpu.memory_space<vmem>>, vector<1x128x256xf32>
    %133 = vector.shape_cast %132 : vector<1x128x256xf32> to vector<128x256xf32>
    %cst_123 = arith.constant dense<0.000000e+00> : vector<10x256xf32>
    %134 = tpu.matmul %131, %133, %cst_123 {dimension_numbers = #tpu.dot_dimension_numbers<[1], [0], [0], [1], [0, 0, 1, 1], [], []>} : vector<10x128xf32>, vector<128x256xf32>, vector<10x256xf32> -> vector<10x256xf32>
    %135 = arith.addf %130, %134 : vector<10x256xf32>
    %136 = vector.extract_strided_slice %116 {offsets = [4, 0], sizes = [10, 128], strides = [1, 1]} : vector<14x128xf32> to vector<10x128xf32>
    %c4_124 = arith.constant 4 : index
    %c0_125 = arith.constant 0 : index
    %c0_126 = arith.constant 0 : index
    %137 = vector.load %arg3[%c4_124, %c0_125, %c0_126] : memref<5x128x256xf32, #tpu.memory_space<vmem>>, vector<1x128x256xf32>
    %138 = vector.shape_cast %137 : vector<1x128x256xf32> to vector<128x256xf32>
    %cst_127 = arith.constant dense<0.000000e+00> : vector<10x256xf32>
    %139 = tpu.matmul %136, %138, %cst_127 {dimension_numbers = #tpu.dot_dimension_numbers<[1], [0], [0], [1], [0, 0, 1, 1], [], []>} : vector<10x128xf32>, vector<128x256xf32>, vector<10x256xf32> -> vector<10x256xf32>
    %140 = arith.addf %135, %139 : vector<10x256xf32>
    %141 = vector.broadcast %1 : vector<1x256xf32> to vector<10x256xf32>
    %142 = arith.addf %140, %141 : vector<10x256xf32>
    %cst_128 = arith.constant 0.000000e+00 : f32
    %143 = vector.broadcast %cst_128 : f32 to vector<10x256xf32>
    %144 = arith.maximumf %142, %143 : vector<10x256xf32>
    %145 = vector.extract_strided_slice %144 {offsets = [0, 0], sizes = [10, 128], strides = [1, 1]} : vector<10x256xf32> to vector<10x128xf32>
    %146 = vector.extract_strided_slice %144 {offsets = [0, 128], sizes = [10, 128], strides = [1, 1]} : vector<10x256xf32> to vector<10x128xf32>
    %147 = arith.maximumf %145, %146 : vector<10x128xf32>
    %c16 = arith.constant 16 : index
    %c0_129 = arith.constant 0 : index
    %148 = vector.load %arg10[%c16, %c0_129] : memref<32x128xf32, #tpu.memory_space<vmem>>, vector<10x128xf32>
    tpu.vector_store %arg10[%c16, %c0_129], %147 {strides = array<i32>} : memref<32x128xf32, #tpu.memory_space<vmem>>, vector<10x128xf32>,
    %c0_130 = arith.constant 0 : index
    %c0_131 = arith.constant 0 : index
    %149 = tpu.strided_load %arg10[%c0_130, %c0_131] {strides = array<i32: 16, 1>} : memref<32x128xf32, #tpu.memory_space<vmem>>, vector<2x128xf32>
    %c1_132 = arith.constant 1 : index
    %c0_133 = arith.constant 0 : index
    %150 = tpu.strided_load %arg10[%c1_132, %c0_133] {strides = array<i32: 16, 1>} : memref<32x128xf32, #tpu.memory_space<vmem>>, vector<2x128xf32>
    %151 = arith.maximumf %149, %150 : vector<2x128xf32>
    %c0_134 = arith.constant 0 : index
    %c0_135 = arith.constant 0 : index
    %c0_136 = arith.constant 0 : index
    %152 = vector.load %arg4[%c0_134, %c0_135, %c0_136] : memref<5x128x128xf32, #tpu.memory_space<vmem>>, vector<1x128x128xf32>
    %153 = vector.shape_cast %152 : vector<1x128x128xf32> to vector<128x128xf32>
    %cst_137 = arith.constant dense<0.000000e+00> : vector<2x128xf32>
    %154 = tpu.matmul %151, %153, %cst_137 {dimension_numbers = #tpu.dot_dimension_numbers<[1], [0], [0], [1], [0, 0, 1, 1], [], []>} : vector<2x128xf32>, vector<128x128xf32>, vector<2x128xf32> -> vector<2x128xf32>
    %c2_138 = arith.constant 2 : index
    %c0_139 = arith.constant 0 : index
    %155 = tpu.strided_load %arg10[%c2_138, %c0_139] {strides = array<i32: 16, 1>} : memref<32x128xf32, #tpu.memory_space<vmem>>, vector<2x128xf32>
    %c3_140 = arith.constant 3 : index
    %c0_141 = arith.constant 0 : index
    %156 = tpu.strided_load %arg10[%c3_140, %c0_141] {strides = array<i32: 16, 1>} : memref<32x128xf32, #tpu.memory_space<vmem>>, vector<2x128xf32>
    %157 = arith.maximumf %155, %156 : vector<2x128xf32>
    %c1_142 = arith.constant 1 : index
    %c0_143 = arith.constant 0 : index
    %c0_144 = arith.constant 0 : index
    %158 = vector.load %arg4[%c1_142, %c0_143, %c0_144] : memref<5x128x128xf32, #tpu.memory_space<vmem>>, vector<1x128x128xf32>
    %159 = vector.shape_cast %158 : vector<1x128x128xf32> to vector<128x128xf32>
    %cst_145 = arith.constant dense<0.000000e+00> : vector<2x128xf32>
    %160 = tpu.matmul %157, %159, %cst_145 {dimension_numbers = #tpu.dot_dimension_numbers<[1], [0], [0], [1], [0, 0, 1, 1], [], []>} : vector<2x128xf32>, vector<128x128xf32>, vector<2x128xf32> -> vector<2x128xf32>
    %161 = arith.addf %154, %160 : vector<2x128xf32>
    %c4_146 = arith.constant 4 : index
    %c0_147 = arith.constant 0 : index
    %162 = tpu.strided_load %arg10[%c4_146, %c0_147] {strides = array<i32: 16, 1>} : memref<32x128xf32, #tpu.memory_space<vmem>>, vector<2x128xf32>
    %c5 = arith.constant 5 : index
    %c0_148 = arith.constant 0 : index
    %163 = tpu.strided_load %arg10[%c5, %c0_148] {strides = array<i32: 16, 1>} : memref<32x128xf32, #tpu.memory_space<vmem>>, vector<2x128xf32>
    %164 = arith.maximumf %162, %163 : vector<2x128xf32>
    %c2_149 = arith.constant 2 : index
    %c0_150 = arith.constant 0 : index
    %c0_151 = arith.constant 0 : index
    %165 = vector.load %arg4[%c2_149, %c0_150, %c0_151] : memref<5x128x128xf32, #tpu.memory_space<vmem>>, vector<1x128x128xf32>
    %166 = vector.shape_cast %165 : vector<1x128x128xf32> to vector<128x128xf32>
    %cst_152 = arith.constant dense<0.000000e+00> : vector<2x128xf32>
    %167 = tpu.matmul %164, %166, %cst_152 {dimension_numbers = #tpu.dot_dimension_numbers<[1], [0], [0], [1], [0, 0, 1, 1], [], []>} : vector<2x128xf32>, vector<128x128xf32>, vector<2x128xf32> -> vector<2x128xf32>
    %168 = arith.addf %161, %167 : vector<2x128xf32>
    %c6 = arith.constant 6 : index
    %c0_153 = arith.constant 0 : index
    %169 = tpu.strided_load %arg10[%c6, %c0_153] {strides = array<i32: 16, 1>} : memref<32x128xf32, #tpu.memory_space<vmem>>, vector<2x128xf32>
    %c7 = arith.constant 7 : index
    %c0_154 = arith.constant 0 : index
    %170 = tpu.strided_load %arg10[%c7, %c0_154] {strides = array<i32: 16, 1>} : memref<32x128xf32, #tpu.memory_space<vmem>>, vector<2x128xf32>
    %171 = arith.maximumf %169, %170 : vector<2x128xf32>
    %c3_155 = arith.constant 3 : index
    %c0_156 = arith.constant 0 : index
    %c0_157 = arith.constant 0 : index
    %172 = vector.load %arg4[%c3_155, %c0_156, %c0_157] : memref<5x128x128xf32, #tpu.memory_space<vmem>>, vector<1x128x128xf32>
    %173 = vector.shape_cast %172 : vector<1x128x128xf32> to vector<128x128xf32>
    %cst_158 = arith.constant dense<0.000000e+00> : vector<2x128xf32>
    %174 = tpu.matmul %171, %173, %cst_158 {dimension_numbers = #tpu.dot_dimension_numbers<[1], [0], [0], [1], [0, 0, 1, 1], [], []>} : vector<2x128xf32>, vector<128x128xf32>, vector<2x128xf32> -> vector<2x128xf32>
    %175 = arith.addf %168, %174 : vector<2x128xf32>
    %c8 = arith.constant 8 : index
    %c0_159 = arith.constant 0 : index
    %176 = tpu.strided_load %arg10[%c8, %c0_159] {strides = array<i32: 16, 1>} : memref<32x128xf32, #tpu.memory_space<vmem>>, vector<2x128xf32>
    %c9 = arith.constant 9 : index
    %c0_160 = arith.constant 0 : index
    %177 = tpu.strided_load %arg10[%c9, %c0_160] {strides = array<i32: 16, 1>} : memref<32x128xf32, #tpu.memory_space<vmem>>, vector<2x128xf32>
    %178 = arith.maximumf %176, %177 : vector<2x128xf32>
    %c4_161 = arith.constant 4 : index
    %c0_162 = arith.constant 0 : index
    %c0_163 = arith.constant 0 : index
    %179 = vector.load %arg4[%c4_161, %c0_162, %c0_163] : memref<5x128x128xf32, #tpu.memory_space<vmem>>, vector<1x128x128xf32>
    %180 = vector.shape_cast %179 : vector<1x128x128xf32> to vector<128x128xf32>
    %cst_164 = arith.constant dense<0.000000e+00> : vector<2x128xf32>
    %181 = tpu.matmul %178, %180, %cst_164 {dimension_numbers = #tpu.dot_dimension_numbers<[1], [0], [0], [1], [0, 0, 1, 1], [], []>} : vector<2x128xf32>, vector<128x128xf32>, vector<2x128xf32> -> vector<2x128xf32>
    %182 = arith.addf %175, %181 : vector<2x128xf32>
    %183 = vector.broadcast %2 : vector<1x128xf32> to vector<2x128xf32>
    %184 = arith.addf %182, %183 : vector<2x128xf32>
    %cst_165 = arith.constant 0.000000e+00 : f32
    %185 = vector.broadcast %cst_165 : f32 to vector<2x128xf32>
    %186 = arith.maximumf %184, %185 : vector<2x128xf32>
    %c0_166 = arith.constant 0 : index
    %c0_167 = arith.constant 0 : index
    %187 = vector.load %arg5[%c0_166, %c0_167] : memref<128x128xf32, #tpu.memory_space<vmem>>, vector<128x128xf32>
    %cst_168 = arith.constant dense<0.000000e+00> : vector<2x128xf32>
    %188 = tpu.matmul %186, %187, %cst_168 {dimension_numbers = #tpu.dot_dimension_numbers<[1], [0], [0], [1], [0, 0, 1, 1], [], []>} : vector<2x128xf32>, vector<128x128xf32>, vector<2x128xf32> -> vector<2x128xf32>
    %189 = vector.broadcast %3 : vector<1x128xf32> to vector<2x128xf32>
    %190 = arith.addf %188, %189 : vector<2x128xf32>
    %cst_169 = arith.constant 0.000000e+00 : f32
    %191 = vector.broadcast %cst_169 : f32 to vector<2x128xf32>
    %192 = arith.maximumf %190, %191 : vector<2x128xf32>
    %c0_170 = arith.constant 0 : index
    %c0_171 = arith.constant 0 : index
    %193 = vector.load %arg6[%c0_170, %c0_171] : memref<128x128xf32, #tpu.memory_space<vmem>>, vector<128x128xf32>
    %cst_172 = arith.constant dense<0.000000e+00> : vector<2x128xf32>
    %194 = tpu.matmul %192, %193, %cst_172 {dimension_numbers = #tpu.dot_dimension_numbers<[1], [0], [0], [1], [0, 0, 1, 1], [], []>} : vector<2x128xf32>, vector<128x128xf32>, vector<2x128xf32> -> vector<2x128xf32>
    %195 = vector.broadcast %4 : vector<1x128xf32> to vector<2x128xf32>
    %196 = arith.addf %194, %195 : vector<2x128xf32>
    %c0_173 = arith.constant 0 : index
    %c0_174 = arith.constant 0 : index
    %197 = vector.load %arg8[%c0_173, %c0_174] : memref<2x128xf32, #tpu.memory_space<vmem>>, vector<2x128xf32>
    tpu.vector_store %arg8[%c0_173, %c0_174], %196 {strides = array<i32>} : memref<2x128xf32, #tpu.memory_space<vmem>>, vector<2x128xf32>,
    return
  }
  func.func @transform_0(%arg0: i32) -> (i32, i32, i32) {
    %c0_i32 = arith.constant 0 : i32
    %c0_i32_0 = arith.constant 0 : i32
    %c0_i32_1 = arith.constant 0 : i32
    %c0_i32_2 = arith.constant 0 : i32
    return %c0_i32, %c0_i32_0, %c0_i32_1 : i32, i32, i32
  }
  func.func @transform_1(%arg0: i32) -> (i32, i32, i32) {
    %c0_i32 = arith.constant 0 : i32
    %c0_i32_0 = arith.constant 0 : i32
    %c0_i32_1 = arith.constant 0 : i32
    %c0_i32_2 = arith.constant 0 : i32
    return %c0_i32, %c0_i32_0, %c0_i32_1 : i32, i32, i32
  }
  func.func @transform_2(%arg0: i32) -> (i32, i32, i32) {
    %c0_i32 = arith.constant 0 : i32
    %c0_i32_0 = arith.constant 0 : i32
    %c0_i32_1 = arith.constant 0 : i32
    %c0_i32_2 = arith.constant 0 : i32
    return %c0_i32, %c0_i32_0, %c0_i32_1 : i32, i32, i32
  }
  func.func @transform_3(%arg0: i32) -> (i32, i32, i32) {
    %c0_i32 = arith.constant 0 : i32
    %c0_i32_0 = arith.constant 0 : i32
    %c0_i32_1 = arith.constant 0 : i32
    %c0_i32_2 = arith.constant 0 : i32
    return %c0_i32, %c0_i32_0, %c0_i32_1 : i32, i32, i32
  }
  func.func @transform_4(%arg0: i32) -> (i32, i32) {
    %c0_i32 = arith.constant 0 : i32
    %c0_i32_0 = arith.constant 0 : i32
    %c0_i32_1 = arith.constant 0 : i32
    return %c0_i32, %c0_i32_0 : i32, i32
  }
  func.func @transform_5(%arg0: i32) -> (i32, i32) {
    %c0_i32 = arith.constant 0 : i32
    %c0_i32_0 = arith.constant 0 : i32
    %c0_i32_1 = arith.constant 0 : i32
    return %c0_i32, %c0_i32_0 : i32, i32
  }
  func.func @transform_6(%arg0: i32) -> (i32, i32) {
    %c0_i32 = arith.constant 0 : i32
    %c0_i32_0 = arith.constant 0 : i32
    %c0_i32_1 = arith.constant 0 : i32
    return %c0_i32, %c0_i32_0 : i32, i32
  }
  func.func @transform_7(%arg0: i32) -> (i32, i32) {
    %c0_i32 = arith.constant 0 : i32
    %c0_i32_0 = arith.constant 0 : i32
    %c0_i32_1 = arith.constant 0 : i32
    return %c0_i32, %c0_i32_0 : i32, i32
  }
}

</mosaic_0001>

<llo_original>
// kernel: net_forward.1
$region0: #{net_forward.1}
  #allocation0 [shape = 'u32[]', space=smem, size = 0x4, offset = 0x4, fixed_abs, tag = 'smem constant byte address 0x4 - core index']
  #allocation1 [shape = 'u32[72,128]{1,0:T(1,128)}', space=vmem, size = 0x9000, scoped, tag = 'internal scratch']
  #allocation2 [shape = 'f32[64,128]{1,0:T(8,128)}', space=vmem, size = 0x8000, scoped, tag = 'scratch operand']
  #allocation3 [shape = 'f32[32,128]{1,0:T(8,128)}', space=vmem, size = 0x4000, scoped, tag = 'scratch operand']
  %s0 = inlined_call_operand.vmem [shape: f32[2,32,128], index: 0, kind: input, shape index: {}]
  %s1 = inlined_call_operand.hbm [shape: f32[5,128,256], index: 1, kind: input, shape index: {}]
  %s2 = inlined_call_operand.hbm [shape: f32[5,128,256], index: 2, kind: input, shape index: {}]
  %s3 = inlined_call_operand.vmem [shape: f32[5,128,128], index: 3, kind: input, shape index: {}]
  %s4 = inlined_call_operand.vmem [shape: f32[128,128], index: 4, kind: input, shape index: {}]
  %s5 = inlined_call_operand.vmem [shape: f32[128,128], index: 5, kind: input, shape index: {}]
  %s6 = inlined_call_operand.hbm [shape: f32[4,256], index: 6, kind: input, shape index: {}]
  %s7 = inlined_call_operand.hbm [shape: f32[2,128], index: 7, kind: output, shape index: {}]
  %s8 = sld [smem:[#allocation0]]
  $region50: #{net_forward.1} parent=0
    _
  %s10 = ssub.s32 1, %s8
  %s11 = scalar_select 0, %s10, %s8
  $region1: #{net_forward.1} parent=0
    #allocation4 [shape = 'u8[655360]{0}', space=vmem, size = 0xa0000, scoped, tag = 'input window, operand 1, single buffered']
    #allocation5 [shape = 's32[1]{0}', space=sflag, size = 0x4, scoped, tag = 'scoped memory for net_forward.1']
    #allocation6 [shape = 's32[1]{0}', space=sflag, size = 0x4, scoped, tag = 'scoped memory for net_forward.1']
    #allocation7 [shape = 'u8[655360]{0}', space=vmem, size = 0xa0000, scoped, tag = 'input window, operand 2, single buffered']
    #allocation8 [shape = 's32[1]{0}', space=sflag, size = 0x4, scoped, tag = 'scoped memory for net_forward.1']
    #allocation9 [shape = 'u8[4096]{0}', space=vmem, size = 0x1000, scoped, tag = 'input window, operand 6, single buffered']
    #allocation10 [shape = 'u8[1024]{0}', space=vmem, size = 0x400, scoped, tag = 'output window, operand 0, single buffered']
    %12 = vsyncpa [#allocation5], 0
    %13 = vsyncpa [#allocation8], 0
    %14 = vsyncpa [#allocation6], 0
    // Predicated region
    $region2: #{net_forward.1} parent=1 // pred_check
      _
    $region3: #{net_forward.1} parent=1 // pred_check_branch
      %16 = sbr.rel (0) target = $region5
    $region4: #{net_forward.1} parent=1 // pred_region
      _
    $region5: #{net_forward.1} parent=1 // pred_fallthru
      _
    // Predicated region
    $region6: #{net_forward.1} parent=1 // pred_check
      _
    $region7: #{net_forward.1} parent=1 // pred_check_branch
      %18 = sbr.rel (0) target = $region9
    $region8: #{net_forward.1} parent=1 // pred_region
      %20 = vsyncadd [#allocation5], 0
      %s21 = sshll.u32 %s1, 4
      %s22 = int_to_ptr.hbm [resolvable:$true] %s21
      %s23 = sshll.u32 [#allocation4], 4
      %s24 = int_to_ptr.vmem [resolvable:$true] %s23
      %29 = dma.hbm_to_vmem [thread:$0]  %s22, 20480, %s24, [#allocation5], 256, 256, 16
    $region9: #{net_forward.1} parent=1 // pred_fallthru
      _
    // Predicated region
    $region10: #{net_forward.1} parent=1 // pred_check
      _
    $region11: #{net_forward.1} parent=1 // pred_check_branch
      %31 = sbr.rel (0) target = $region13
    $region12: #{net_forward.1} parent=1 // pred_region
      %33 = vsyncadd [#allocation8], 0
      %s34 = sshll.u32 %s2, 4
      %s35 = int_to_ptr.hbm [resolvable:$true] %s34
      %s36 = sshll.u32 [#allocation7], 4
      %s37 = int_to_ptr.vmem [resolvable:$true] %s36
      %42 = dma.hbm_to_vmem [thread:$0]  %s35, 20480, %s37, [#allocation8], 256, 256, 16
    $region13: #{net_forward.1} parent=1 // pred_fallthru
      _
    // Predicated region
    $region14: #{net_forward.1} parent=1 // pred_check
      _
    $region15: #{net_forward.1} parent=1 // pred_check_branch
      %44 = sbr.rel (0) target = $region17
    $region16: #{net_forward.1} parent=1 // pred_region
      _
    $region17: #{net_forward.1} parent=1 // pred_fallthru
      _
    // Predicated region
    $region18: #{net_forward.1} parent=1 // pred_check
      _
    $region19: #{net_forward.1} parent=1 // pred_check_branch
      %46 = sbr.rel (0) target = $region21
    $region20: #{net_forward.1} parent=1 // pred_region
      _
    $region21: #{net_forward.1} parent=1 // pred_fallthru
      _
    // Predicated region
    $region22: #{net_forward.1} parent=1 // pred_check
      _
    $region23: #{net_forward.1} parent=1 // pred_check_branch
      %48 = sbr.rel (0) target = $region25
    $region24: #{net_forward.1} parent=1 // pred_region
      _
    $region25: #{net_forward.1} parent=1 // pred_fallthru
      _
    // Predicated region
    $region26: #{net_forward.1} parent=1 // pred_check
      _
    $region27: #{net_forward.1} parent=1 // pred_check_branch
      %50 = sbr.rel (0) target = $region29
    $region28: #{net_forward.1} parent=1 // pred_region
      %52 = vsyncadd [#allocation8], 0
      %s54 = sshll.u32 %s6, 4
      %s55 = int_to_ptr.hbm [resolvable:$true] %s54
      %s56 = sshll.u32 [#allocation9], 4
      %s57 = int_to_ptr.vmem [resolvable:$true] %s56
      %59 = dma.hbm_to_vmem [thread:$0]  %s55, 128, %s57, [#allocation8]
    $region29: #{net_forward.1} parent=1 // pred_fallthru
      _
    // Predicated region
    $region30: #{net_forward.1} parent=1 // pred_check
      _
    $region31: #{net_forward.1} parent=1 // pred_check_branch
      %61 = sbr.rel (0) target = $region33
    $region32: #{net_forward.1} parent=1 // pred_region
      %63 = dma.done [#allocation5], 20480
    $region33: #{net_forward.1} parent=1 // pred_fallthru
      _
    // Predicated region
    $region34: #{net_forward.1} parent=1 // pred_check
      _
    $region35: #{net_forward.1} parent=1 // pred_check_branch
      %65 = sbr.rel (0) target = $region37
    $region36: #{net_forward.1} parent=1 // pred_region
      %67 = dma.done [#allocation8], 20480
    $region37: #{net_forward.1} parent=1 // pred_fallthru
      _
    // Predicated region
    $region38: #{net_forward.1} parent=1 // pred_check
      _
    $region39: #{net_forward.1} parent=1 // pred_check_branch
      %69 = sbr.rel (0) target = $region41
    $region40: #{net_forward.1} parent=1 // pred_region
      %71 = dma.done [#allocation8], 128
    $region41: #{net_forward.1} parent=1 // pred_fallthru
      _
    %v72 = vld [vmem:[#allocation9] ss:$4 sm:$0x3]
    %s73 = scalar_lea.vmem [#allocation9], 1
    %v74 = vld [vmem:[%s73] ss:$4 sm:$0x3]
    %v75 = vld [vmem:[#allocation9 + $0x2] sm:$0x1]
    %v76 = vld [vmem:[#allocation9 + $0x6] sm:$0x1]
    %v77 = vld [vmem:[#allocation9 + $0x3] sm:$0x1]
    %v78 = vld [vmem:[%s0] sm:$0xff]
    %v79 = vld [vmem:[%s0 + $0x8] sm:$0xff]
    %v80 = vld [vmem:[%s0 + $0x10] sm:$0xff]
    %v81 = vld [vmem:[%s0 + $0x18] sm:$0xf]
    %v82 = vld [vmem:[#allocation4] sm:$0xff]
    %v83 = vld [vmem:[#allocation4 + $0x8] sm:$0xff]
    %v84 = vld [vmem:[#allocation4 + $0x10] sm:$0xff]
    %v85 = vld [vmem:[#allocation4 + $0x18] sm:$0xff]
    %v86 = vld [vmem:[#allocation4 + $0x20] sm:$0xff]
    %v87 = vld [vmem:[#allocation4 + $0x28] sm:$0xff]
    %v88 = vld [vmem:[#allocation4 + $0x30] sm:$0xff]
    %v89 = vld [vmem:[#allocation4 + $0x38] sm:$0xff]
    %v90 = vld [vmem:[#allocation4 + $0x40] sm:$0xff]
    %v91 = vld [vmem:[#allocation4 + $0x48] sm:$0xff]
    %v92 = vld [vmem:[#allocation4 + $0x50] sm:$0xff]
    %v93 = vld [vmem:[#allocation4 + $0x58] sm:$0xff]
    %v94 = vld [vmem:[#allocation4 + $0x60] sm:$0xff]
    %v95 = vld [vmem:[#allocation4 + $0x68] sm:$0xff]
    %v96 = vld [vmem:[#allocation4 + $0x70] sm:$0xff]
    %v97 = vld [vmem:[#allocation4 + $0x78] sm:$0xff]
    %v98 = vld [vmem:[#allocation4 + $0x80] sm:$0xff]
    %v99 = vld [vmem:[#allocation4 + $0x88] sm:$0xff]
    %v100 = vld [vmem:[#allocation4 + $0x90] sm:$0xff]
    %v101 = vld [vmem:[#allocation4 + $0x98] sm:$0xff]
    %v102 = vld [vmem:[#allocation4 + $0xa0] sm:$0xff]
    %v103 = vld [vmem:[#allocation4 + $0xa8] sm:$0xff]
    %v104 = vld [vmem:[#allocation4 + $0xb0] sm:$0xff]
    %v105 = vld [vmem:[#allocation4 + $0xb8] sm:$0xff]
    %v106 = vld [vmem:[#allocation4 + $0xc0] sm:$0xff]
    %v107 = vld [vmem:[#allocation4 + $0xc8] sm:$0xff]
    %v108 = vld [vmem:[#allocation4 + $0xd0] sm:$0xff]
    %v109 = vld [vmem:[#allocation4 + $0xd8] sm:$0xff]
    %v110 = vld [vmem:[#allocation4 + $0xe0] sm:$0xff]
    %v111 = vld [vmem:[#allocation4 + $0xe8] sm:$0xff]
    %v112 = vld [vmem:[#allocation4 + $0xf0] sm:$0xff]
    %v113 = vld [vmem:[#allocation4 + $0xf8] sm:$0xff]
    %v114 = vld [vmem:[%s0 + $0x1] sm:$0xff]
    %v115 = vld [vmem:[%s0 + $0x9] sm:$0xff]
    %v116 = vld [vmem:[%s0 + $0x11] sm:$0xff]
    %v117 = vld [vmem:[%s0 + $0x19] sm:$0xf]
    %s118 = scalar_lea.vmem [#allocation4], 256
    %v119 = vld [vmem:[%s118] sm:$0xff]
    %v120 = vld [vmem:[%s118 + $0x8] sm:$0xff]
    %v121 = vld [vmem:[%s118 + $0x10] sm:$0xff]
    %v122 = vld [vmem:[%s118 + $0x18] sm:$0xff]
    %v123 = vld [vmem:[%s118 + $0x20] sm:$0xff]
    %v124 = vld [vmem:[%s118 + $0x28] sm:$0xff]
    %v125 = vld [vmem:[%s118 + $0x30] sm:$0xff]
    %v126 = vld [vmem:[%s118 + $0x38] sm:$0xff]
    %v127 = vld [vmem:[%s118 + $0x40] sm:$0xff]
    %v128 = vld [vmem:[%s118 + $0x48] sm:$0xff]
    %v129 = vld [vmem:[%s118 + $0x50] sm:$0xff]
    %v130 = vld [vmem:[%s118 + $0x58] sm:$0xff]
    %v131 = vld [vmem:[%s118 + $0x60] sm:$0xff]
    %v132 = vld [vmem:[%s118 + $0x68] sm:$0xff]
    %v133 = vld [vmem:[%s118 + $0x70] sm:$0xff]
    %v134 = vld [vmem:[%s118 + $0x78] sm:$0xff]
    %v135 = vld [vmem:[%s118 + $0x80] sm:$0xff]
    %v136 = vld [vmem:[%s118 + $0x88] sm:$0xff]
    %v137 = vld [vmem:[%s118 + $0x90] sm:$0xff]
    %v138 = vld [vmem:[%s118 + $0x98] sm:$0xff]
    %v139 = vld [vmem:[%s118 + $0xa0] sm:$0xff]
    %v140 = vld [vmem:[%s118 + $0xa8] sm:$0xff]
    %v141 = vld [vmem:[%s118 + $0xb0] sm:$0xff]
    %v142 = vld [vmem:[%s118 + $0xb8] sm:$0xff]
    %v143 = vld [vmem:[%s118 + $0xc0] sm:$0xff]
    %v144 = vld [vmem:[%s118 + $0xc8] sm:$0xff]
    %v145 = vld [vmem:[%s118 + $0xd0] sm:$0xff]
    %v146 = vld [vmem:[%s118 + $0xd8] sm:$0xff]
    %v147 = vld [vmem:[%s118 + $0xe0] sm:$0xff]
    %v148 = vld [vmem:[%s118 + $0xe8] sm:$0xff]
    %v149 = vld [vmem:[%s118 + $0xf0] sm:$0xff]
    %v150 = vld [vmem:[%s118 + $0xf8] sm:$0xff]
    %151 = vmatpush.msra.mxu0 %v149
    %152 = vmatpush.msra.mxu0 %v147
    %153 = vmatpush.msra.mxu0 %v145
    %154 = vmatpush.msra.mxu0 %v143
    %155 = vmatpush.msra.mxu0 %v141
    %156 = vmatpush.msra.mxu0 %v139
    %157 = vmatpush.msra.mxu0 %v137
    %158 = vmatpush.msra.mxu0 %v135
    %159 = vmatpush.msra.mxu0 %v133
    %160 = vmatpush.msra.mxu0 %v131
    %161 = vmatpush.msra.mxu0 %v129
    %162 = vmatpush.msra.mxu0 %v127
    %163 = vmatpush.msra.mxu0 %v125
    %164 = vmatpush.msra.mxu0 %v123
    %165 = vmatpush.msra.mxu0 %v121
    %166 = vmatpush.msra.mxu0 %v119
    %167 = vmatmul.f32.gmra.mxu0 %v114
    %v168 = vpop.f32.mrf.mxu0
    %v169 = vadd.f32 0.0, %v168
    %170 = vmatmul.f32.gmra.mxu0 %v115
    %v171 = vpop.f32.mrf.mxu0
    %v172 = vadd.f32 0.0, %v171
    %173 = vmatmul.f32.gmra.mxu0 %v116
    %v174 = vpop.f32.mrf.mxu0
    %v175 = vadd.f32 0.0, %v174
    %176 = vmatmul.f32.gmra.mxu0 %v117
    %v177 = vpop.f32.mrf.mxu0
    %v178 = vadd.f32 0.0, %v177
    %179 = vdwg.mxu0
    %180 = vmatpush.msra.mxu0 %v150
    %181 = vmatpush.msra.mxu0 %v148
    %182 = vmatpush.msra.mxu0 %v146
    %183 = vmatpush.msra.mxu0 %v144
    %184 = vmatpush.msra.mxu0 %v142
    %185 = vmatpush.msra.mxu0 %v140
    %186 = vmatpush.msra.mxu0 %v138
    %187 = vmatpush.msra.mxu0 %v136
    %188 = vmatpush.msra.mxu0 %v134
    %189 = vmatpush.msra.mxu0 %v132
    %190 = vmatpush.msra.mxu0 %v130
    %191 = vmatpush.msra.mxu0 %v128
    %192 = vmatpush.msra.mxu0 %v126
    %193 = vmatpush.msra.mxu0 %v124
    %194 = vmatpush.msra.mxu0 %v122
    %195 = vmatpush.msra.mxu0 %v120
    %196 = vmatmul.f32.gmra.mxu0 %v114
    %v197 = vpop.f32.mrf.mxu0
    %v198 = vadd.f32 0.0, %v197
    %199 = vmatmul.f32.gmra.mxu0 %v115
    %v200 = vpop.f32.mrf.mxu0
    %v201 = vadd.f32 0.0, %v200
    %202 = vmatmul.f32.gmra.mxu0 %v116
    %v203 = vpop.f32.mrf.mxu0
    %v204 = vadd.f32 0.0, %v203
    %205 = vmatmul.f32.gmra.mxu0 %v117
    %v206 = vpop.f32.mrf.mxu0
    %v207 = vadd.f32 0.0, %v206
    %208 = vdwg.mxu0
    %209 = vmatpush.msra.mxu0 %v112
    %210 = vmatpush.msra.mxu0 %v110
    %211 = vmatpush.msra.mxu0 %v108
    %212 = vmatpush.msra.mxu0 %v106
    %213 = vmatpush.msra.mxu0 %v104
    %214 = vmatpush.msra.mxu0 %v102
    %215 = vmatpush.msra.mxu0 %v100
    %216 = vmatpush.msra.mxu0 %v98
    %217 = vmatpush.msra.mxu0 %v96
    %218 = vmatpush.msra.mxu0 %v94
    %219 = vmatpush.msra.mxu0 %v92
    %220 = vmatpush.msra.mxu0 %v90
    %221 = vmatpush.msra.mxu0 %v88
    %222 = vmatpush.msra.mxu0 %v86
    %223 = vmatpush.msra.mxu0 %v84
    %224 = vmatpush.msra.mxu0 %v82
    %225 = vmatmul.f32.gmra.mxu0 %v78
    %v226 = vpop.f32.mrf.mxu0
    %v227 = vadd.f32 %v169, %v226
    %228 = vmatmul.f32.gmra.mxu0 %v79
    %v229 = vpop.f32.mrf.mxu0
    %v230 = vadd.f32 %v172, %v229
    %231 = vmatmul.f32.gmra.mxu0 %v80
    %v232 = vpop.f32.mrf.mxu0
    %v233 = vadd.f32 %v175, %v232
    %234 = vmatmul.f32.gmra.mxu0 %v81
    %v235 = vpop.f32.mrf.mxu0
    %v236 = vadd.f32 %v178, %v235
    %237 = vdwg.mxu0
    %238 = vmatpush.msra.mxu0 %v113
    %239 = vmatpush.msra.mxu0 %v111
    %240 = vmatpush.msra.mxu0 %v109
    %241 = vmatpush.msra.mxu0 %v107
    %242 = vmatpush.msra.mxu0 %v105
    %243 = vmatpush.msra.mxu0 %v103
    %244 = vmatpush.msra.mxu0 %v101
    %245 = vmatpush.msra.mxu0 %v99
    %246 = vmatpush.msra.mxu0 %v97
    %247 = vmatpush.msra.mxu0 %v95
    %248 = vmatpush.msra.mxu0 %v93
    %249 = vmatpush.msra.mxu0 %v91
    %250 = vmatpush.msra.mxu0 %v89
    %251 = vmatpush.msra.mxu0 %v87
    %252 = vmatpush.msra.mxu0 %v85
    %253 = vmatpush.msra.mxu0 %v83
    %254 = vmatmul.f32.gmra.mxu0 %v78
    %v255 = vpop.f32.mrf.mxu0
    %v256 = vadd.f32 %v198, %v255
    %257 = vmatmul.f32.gmra.mxu0 %v79
    %v258 = vpop.f32.mrf.mxu0
    %v259 = vadd.f32 %v201, %v258
    %260 = vmatmul.f32.gmra.mxu0 %v80
    %v261 = vpop.f32.mrf.mxu0
    %v262 = vadd.f32 %v204, %v261
    %263 = vmatmul.f32.gmra.mxu0 %v81
    %v264 = vpop.f32.mrf.mxu0
    %v265 = vadd.f32 %v207, %v264
    %266 = vdwg.mxu0
    %v267 = vld [vmem:[%s0 + $0x2] sm:$0xff]
    %v268 = vld [vmem:[%s0 + $0xa] sm:$0xff]
    %v269 = vld [vmem:[%s0 + $0x12] sm:$0xff]
    %v270 = vld [vmem:[%s0 + $0x1a] sm:$0xf]
    %s271 = scalar_lea.vmem [#allocation4], 512
    %v272 = vld [vmem:[%s271] sm:$0xff]
    %v273 = vld [vmem:[%s271 + $0x8] sm:$0xff]
    %v274 = vld [vmem:[%s271 + $0x10] sm:$0xff]
    %v275 = vld [vmem:[%s271 + $0x18] sm:$0xff]
    %v276 = vld [vmem:[%s271 + $0x20] sm:$0xff]
    %v277 = vld [vmem:[%s271 + $0x28] sm:$0xff]
    %v278 = vld [vmem:[%s271 + $0x30] sm:$0xff]
    %v279 = vld [vmem:[%s271 + $0x38] sm:$0xff]
    %v280 = vld [vmem:[%s271 + $0x40] sm:$0xff]
    %v281 = vld [vmem:[%s271 + $0x48] sm:$0xff]
    %v282 = vld [vmem:[%s271 + $0x50] sm:$0xff]
    %v283 = vld [vmem:[%s271 + $0x58] sm:$0xff]
    %v284 = vld [vmem:[%s271 + $0x60] sm:$0xff]
    %v285 = vld [vmem:[%s271 + $0x68] sm:$0xff]
    %v286 = vld [vmem:[%s271 + $0x70] sm:$0xff]
    %v287 = vld [vmem:[%s271 + $0x78] sm:$0xff]
    %v288 = vld [vmem:[%s271 + $0x80] sm:$0xff]
    %v289 = vld [vmem:[%s271 + $0x88] sm:$0xff]
    %v290 = vld [vmem:[%s271 + $0x90] sm:$0xff]
    %v291 = vld [vmem:[%s271 + $0x98] sm:$0xff]
    %v292 = vld [vmem:[%s271 + $0xa0] sm:$0xff]
    %v293 = vld [vmem:[%s271 + $0xa8] sm:$0xff]
    %v294 = vld [vmem:[%s271 + $0xb0] sm:$0xff]
    %v295 = vld [vmem:[%s271 + $0xb8] sm:$0xff]
    %v296 = vld [vmem:[%s271 + $0xc0] sm:$0xff]
    %v297 = vld [vmem:[%s271 + $0xc8] sm:$0xff]
    %v298 = vld [vmem:[%s271 + $0xd0] sm:$0xff]
    %v299 = vld [vmem:[%s271 + $0xd8] sm:$0xff]
    %v300 = vld [vmem:[%s271 + $0xe0] sm:$0xff]
    %v301 = vld [vmem:[%s271 + $0xe8] sm:$0xff]
    %v302 = vld [vmem:[%s271 + $0xf0] sm:$0xff]
    %v303 = vld [vmem:[%s271 + $0xf8] sm:$0xff]
    %304 = vmatpush.msra.mxu0 %v302
    %305 = vmatpush.msra.mxu0 %v300
    %306 = vmatpush.msra.mxu0 %v298
    %307 = vmatpush.msra.mxu0 %v296
    %308 = vmatpush.msra.mxu0 %v294
    %309 = vmatpush.msra.mxu0 %v292
    %310 = vmatpush.msra.mxu0 %v290
    %311 = vmatpush.msra.mxu0 %v288
    %312 = vmatpush.msra.mxu0 %v286
    %313 = vmatpush.msra.mxu0 %v284
    %314 = vmatpush.msra.mxu0 %v282
    %315 = vmatpush.msra.mxu0 %v280
    %316 = vmatpush.msra.mxu0 %v278
    %317 = vmatpush.msra.mxu0 %v276
    %318 = vmatpush.msra.mxu0 %v274
    %319 = vmatpush.msra.mxu0 %v272
    %320 = vmatmul.f32.gmra.mxu0 %v267
    %v321 = vpop.f32.mrf.mxu0
    %v322 = vadd.f32 0.0, %v321
    %323 = vmatmul.f32.gmra.mxu0 %v268
    %v324 = vpop.f32.mrf.mxu0
    %v325 = vadd.f32 0.0, %v324
    %326 = vmatmul.f32.gmra.mxu0 %v269
    %v327 = vpop.f32.mrf.mxu0
    %v328 = vadd.f32 0.0, %v327
    %329 = vmatmul.f32.gmra.mxu0 %v270
    %v330 = vpop.f32.mrf.mxu0
    %v331 = vadd.f32 0.0, %v330
    %332 = vdwg.mxu0
    %333 = vmatpush.msra.mxu0 %v303
    %334 = vmatpush.msra.mxu0 %v301
    %335 = vmatpush.msra.mxu0 %v299
    %336 = vmatpush.msra.mxu0 %v297
    %337 = vmatpush.msra.mxu0 %v295
    %338 = vmatpush.msra.mxu0 %v293
    %339 = vmatpush.msra.mxu0 %v291
    %340 = vmatpush.msra.mxu0 %v289
    %341 = vmatpush.msra.mxu0 %v287
    %342 = vmatpush.msra.mxu0 %v285
    %343 = vmatpush.msra.mxu0 %v283
    %344 = vmatpush.msra.mxu0 %v281
    %345 = vmatpush.msra.mxu0 %v279
    %346 = vmatpush.msra.mxu0 %v277
    %347 = vmatpush.msra.mxu0 %v275
    %348 = vmatpush.msra.mxu0 %v273
    %349 = vmatmul.f32.gmra.mxu0 %v267
    %v350 = vpop.f32.mrf.mxu0
    %v351 = vadd.f32 0.0, %v350
    %352 = vmatmul.f32.gmra.mxu0 %v268
    %v353 = vpop.f32.mrf.mxu0
    %v354 = vadd.f32 0.0, %v353
    %355 = vmatmul.f32.gmra.mxu0 %v269
    %v356 = vpop.f32.mrf.mxu0
    %v357 = vadd.f32 0.0, %v356
    %358 = vmatmul.f32.gmra.mxu0 %v270
    %v359 = vpop.f32.mrf.mxu0
    %v360 = vadd.f32 0.0, %v359
    %361 = vdwg.mxu0
    %v362 = vadd.f32 %v227, %v322
    %v363 = vadd.f32 %v256, %v351
    %v364 = vadd.f32 %v230, %v325
    %v365 = vadd.f32 %v259, %v354
    %v366 = vadd.f32 %v233, %v328
    %v367 = vadd.f32 %v262, %v357
    %v368 = vadd.f32 %v236, %v331
    %v369 = vadd.f32 %v265, %v360
    %v370 = vld [vmem:[%s0 + $0x3] sm:$0xff]
    %v371 = vld [vmem:[%s0 + $0xb] sm:$0xff]
    %v372 = vld [vmem:[%s0 + $0x13] sm:$0xff]
    %v373 = vld [vmem:[%s0 + $0x1b] sm:$0xf]
    %s374 = scalar_lea.vmem [#allocation4], 768
    %v375 = vld [vmem:[%s374] sm:$0xff]
    %v376 = vld [vmem:[%s374 + $0x8] sm:$0xff]
    %v377 = vld [vmem:[%s374 + $0x10] sm:$0xff]
    %v378 = vld [vmem:[%s374 + $0x18] sm:$0xff]
    %v379 = vld [vmem:[%s374 + $0x20] sm:$0xff]
    %v380 = vld [vmem:[%s374 + $0x28] sm:$0xff]
    %v381 = vld [vmem:[%s374 + $0x30] sm:$0xff]
    %v382 = vld [vmem:[%s374 + $0x38] sm:$0xff]
    %v383 = vld [vmem:[%s374 + $0x40] sm:$0xff]
    %v384 = vld [vmem:[%s374 + $0x48] sm:$0xff]
    %v385 = vld [vmem:[%s374 + $0x50] sm:$0xff]
    %v386 = vld [vmem:[%s374 + $0x58] sm:$0xff]
    %v387 = vld [vmem:[%s374 + $0x60] sm:$0xff]
    %v388 = vld [vmem:[%s374 + $0x68] sm:$0xff]
    %v389 = vld [vmem:[%s374 + $0x70] sm:$0xff]
    %v390 = vld [vmem:[%s374 + $0x78] sm:$0xff]
    %v391 = vld [vmem:[%s374 + $0x80] sm:$0xff]
    %v392 = vld [vmem:[%s374 + $0x88] sm:$0xff]
    %v393 = vld [vmem:[%s374 + $0x90] sm:$0xff]
    %v394 = vld [vmem:[%s374 + $0x98] sm:$0xff]
    %v395 = vld [vmem:[%s374 + $0xa0] sm:$0xff]
    %v396 = vld [vmem:[%s374 + $0xa8] sm:$0xff]
    %v397 = vld [vmem:[%s374 + $0xb0] sm:$0xff]
    %v398 = vld [vmem:[%s374 + $0xb8] sm:$0xff]
    %v399 = vld [vmem:[%s374 + $0xc0] sm:$0xff]
    %v400 = vld [vmem:[%s374 + $0xc8] sm:$0xff]
    %v401 = vld [vmem:[%s374 + $0xd0] sm:$0xff]
    %v402 = vld [vmem:[%s374 + $0xd8] sm:$0xff]
    %v403 = vld [vmem:[%s374 + $0xe0] sm:$0xff]
    %v404 = vld [vmem:[%s374 + $0xe8] sm:$0xff]
    %v405 = vld [vmem:[%s374 + $0xf0] sm:$0xff]
    %v406 = vld [vmem:[%s374 + $0xf8] sm:$0xff]
    %407 = vmatpush.msra.mxu0 %v405
    %408 = vmatpush.msra.mxu0 %v403
    %409 = vmatpush.msra.mxu0 %v401
    %410 = vmatpush.msra.mxu0 %v399
    %411 = vmatpush.msra.mxu0 %v397
    %412 = vmatpush.msra.mxu0 %v395
    %413 = vmatpush.msra.mxu0 %v393
    %414 = vmatpush.msra.mxu0 %v391
    %415 = vmatpush.msra.mxu0 %v389
    %416 = vmatpush.msra.mxu0 %v387
    %417 = vmatpush.msra.mxu0 %v385
    %418 = vmatpush.msra.mxu0 %v383
    %419 = vmatpush.msra.mxu0 %v381
    %420 = vmatpush.msra.mxu0 %v379
    %421 = vmatpush.msra.mxu0 %v377
    %422 = vmatpush.msra.mxu0 %v375
    %423 = vmatmul.f32.gmra.mxu0 %v370
    %v424 = vpop.f32.mrf.mxu0
    %v425 = vadd.f32 0.0, %v424
    %426 = vmatmul.f32.gmra.mxu0 %v371
    %v427 = vpop.f32.mrf.mxu0
    %v428 = vadd.f32 0.0, %v427
    %429 = vmatmul.f32.gmra.mxu0 %v372
    %v430 = vpop.f32.mrf.mxu0
    %v431 = vadd.f32 0.0, %v430
    %432 = vmatmul.f32.gmra.mxu0 %v373
    %v433 = vpop.f32.mrf.mxu0
    %v434 = vadd.f32 0.0, %v433
    %435 = vdwg.mxu0
    %436 = vmatpush.msra.mxu0 %v406
    %437 = vmatpush.msra.mxu0 %v404
    %438 = vmatpush.msra.mxu0 %v402
    %439 = vmatpush.msra.mxu0 %v400
    %440 = vmatpush.msra.mxu0 %v398
    %441 = vmatpush.msra.mxu0 %v396
    %442 = vmatpush.msra.mxu0 %v394
    %443 = vmatpush.msra.mxu0 %v392
    %444 = vmatpush.msra.mxu0 %v390
    %445 = vmatpush.msra.mxu0 %v388
    %446 = vmatpush.msra.mxu0 %v386
    %447 = vmatpush.msra.mxu0 %v384
    %448 = vmatpush.msra.mxu0 %v382
    %449 = vmatpush.msra.mxu0 %v380
    %450 = vmatpush.msra.mxu0 %v378
    %451 = vmatpush.msra.mxu0 %v376
    %452 = vmatmul.f32.gmra.mxu0 %v370
    %v453 = vpop.f32.mrf.mxu0
    %v454 = vadd.f32 0.0, %v453
    %455 = vmatmul.f32.gmra.mxu0 %v371
    %v456 = vpop.f32.mrf.mxu0
    %v457 = vadd.f32 0.0, %v456
    %458 = vmatmul.f32.gmra.mxu0 %v372
    %v459 = vpop.f32.mrf.mxu0
    %v460 = vadd.f32 0.0, %v459
    %461 = vmatmul.f32.gmra.mxu0 %v373
    %v462 = vpop.f32.mrf.mxu0
    %v463 = vadd.f32 0.0, %v462
    %464 = vdwg.mxu0
    %v465 = vadd.f32 %v362, %v425
    %v466 = vadd.f32 %v363, %v454
    %v467 = vadd.f32 %v364, %v428
    %v468 = vadd.f32 %v365, %v457
    %v469 = vadd.f32 %v366, %v431
    %v470 = vadd.f32 %v367, %v460
    %v471 = vadd.f32 %v368, %v434
    %v472 = vadd.f32 %v369, %v463
    %v473 = vld [vmem:[%s0 + $0x4] sm:$0xff]
    %v474 = vld [vmem:[%s0 + $0xc] sm:$0xff]
    %v475 = vld [vmem:[%s0 + $0x14] sm:$0xff]
    %v476 = vld [vmem:[%s0 + $0x1c] sm:$0xf]
    %s477 = scalar_lea.vmem [#allocation4], 1024
    %v478 = vld [vmem:[%s477] sm:$0xff]
    %v479 = vld [vmem:[%s477 + $0x8] sm:$0xff]
    %v480 = vld [vmem:[%s477 + $0x10] sm:$0xff]
    %v481 = vld [vmem:[%s477 + $0x18] sm:$0xff]
    %v482 = vld [vmem:[%s477 + $0x20] sm:$0xff]
    %v483 = vld [vmem:[%s477 + $0x28] sm:$0xff]
    %v484 = vld [vmem:[%s477 + $0x30] sm:$0xff]
    %v485 = vld [vmem:[%s477 + $0x38] sm:$0xff]
    %v486 = vld [vmem:[%s477 + $0x40] sm:$0xff]
    %v487 = vld [vmem:[%s477 + $0x48] sm:$0xff]
    %v488 = vld [vmem:[%s477 + $0x50] sm:$0xff]
    %v489 = vld [vmem:[%s477 + $0x58] sm:$0xff]
    %v490 = vld [vmem:[%s477 + $0x60] sm:$0xff]
    %v491 = vld [vmem:[%s477 + $0x68] sm:$0xff]
    %v492 = vld [vmem:[%s477 + $0x70] sm:$0xff]
    %v493 = vld [vmem:[%s477 + $0x78] sm:$0xff]
    %v494 = vld [vmem:[%s477 + $0x80] sm:$0xff]
    %v495 = vld [vmem:[%s477 + $0x88] sm:$0xff]
    %v496 = vld [vmem:[%s477 + $0x90] sm:$0xff]
    %v497 = vld [vmem:[%s477 + $0x98] sm:$0xff]
    %v498 = vld [vmem:[%s477 + $0xa0] sm:$0xff]
    %v499 = vld [vmem:[%s477 + $0xa8] sm:$0xff]
    %v500 = vld [vmem:[%s477 + $0xb0] sm:$0xff]
    %v501 = vld [vmem:[%s477 + $0xb8] sm:$0xff]
    %v502 = vld [vmem:[%s477 + $0xc0] sm:$0xff]
    %v503 = vld [vmem:[%s477 + $0xc8] sm:$0xff]
    %v504 = vld [vmem:[%s477 + $0xd0] sm:$0xff]
    %v505 = vld [vmem:[%s477 + $0xd8] sm:$0xff]
    %v506 = vld [vmem:[%s477 + $0xe0] sm:$0xff]
    %v507 = vld [vmem:[%s477 + $0xe8] sm:$0xff]
    %v508 = vld [vmem:[%s477 + $0xf0] sm:$0xff]
    %v509 = vld [vmem:[%s477 + $0xf8] sm:$0xff]
    %510 = vmatpush.msra.mxu0 %v508
    %511 = vmatpush.msra.mxu0 %v506
    %512 = vmatpush.msra.mxu0 %v504
    %513 = vmatpush.msra.mxu0 %v502
    %514 = vmatpush.msra.mxu0 %v500
    %515 = vmatpush.msra.mxu0 %v498
    %516 = vmatpush.msra.mxu0 %v496
    %517 = vmatpush.msra.mxu0 %v494
    %518 = vmatpush.msra.mxu0 %v492
    %519 = vmatpush.msra.mxu0 %v490
    %520 = vmatpush.msra.mxu0 %v488
    %521 = vmatpush.msra.mxu0 %v486
    %522 = vmatpush.msra.mxu0 %v484
    %523 = vmatpush.msra.mxu0 %v482
    %524 = vmatpush.msra.mxu0 %v480
    %525 = vmatpush.msra.mxu0 %v478
    %526 = vmatmul.f32.gmra.mxu0 %v473
    %v527 = vpop.f32.mrf.mxu0
    %v528 = vadd.f32 0.0, %v527
    %529 = vmatmul.f32.gmra.mxu0 %v474
    %v530 = vpop.f32.mrf.mxu0
    %v531 = vadd.f32 0.0, %v530
    %532 = vmatmul.f32.gmra.mxu0 %v475
    %v533 = vpop.f32.mrf.mxu0
    %v534 = vadd.f32 0.0, %v533
    %535 = vmatmul.f32.gmra.mxu0 %v476
    %v536 = vpop.f32.mrf.mxu0
    %v537 = vadd.f32 0.0, %v536
    %538 = vdwg.mxu0
    %539 = vmatpush.msra.mxu0 %v509
    %540 = vmatpush.msra.mxu0 %v507
    %541 = vmatpush.msra.mxu0 %v505
    %542 = vmatpush.msra.mxu0 %v503
    %543 = vmatpush.msra.mxu0 %v501
    %544 = vmatpush.msra.mxu0 %v499
    %545 = vmatpush.msra.mxu0 %v497
    %546 = vmatpush.msra.mxu0 %v495
    %547 = vmatpush.msra.mxu0 %v493
    %548 = vmatpush.msra.mxu0 %v491
    %549 = vmatpush.msra.mxu0 %v489
    %550 = vmatpush.msra.mxu0 %v487
    %551 = vmatpush.msra.mxu0 %v485
    %552 = vmatpush.msra.mxu0 %v483
    %553 = vmatpush.msra.mxu0 %v481
    %554 = vmatpush.msra.mxu0 %v479
    %555 = vmatmul.f32.gmra.mxu0 %v473
    %v556 = vpop.f32.mrf.mxu0
    %v557 = vadd.f32 0.0, %v556
    %558 = vmatmul.f32.gmra.mxu0 %v474
    %v559 = vpop.f32.mrf.mxu0
    %v560 = vadd.f32 0.0, %v559
    %561 = vmatmul.f32.gmra.mxu0 %v475
    %v562 = vpop.f32.mrf.mxu0
    %v563 = vadd.f32 0.0, %v562
    %564 = vmatmul.f32.gmra.mxu0 %v476
    %v565 = vpop.f32.mrf.mxu0
    %v566 = vadd.f32 0.0, %v565
    %567 = vdwg.mxu0
    %v568 = vadd.f32 %v465, %v528
    %v569 = vadd.f32 %v466, %v557
    %v570 = vadd.f32 %v467, %v531
    %v571 = vadd.f32 %v468, %v560
    %v572 = vadd.f32 %v469, %v534
    %v573 = vadd.f32 %v470, %v563
    %v574 = vadd.f32 %v471, %v537
    %v575 = vadd.f32 %v472, %v566
    %v577 = vperm.slane %v72, 0
    %v578 = vperm.slane %v72, 1
    %v581 = vadd.f32 %v568, %v577
    %v582 = vadd.f32 %v569, %v578
    %v583 = vadd.f32 %v570, %v577
    %v584 = vadd.f32 %v571, %v578
    %v585 = vadd.f32 %v572, %v577
    %v586 = vadd.f32 %v573, %v578
    %v587 = vadd.f32 %v574, %v577
    %v588 = vadd.f32 %v575, %v578
    %v589 = vmax.f32 %v581, 0.0
    %v590 = vmax.f32 %v582, 0.0
    %v591 = vmax.f32 %v583, 0.0
    %v592 = vmax.f32 %v584, 0.0
    %v593 = vmax.f32 %v585, 0.0
    %v594 = vmax.f32 %v586, 0.0
    %v595 = vmax.f32 %v587, 0.0
    %v596 = vmax.f32 %v588, 0.0
    %v597 = vmax.f32 %v589, %v590
    %v598 = vmax.f32 %v591, %v592
    %v599 = vmax.f32 %v593, %v594
    %v600 = vmax.f32 %v595, %v596
    %601 = vst [vmem:[#allocation2] sm:$0xff] %v597
    %602 = vst [vmem:[#allocation2 + $0x8] sm:$0xff] %v598
    %603 = vst [vmem:[#allocation2 + $0x10] sm:$0xff] %v599
    %604 = vst [vmem:[#allocation2 + $0x18] sm:$0xf] %v600
    %v605 = vld [vmem:[#allocation2] ss:$2 sm:$0xff]
    %s606 = scalar_lea.vmem [#allocation2], 16
    %v607 = vld [vmem:[%s606] ss:$2 sm:$0x3f]
    %s608 = scalar_lea.vmem [#allocation2], 1
    %v609 = vld [vmem:[%s608] ss:$2 sm:$0xff]
    %s610 = scalar_lea.vmem [#allocation2], 17
    %v611 = vld [vmem:[%s610] ss:$2 sm:$0x3f]
    %v612 = vmax.f32 %v605, %v609
    %v613 = vmax.f32 %v607, %v611
    %v614 = vld [vmem:[#allocation7] sm:$0xff]
    %v615 = vld [vmem:[#allocation7 + $0x8] sm:$0xff]
    %v616 = vld [vmem:[#allocation7 + $0x10] sm:$0xff]
    %v617 = vld [vmem:[#allocation7 + $0x18] sm:$0xff]
    %v618 = vld [vmem:[#allocation7 + $0x20] sm:$0xff]
    %v619 = vld [vmem:[#allocation7 + $0x28] sm:$0xff]
    %v620 = vld [vmem:[#allocation7 + $0x30] sm:$0xff]
    %v621 = vld [vmem:[#allocation7 + $0x38] sm:$0xff]
    %v622 = vld [vmem:[#allocation7 + $0x40] sm:$0xff]
    %v623 = vld [vmem:[#allocation7 + $0x48] sm:$0xff]
    %v624 = vld [vmem:[#allocation7 + $0x50] sm:$0xff]
    %v625 = vld [vmem:[#allocation7 + $0x58] sm:$0xff]
    %v626 = vld [vmem:[#allocation7 + $0x60] sm:$0xff]
    %v627 = vld [vmem:[#allocation7 + $0x68] sm:$0xff]
    %v628 = vld [vmem:[#allocation7 + $0x70] sm:$0xff]
    %v629 = vld [vmem:[#allocation7 + $0x78] sm:$0xff]
    %v630 = vld [vmem:[#allocation7 + $0x80] sm:$0xff]
    %v631 = vld [vmem:[#allocation7 + $0x88] sm:$0xff]
    %v632 = vld [vmem:[#allocation7 + $0x90] sm:$0xff]
    %v633 = vld [vmem:[#allocation7 + $0x98] sm:$0xff]
    %v634 = vld [vmem:[#allocation7 + $0xa0] sm:$0xff]
    %v635 = vld [vmem:[#allocation7 + $0xa8] sm:$0xff]
    %v636 = vld [vmem:[#allocation7 + $0xb0] sm:$0xff]
    %v637 = vld [vmem:[#allocation7 + $0xb8] sm:$0xff]
    %v638 = vld [vmem:[#allocation7 + $0xc0] sm:$0xff]
    %v639 = vld [vmem:[#allocation7 + $0xc8] sm:$0xff]
    %v640 = vld [vmem:[#allocation7 + $0xd0] sm:$0xff]
    %v641 = vld [vmem:[#allocation7 + $0xd8] sm:$0xff]
    %v642 = vld [vmem:[#allocation7 + $0xe0] sm:$0xff]
    %v643 = vld [vmem:[#allocation7 + $0xe8] sm:$0xff]
    %v644 = vld [vmem:[#allocation7 + $0xf0] sm:$0xff]
    %v645 = vld [vmem:[#allocation7 + $0xf8] sm:$0xff]
    %s646 = scalar_lea.vmem [#allocation7], 256
    %v647 = vld [vmem:[%s646] sm:$0xff]
    %v648 = vld [vmem:[%s646 + $0x8] sm:$0xff]
    %v649 = vld [vmem:[%s646 + $0x10] sm:$0xff]
    %v650 = vld [vmem:[%s646 + $0x18] sm:$0xff]
    %v651 = vld [vmem:[%s646 + $0x20] sm:$0xff]
    %v652 = vld [vmem:[%s646 + $0x28] sm:$0xff]
    %v653 = vld [vmem:[%s646 + $0x30] sm:$0xff]
    %v654 = vld [vmem:[%s646 + $0x38] sm:$0xff]
    %v655 = vld [vmem:[%s646 + $0x40] sm:$0xff]
    %v656 = vld [vmem:[%s646 + $0x48] sm:$0xff]
    %v657 = vld [vmem:[%s646 + $0x50] sm:$0xff]
    %v658 = vld [vmem:[%s646 + $0x58] sm:$0xff]
    %v659 = vld [vmem:[%s646 + $0x60] sm:$0xff]
    %v660 = vld [vmem:[%s646 + $0x68] sm:$0xff]
    %v661 = vld [vmem:[%s646 + $0x70] sm:$0xff]
    %v662 = vld [vmem:[%s646 + $0x78] sm:$0xff]
    %v663 = vld [vmem:[%s646 + $0x80] sm:$0xff]
    %v664 = vld [vmem:[%s646 + $0x88] sm:$0xff]
    %v665 = vld [vmem:[%s646 + $0x90] sm:$0xff]
    %v666 = vld [vmem:[%s646 + $0x98] sm:$0xff]
    %v667 = vld [vmem:[%s646 + $0xa0] sm:$0xff]
    %v668 = vld [vmem:[%s646 + $0xa8] sm:$0xff]
    %v669 = vld [vmem:[%s646 + $0xb0] sm:$0xff]
    %v670 = vld [vmem:[%s646 + $0xb8] sm:$0xff]
    %v671 = vld [vmem:[%s646 + $0xc0] sm:$0xff]
    %v672 = vld [vmem:[%s646 + $0xc8] sm:$0xff]
    %v673 = vld [vmem:[%s646 + $0xd0] sm:$0xff]
    %v674 = vld [vmem:[%s646 + $0xd8] sm:$0xff]
    %v675 = vld [vmem:[%s646 + $0xe0] sm:$0xff]
    %v676 = vld [vmem:[%s646 + $0xe8] sm:$0xff]
    %v677 = vld [vmem:[%s646 + $0xf0] sm:$0xff]
    %v678 = vld [vmem:[%s646 + $0xf8] sm:$0xff]
    %vm681 = vcmask 1046528
    %v682 = vrot.slane %v612, 1
    %v683 = vrot.slane %v613, 1
    %v684 = vsel %vm681, %v682, %v683
    %687 = vmatpush.msra.mxu0 %v677
    %688 = vmatpush.msra.mxu0 %v675
    %689 = vmatpush.msra.mxu0 %v673
    %690 = vmatpush.msra.mxu0 %v671
    %691 = vmatpush.msra.mxu0 %v669
    %692 = vmatpush.msra.mxu0 %v667
    %693 = vmatpush.msra.mxu0 %v665
    %694 = vmatpush.msra.mxu0 %v663
    %695 = vmatpush.msra.mxu0 %v661
    %696 = vmatpush.msra.mxu0 %v659
    %697 = vmatpush.msra.mxu0 %v657
    %698 = vmatpush.msra.mxu0 %v655
    %699 = vmatpush.msra.mxu0 %v653
    %700 = vmatpush.msra.mxu0 %v651
    %701 = vmatpush.msra.mxu0 %v649
    %702 = vmatpush.msra.mxu0 %v647
    %703 = vmatmul.f32.gmra.mxu0 %v684
    %v704 = vpop.f32.mrf.mxu0
    %v705 = vadd.f32 0.0, %v704
    %706 = vmatmul.f32.gmra.mxu0 %v683
    %v707 = vpop.f32.mrf.mxu0
    %v708 = vadd.f32 0.0, %v707
    %709 = vdwg.mxu0
    %710 = vmatpush.msra.mxu0 %v678
    %711 = vmatpush.msra.mxu0 %v676
    %712 = vmatpush.msra.mxu0 %v674
    %713 = vmatpush.msra.mxu0 %v672
    %714 = vmatpush.msra.mxu0 %v670
    %715 = vmatpush.msra.mxu0 %v668
    %716 = vmatpush.msra.mxu0 %v666
    %717 = vmatpush.msra.mxu0 %v664
    %718 = vmatpush.msra.mxu0 %v662
    %719 = vmatpush.msra.mxu0 %v660
    %720 = vmatpush.msra.mxu0 %v658
    %721 = vmatpush.msra.mxu0 %v656
    %722 = vmatpush.msra.mxu0 %v654
    %723 = vmatpush.msra.mxu0 %v652
    %724 = vmatpush.msra.mxu0 %v650
    %725 = vmatpush.msra.mxu0 %v648
    %726 = vmatmul.f32.gmra.mxu0 %v684
    %v727 = vpop.f32.mrf.mxu0
    %v728 = vadd.f32 0.0, %v727
    %729 = vmatmul.f32.gmra.mxu0 %v683
    %v730 = vpop.f32.mrf.mxu0
    %v731 = vadd.f32 0.0, %v730
    %732 = vdwg.mxu0
    %733 = vmatpush.msra.mxu0 %v644
    %734 = vmatpush.msra.mxu0 %v642
    %735 = vmatpush.msra.mxu0 %v640
    %736 = vmatpush.msra.mxu0 %v638
    %737 = vmatpush.msra.mxu0 %v636
    %738 = vmatpush.msra.mxu0 %v634
    %739 = vmatpush.msra.mxu0 %v632
    %740 = vmatpush.msra.mxu0 %v630
    %741 = vmatpush.msra.mxu0 %v628
    %742 = vmatpush.msra.mxu0 %v626
    %743 = vmatpush.msra.mxu0 %v624
    %744 = vmatpush.msra.mxu0 %v622
    %745 = vmatpush.msra.mxu0 %v620
    %746 = vmatpush.msra.mxu0 %v618
    %747 = vmatpush.msra.mxu0 %v616
    %748 = vmatpush.msra.mxu0 %v614
    %749 = vmatmul.f32.gmra.mxu0 %v612
    %v750 = vpop.f32.mrf.mxu0
    %v751 = vadd.f32 %v705, %v750
    %752 = vmatmul.f32.gmra.mxu0 %v613
    %v753 = vpop.f32.mrf.mxu0
    %v754 = vadd.f32 %v708, %v753
    %755 = vdwg.mxu0
    %756 = vmatpush.msra.mxu0 %v645
    %757 = vmatpush.msra.mxu0 %v643
    %758 = vmatpush.msra.mxu0 %v641
    %759 = vmatpush.msra.mxu0 %v639
    %760 = vmatpush.msra.mxu0 %v637
    %761 = vmatpush.msra.mxu0 %v635
    %762 = vmatpush.msra.mxu0 %v633
    %763 = vmatpush.msra.mxu0 %v631
    %764 = vmatpush.msra.mxu0 %v629
    %765 = vmatpush.msra.mxu0 %v627
    %766 = vmatpush.msra.mxu0 %v625
    %767 = vmatpush.msra.mxu0 %v623
    %768 = vmatpush.msra.mxu0 %v621
    %769 = vmatpush.msra.mxu0 %v619
    %770 = vmatpush.msra.mxu0 %v617
    %771 = vmatpush.msra.mxu0 %v615
    %772 = vmatmul.f32.gmra.mxu0 %v612
    %v773 = vpop.f32.mrf.mxu0
    %v774 = vadd.f32 %v728, %v773
    %775 = vmatmul.f32.gmra.mxu0 %v613
    %v776 = vpop.f32.mrf.mxu0
    %v777 = vadd.f32 %v731, %v776
    %778 = vdwg.mxu0
    %s779 = scalar_lea.vmem [#allocation7], 512
    %v780 = vld [vmem:[%s779] sm:$0xff]
    %v781 = vld [vmem:[%s779 + $0x8] sm:$0xff]
    %v782 = vld [vmem:[%s779 + $0x10] sm:$0xff]
    %v783 = vld [vmem:[%s779 + $0x18] sm:$0xff]
    %v784 = vld [vmem:[%s779 + $0x20] sm:$0xff]
    %v785 = vld [vmem:[%s779 + $0x28] sm:$0xff]
    %v786 = vld [vmem:[%s779 + $0x30] sm:$0xff]
    %v787 = vld [vmem:[%s779 + $0x38] sm:$0xff]
    %v788 = vld [vmem:[%s779 + $0x40] sm:$0xff]
    %v789 = vld [vmem:[%s779 + $0x48] sm:$0xff]
    %v790 = vld [vmem:[%s779 + $0x50] sm:$0xff]
    %v791 = vld [vmem:[%s779 + $0x58] sm:$0xff]
    %v792 = vld [vmem:[%s779 + $0x60] sm:$0xff]
    %v793 = vld [vmem:[%s779 + $0x68] sm:$0xff]
    %v794 = vld [vmem:[%s779 + $0x70] sm:$0xff]
    %v795 = vld [vmem:[%s779 + $0x78] sm:$0xff]
    %v796 = vld [vmem:[%s779 + $0x80] sm:$0xff]
    %v797 = vld [vmem:[%s779 + $0x88] sm:$0xff]
    %v798 = vld [vmem:[%s779 + $0x90] sm:$0xff]
    %v799 = vld [vmem:[%s779 + $0x98] sm:$0xff]
    %v800 = vld [vmem:[%s779 + $0xa0] sm:$0xff]
    %v801 = vld [vmem:[%s779 + $0xa8] sm:$0xff]
    %v802 = vld [vmem:[%s779 + $0xb0] sm:$0xff]
    %v803 = vld [vmem:[%s779 + $0xb8] sm:$0xff]
    %v804 = vld [vmem:[%s779 + $0xc0] sm:$0xff]
    %v805 = vld [vmem:[%s779 + $0xc8] sm:$0xff]
    %v806 = vld [vmem:[%s779 + $0xd0] sm:$0xff]
    %v807 = vld [vmem:[%s779 + $0xd8] sm:$0xff]
    %v808 = vld [vmem:[%s779 + $0xe0] sm:$0xff]
    %v809 = vld [vmem:[%s779 + $0xe8] sm:$0xff]
    %v810 = vld [vmem:[%s779 + $0xf0] sm:$0xff]
    %v811 = vld [vmem:[%s779 + $0xf8] sm:$0xff]
    %vm812 = vcmask 1045504
    %v813 = vrot.slane %v612, 2
    %v814 = vrot.slane %v613, 2
    %v815 = vsel %vm812, %v813, %v814
    %818 = vmatpush.msra.mxu0 %v810
    %819 = vmatpush.msra.mxu0 %v808
    %820 = vmatpush.msra.mxu0 %v806
    %821 = vmatpush.msra.mxu0 %v804
    %822 = vmatpush.msra.mxu0 %v802
    %823 = vmatpush.msra.mxu0 %v800
    %824 = vmatpush.msra.mxu0 %v798
    %825 = vmatpush.msra.mxu0 %v796
    %826 = vmatpush.msra.mxu0 %v794
    %827 = vmatpush.msra.mxu0 %v792
    %828 = vmatpush.msra.mxu0 %v790
    %829 = vmatpush.msra.mxu0 %v788
    %830 = vmatpush.msra.mxu0 %v786
    %831 = vmatpush.msra.mxu0 %v784
    %832 = vmatpush.msra.mxu0 %v782
    %833 = vmatpush.msra.mxu0 %v780
    %834 = vmatmul.f32.gmra.mxu0 %v815
    %v835 = vpop.f32.mrf.mxu0
    %v836 = vadd.f32 0.0, %v835
    %837 = vmatmul.f32.gmra.mxu0 %v814
    %v838 = vpop.f32.mrf.mxu0
    %v839 = vadd.f32 0.0, %v838
    %840 = vdwg.mxu0
    %841 = vmatpush.msra.mxu0 %v811
    %842 = vmatpush.msra.mxu0 %v809
    %843 = vmatpush.msra.mxu0 %v807
    %844 = vmatpush.msra.mxu0 %v805
    %845 = vmatpush.msra.mxu0 %v803
    %846 = vmatpush.msra.mxu0 %v801
    %847 = vmatpush.msra.mxu0 %v799
    %848 = vmatpush.msra.mxu0 %v797
    %849 = vmatpush.msra.mxu0 %v795
    %850 = vmatpush.msra.mxu0 %v793
    %851 = vmatpush.msra.mxu0 %v791
    %852 = vmatpush.msra.mxu0 %v789
    %853 = vmatpush.msra.mxu0 %v787
    %854 = vmatpush.msra.mxu0 %v785
    %855 = vmatpush.msra.mxu0 %v783
    %856 = vmatpush.msra.mxu0 %v781
    %857 = vmatmul.f32.gmra.mxu0 %v815
    %v858 = vpop.f32.mrf.mxu0
    %v859 = vadd.f32 0.0, %v858
    %860 = vmatmul.f32.gmra.mxu0 %v814
    %v861 = vpop.f32.mrf.mxu0
    %v862 = vadd.f32 0.0, %v861
    %863 = vdwg.mxu0
    %v864 = vadd.f32 %v751, %v836
    %v865 = vadd.f32 %v774, %v859
    %v866 = vadd.f32 %v754, %v839
    %v867 = vadd.f32 %v777, %v862
    %s868 = scalar_lea.vmem [#allocation7], 768
    %v869 = vld [vmem:[%s868] sm:$0xff]
    %v870 = vld [vmem:[%s868 + $0x8] sm:$0xff]
    %v871 = vld [vmem:[%s868 + $0x10] sm:$0xff]
    %v872 = vld [vmem:[%s868 + $0x18] sm:$0xff]
    %v873 = vld [vmem:[%s868 + $0x20] sm:$0xff]
    %v874 = vld [vmem:[%s868 + $0x28] sm:$0xff]
    %v875 = vld [vmem:[%s868 + $0x30] sm:$0xff]
    %v876 = vld [vmem:[%s868 + $0x38] sm:$0xff]
    %v877 = vld [vmem:[%s868 + $0x40] sm:$0xff]
    %v878 = vld [vmem:[%s868 + $0x48] sm:$0xff]
    %v879 = vld [vmem:[%s868 + $0x50] sm:$0xff]
    %v880 = vld [vmem:[%s868 + $0x58] sm:$0xff]
    %v881 = vld [vmem:[%s868 + $0x60] sm:$0xff]
    %v882 = vld [vmem:[%s868 + $0x68] sm:$0xff]
    %v883 = vld [vmem:[%s868 + $0x70] sm:$0xff]
    %v884 = vld [vmem:[%s868 + $0x78] sm:$0xff]
    %v885 = vld [vmem:[%s868 + $0x80] sm:$0xff]
    %v886 = vld [vmem:[%s868 + $0x88] sm:$0xff]
    %v887 = vld [vmem:[%s868 + $0x90] sm:$0xff]
    %v888 = vld [vmem:[%s868 + $0x98] sm:$0xff]
    %v889 = vld [vmem:[%s868 + $0xa0] sm:$0xff]
    %v890 = vld [vmem:[%s868 + $0xa8] sm:$0xff]
    %v891 = vld [vmem:[%s868 + $0xb0] sm:$0xff]
    %v892 = vld [vmem:[%s868 + $0xb8] sm:$0xff]
    %v893 = vld [vmem:[%s868 + $0xc0] sm:$0xff]
    %v894 = vld [vmem:[%s868 + $0xc8] sm:$0xff]
    %v895 = vld [vmem:[%s868 + $0xd0] sm:$0xff]
    %v896 = vld [vmem:[%s868 + $0xd8] sm:$0xff]
    %v897 = vld [vmem:[%s868 + $0xe0] sm:$0xff]
    %v898 = vld [vmem:[%s868 + $0xe8] sm:$0xff]
    %v899 = vld [vmem:[%s868 + $0xf0] sm:$0xff]
    %v900 = vld [vmem:[%s868 + $0xf8] sm:$0xff]
    %vm901 = vcmask 1044480
    %v902 = vrot.slane %v612, 3
    %v903 = vrot.slane %v613, 3
    %v904 = vsel %vm901, %v902, %v903
    %907 = vmatpush.msra.mxu0 %v899
    %908 = vmatpush.msra.mxu0 %v897
    %909 = vmatpush.msra.mxu0 %v895
    %910 = vmatpush.msra.mxu0 %v893
    %911 = vmatpush.msra.mxu0 %v891
    %912 = vmatpush.msra.mxu0 %v889
    %913 = vmatpush.msra.mxu0 %v887
    %914 = vmatpush.msra.mxu0 %v885
    %915 = vmatpush.msra.mxu0 %v883
    %916 = vmatpush.msra.mxu0 %v881
    %917 = vmatpush.msra.mxu0 %v879
    %918 = vmatpush.msra.mxu0 %v877
    %919 = vmatpush.msra.mxu0 %v875
    %920 = vmatpush.msra.mxu0 %v873
    %921 = vmatpush.msra.mxu0 %v871
    %922 = vmatpush.msra.mxu0 %v869
    %923 = vmatmul.f32.gmra.mxu0 %v904
    %v924 = vpop.f32.mrf.mxu0
    %v925 = vadd.f32 0.0, %v924
    %926 = vmatmul.f32.gmra.mxu0 %v903
    %v927 = vpop.f32.mrf.mxu0
    %v928 = vadd.f32 0.0, %v927
    %929 = vdwg.mxu0
    %930 = vmatpush.msra.mxu0 %v900
    %931 = vmatpush.msra.mxu0 %v898
    %932 = vmatpush.msra.mxu0 %v896
    %933 = vmatpush.msra.mxu0 %v894
    %934 = vmatpush.msra.mxu0 %v892
    %935 = vmatpush.msra.mxu0 %v890
    %936 = vmatpush.msra.mxu0 %v888
    %937 = vmatpush.msra.mxu0 %v886
    %938 = vmatpush.msra.mxu0 %v884
    %939 = vmatpush.msra.mxu0 %v882
    %940 = vmatpush.msra.mxu0 %v880
    %941 = vmatpush.msra.mxu0 %v878
    %942 = vmatpush.msra.mxu0 %v876
    %943 = vmatpush.msra.mxu0 %v874
    %944 = vmatpush.msra.mxu0 %v872
    %945 = vmatpush.msra.mxu0 %v870
    %946 = vmatmul.f32.gmra.mxu0 %v904
    %v947 = vpop.f32.mrf.mxu0
    %v948 = vadd.f32 0.0, %v947
    %949 = vmatmul.f32.gmra.mxu0 %v903
    %v950 = vpop.f32.mrf.mxu0
    %v951 = vadd.f32 0.0, %v950
    %952 = vdwg.mxu0
    %v953 = vadd.f32 %v864, %v925
    %v954 = vadd.f32 %v865, %v948
    %v955 = vadd.f32 %v866, %v928
    %v956 = vadd.f32 %v867, %v951
    %s957 = scalar_lea.vmem [#allocation7], 1024
    %v958 = vld [vmem:[%s957] sm:$0xff]
    %v959 = vld [vmem:[%s957 + $0x8] sm:$0xff]
    %v960 = vld [vmem:[%s957 + $0x10] sm:$0xff]
    %v961 = vld [vmem:[%s957 + $0x18] sm:$0xff]
    %v962 = vld [vmem:[%s957 + $0x20] sm:$0xff]
    %v963 = vld [vmem:[%s957 + $0x28] sm:$0xff]
    %v964 = vld [vmem:[%s957 + $0x30] sm:$0xff]
    %v965 = vld [vmem:[%s957 + $0x38] sm:$0xff]
    %v966 = vld [vmem:[%s957 + $0x40] sm:$0xff]
    %v967 = vld [vmem:[%s957 + $0x48] sm:$0xff]
    %v968 = vld [vmem:[%s957 + $0x50] sm:$0xff]
    %v969 = vld [vmem:[%s957 + $0x58] sm:$0xff]
    %v970 = vld [vmem:[%s957 + $0x60] sm:$0xff]
    %v971 = vld [vmem:[%s957 + $0x68] sm:$0xff]
    %v972 = vld [vmem:[%s957 + $0x70] sm:$0xff]
    %v973 = vld [vmem:[%s957 + $0x78] sm:$0xff]
    %v974 = vld [vmem:[%s957 + $0x80] sm:$0xff]
    %v975 = vld [vmem:[%s957 + $0x88] sm:$0xff]
    %v976 = vld [vmem:[%s957 + $0x90] sm:$0xff]
    %v977 = vld [vmem:[%s957 + $0x98] sm:$0xff]
    %v978 = vld [vmem:[%s957 + $0xa0] sm:$0xff]
    %v979 = vld [vmem:[%s957 + $0xa8] sm:$0xff]
    %v980 = vld [vmem:[%s957 + $0xb0] sm:$0xff]
    %v981 = vld [vmem:[%s957 + $0xb8] sm:$0xff]
    %v982 = vld [vmem:[%s957 + $0xc0] sm:$0xff]
    %v983 = vld [vmem:[%s957 + $0xc8] sm:$0xff]
    %v984 = vld [vmem:[%s957 + $0xd0] sm:$0xff]
    %v985 = vld [vmem:[%s957 + $0xd8] sm:$0xff]
    %v986 = vld [vmem:[%s957 + $0xe0] sm:$0xff]
    %v987 = vld [vmem:[%s957 + $0xe8] sm:$0xff]
    %v988 = vld [vmem:[%s957 + $0xf0] sm:$0xff]
    %v989 = vld [vmem:[%s957 + $0xf8] sm:$0xff]
    %vm990 = vcmask 1043456
    %v991 = vrot.slane %v612, 4
    %v992 = vrot.slane %v613, 4
    %v993 = vsel %vm990, %v991, %v992
    %996 = vmatpush.msra.mxu0 %v988
    %997 = vmatpush.msra.mxu0 %v986
    %998 = vmatpush.msra.mxu0 %v984
    %999 = vmatpush.msra.mxu0 %v982
    %1000 = vmatpush.msra.mxu0 %v980
    %1001 = vmatpush.msra.mxu0 %v978
    %1002 = vmatpush.msra.mxu0 %v976
    %1003 = vmatpush.msra.mxu0 %v974
    %1004 = vmatpush.msra.mxu0 %v972
    %1005 = vmatpush.msra.mxu0 %v970
    %1006 = vmatpush.msra.mxu0 %v968
    %1007 = vmatpush.msra.mxu0 %v966
    %1008 = vmatpush.msra.mxu0 %v964
    %1009 = vmatpush.msra.mxu0 %v962
    %1010 = vmatpush.msra.mxu0 %v960
    %1011 = vmatpush.msra.mxu0 %v958
    %1012 = vmatmul.f32.gmra.mxu0 %v993
    %v1013 = vpop.f32.mrf.mxu0
    %v1014 = vadd.f32 0.0, %v1013
    %1015 = vmatmul.f32.gmra.mxu0 %v992
    %v1016 = vpop.f32.mrf.mxu0
    %v1017 = vadd.f32 0.0, %v1016
    %1018 = vdwg.mxu0
    %1019 = vmatpush.msra.mxu0 %v989
    %1020 = vmatpush.msra.mxu0 %v987
    %1021 = vmatpush.msra.mxu0 %v985
    %1022 = vmatpush.msra.mxu0 %v983
    %1023 = vmatpush.msra.mxu0 %v981
    %1024 = vmatpush.msra.mxu0 %v979
    %1025 = vmatpush.msra.mxu0 %v977
    %1026 = vmatpush.msra.mxu0 %v975
    %1027 = vmatpush.msra.mxu0 %v973
    %1028 = vmatpush.msra.mxu0 %v971
    %1029 = vmatpush.msra.mxu0 %v969
    %1030 = vmatpush.msra.mxu0 %v967
    %1031 = vmatpush.msra.mxu0 %v965
    %1032 = vmatpush.msra.mxu0 %v963
    %1033 = vmatpush.msra.mxu0 %v961
    %1034 = vmatpush.msra.mxu0 %v959
    %1035 = vmatmul.f32.gmra.mxu0 %v993
    %v1036 = vpop.f32.mrf.mxu0
    %v1037 = vadd.f32 0.0, %v1036
    %1038 = vmatmul.f32.gmra.mxu0 %v992
    %v1039 = vpop.f32.mrf.mxu0
    %v1040 = vadd.f32 0.0, %v1039
    %1041 = vdwg.mxu0
    %v1042 = vadd.f32 %v953, %v1014
    %v1043 = vadd.f32 %v954, %v1037
    %v1044 = vadd.f32 %v955, %v1017
    %v1045 = vadd.f32 %v956, %v1040
    %v1047 = vperm.slane %v74, 0
    %v1048 = vperm.slane %v74, 1
    %v1051 = vadd.f32 %v1042, %v1047
    %v1052 = vadd.f32 %v1043, %v1048
    %v1053 = vadd.f32 %v1044, %v1047
    %v1054 = vadd.f32 %v1045, %v1048
    %v1055 = vmax.f32 %v1051, 0.0
    %v1056 = vmax.f32 %v1052, 0.0
    %v1057 = vmax.f32 %v1053, 0.0
    %v1058 = vmax.f32 %v1054, 0.0
    %v1059 = vmax.f32 %v1055, %v1056
    %v1060 = vmax.f32 %v1057, %v1058
    %1061 = vst [vmem:[#allocation3] sm:$0xff] %v1059
    %1062 = vst [vmem:[#allocation3 + $0x8] sm:$0x3] %v1060
    %s1063 = scalar_lea.vmem %s0, 32
    %v1064 = vld [vmem:[%s1063] sm:$0xff]
    %v1065 = vld [vmem:[%s1063 + $0x8] sm:$0xff]
    %v1066 = vld [vmem:[%s1063 + $0x10] sm:$0xff]
    %v1067 = vld [vmem:[%s1063 + $0x18] sm:$0xf]
    %v1068 = vld [vmem:[#allocation4] sm:$0xff]
    %v1069 = vld [vmem:[#allocation4 + $0x8] sm:$0xff]
    %v1070 = vld [vmem:[#allocation4 + $0x10] sm:$0xff]
    %v1071 = vld [vmem:[#allocation4 + $0x18] sm:$0xff]
    %v1072 = vld [vmem:[#allocation4 + $0x20] sm:$0xff]
    %v1073 = vld [vmem:[#allocation4 + $0x28] sm:$0xff]
    %v1074 = vld [vmem:[#allocation4 + $0x30] sm:$0xff]
    %v1075 = vld [vmem:[#allocation4 + $0x38] sm:$0xff]
    %v1076 = vld [vmem:[#allocation4 + $0x40] sm:$0xff]
    %v1077 = vld [vmem:[#allocation4 + $0x48] sm:$0xff]
    %v1078 = vld [vmem:[#allocation4 + $0x50] sm:$0xff]
    %v1079 = vld [vmem:[#allocation4 + $0x58] sm:$0xff]
    %v1080 = vld [vmem:[#allocation4 + $0x60] sm:$0xff]
    %v1081 = vld [vmem:[#allocation4 + $0x68] sm:$0xff]
    %v1082 = vld [vmem:[#allocation4 + $0x70] sm:$0xff]
    %v1083 = vld [vmem:[#allocation4 + $0x78] sm:$0xff]
    %v1084 = vld [vmem:[#allocation4 + $0x80] sm:$0xff]
    %v1085 = vld [vmem:[#allocation4 + $0x88] sm:$0xff]
    %v1086 = vld [vmem:[#allocation4 + $0x90] sm:$0xff]
    %v1087 = vld [vmem:[#allocation4 + $0x98] sm:$0xff]
    %v1088 = vld [vmem:[#allocation4 + $0xa0] sm:$0xff]
    %v1089 = vld [vmem:[#allocation4 + $0xa8] sm:$0xff]
    %v1090 = vld [vmem:[#allocation4 + $0xb0] sm:$0xff]
    %v1091 = vld [vmem:[#allocation4 + $0xb8] sm:$0xff]
    %v1092 = vld [vmem:[#allocation4 + $0xc0] sm:$0xff]
    %v1093 = vld [vmem:[#allocation4 + $0xc8] sm:$0xff]
    %v1094 = vld [vmem:[#allocation4 + $0xd0] sm:$0xff]
    %v1095 = vld [vmem:[#allocation4 + $0xd8] sm:$0xff]
    %v1096 = vld [vmem:[#allocation4 + $0xe0] sm:$0xff]
    %v1097 = vld [vmem:[#allocation4 + $0xe8] sm:$0xff]
    %v1098 = vld [vmem:[#allocation4 + $0xf0] sm:$0xff]
    %v1099 = vld [vmem:[#allocation4 + $0xf8] sm:$0xff]
    %v1100 = vld [vmem:[%s1063 + $0x1] sm:$0xff]
    %v1101 = vld [vmem:[%s1063 + $0x9] sm:$0xff]
    %v1102 = vld [vmem:[%s1063 + $0x11] sm:$0xff]
    %v1103 = vld [vmem:[%s1063 + $0x19] sm:$0xf]
    %v1104 = vld [vmem:[%s118] sm:$0xff]
    %v1105 = vld [vmem:[%s118 + $0x8] sm:$0xff]
    %v1106 = vld [vmem:[%s118 + $0x10] sm:$0xff]
    %v1107 = vld [vmem:[%s118 + $0x18] sm:$0xff]
    %v1108 = vld [vmem:[%s118 + $0x20] sm:$0xff]
    %v1109 = vld [vmem:[%s118 + $0x28] sm:$0xff]
    %v1110 = vld [vmem:[%s118 + $0x30] sm:$0xff]
    %v1111 = vld [vmem:[%s118 + $0x38] sm:$0xff]
    %v1112 = vld [vmem:[%s118 + $0x40] sm:$0xff]
    %v1113 = vld [vmem:[%s118 + $0x48] sm:$0xff]
    %v1114 = vld [vmem:[%s118 + $0x50] sm:$0xff]
    %v1115 = vld [vmem:[%s118 + $0x58] sm:$0xff]
    %v1116 = vld [vmem:[%s118 + $0x60] sm:$0xff]
    %v1117 = vld [vmem:[%s118 + $0x68] sm:$0xff]
    %v1118 = vld [vmem:[%s118 + $0x70] sm:$0xff]
    %v1119 = vld [vmem:[%s118 + $0x78] sm:$0xff]
    %v1120 = vld [vmem:[%s118 + $0x80] sm:$0xff]
    %v1121 = vld [vmem:[%s118 + $0x88] sm:$0xff]
    %v1122 = vld [vmem:[%s118 + $0x90] sm:$0xff]
    %v1123 = vld [vmem:[%s118 + $0x98] sm:$0xff]
    %v1124 = vld [vmem:[%s118 + $0xa0] sm:$0xff]
    %v1125 = vld [vmem:[%s118 + $0xa8] sm:$0xff]
    %v1126 = vld [vmem:[%s118 + $0xb0] sm:$0xff]
    %v1127 = vld [vmem:[%s118 + $0xb8] sm:$0xff]
    %v1128 = vld [vmem:[%s118 + $0xc0] sm:$0xff]
    %v1129 = vld [vmem:[%s118 + $0xc8] sm:$0xff]
    %v1130 = vld [vmem:[%s118 + $0xd0] sm:$0xff]
    %v1131 = vld [vmem:[%s118 + $0xd8] sm:$0xff]
    %v1132 = vld [vmem:[%s118 + $0xe0] sm:$0xff]
    %v1133 = vld [vmem:[%s118 + $0xe8] sm:$0xff]
    %v1134 = vld [vmem:[%s118 + $0xf0] sm:$0xff]
    %v1135 = vld [vmem:[%s118 + $0xf8] sm:$0xff]
    %1136 = vmatpush.msra.mxu0 %v1134
    %1137 = vmatpush.msra.mxu0 %v1132
    %1138 = vmatpush.msra.mxu0 %v1130
    %1139 = vmatpush.msra.mxu0 %v1128
    %1140 = vmatpush.msra.mxu0 %v1126
    %1141 = vmatpush.msra.mxu0 %v1124
    %1142 = vmatpush.msra.mxu0 %v1122
    %1143 = vmatpush.msra.mxu0 %v1120
    %1144 = vmatpush.msra.mxu0 %v1118
    %1145 = vmatpush.msra.mxu0 %v1116
    %1146 = vmatpush.msra.mxu0 %v1114
    %1147 = vmatpush.msra.mxu0 %v1112
    %1148 = vmatpush.msra.mxu0 %v1110
    %1149 = vmatpush.msra.mxu0 %v1108
    %1150 = vmatpush.msra.mxu0 %v1106
    %1151 = vmatpush.msra.mxu0 %v1104
    %1152 = vmatmul.f32.gmra.mxu0 %v1100
    %v1153 = vpop.f32.mrf.mxu0
    %v1154 = vadd.f32 0.0, %v1153
    %1155 = vmatmul.f32.gmra.mxu0 %v1101
    %v1156 = vpop.f32.mrf.mxu0
    %v1157 = vadd.f32 0.0, %v1156
    %1158 = vmatmul.f32.gmra.mxu0 %v1102
    %v1159 = vpop.f32.mrf.mxu0
    %v1160 = vadd.f32 0.0, %v1159
    %1161 = vmatmul.f32.gmra.mxu0 %v1103
    %v1162 = vpop.f32.mrf.mxu0
    %v1163 = vadd.f32 0.0, %v1162
    %1164 = vdwg.mxu0
    %1165 = vmatpush.msra.mxu0 %v1135
    %1166 = vmatpush.msra.mxu0 %v1133
    %1167 = vmatpush.msra.mxu0 %v1131
    %1168 = vmatpush.msra.mxu0 %v1129
    %1169 = vmatpush.msra.mxu0 %v1127
    %1170 = vmatpush.msra.mxu0 %v1125
    %1171 = vmatpush.msra.mxu0 %v1123
    %1172 = vmatpush.msra.mxu0 %v1121
    %1173 = vmatpush.msra.mxu0 %v1119
    %1174 = vmatpush.msra.mxu0 %v1117
    %1175 = vmatpush.msra.mxu0 %v1115
    %1176 = vmatpush.msra.mxu0 %v1113
    %1177 = vmatpush.msra.mxu0 %v1111
    %1178 = vmatpush.msra.mxu0 %v1109
    %1179 = vmatpush.msra.mxu0 %v1107
    %1180 = vmatpush.msra.mxu0 %v1105
    %1181 = vmatmul.f32.gmra.mxu0 %v1100
    %v1182 = vpop.f32.mrf.mxu0
    %v1183 = vadd.f32 0.0, %v1182
    %1184 = vmatmul.f32.gmra.mxu0 %v1101
    %v1185 = vpop.f32.mrf.mxu0
    %v1186 = vadd.f32 0.0, %v1185
    %1187 = vmatmul.f32.gmra.mxu0 %v1102
    %v1188 = vpop.f32.mrf.mxu0
    %v1189 = vadd.f32 0.0, %v1188
    %1190 = vmatmul.f32.gmra.mxu0 %v1103
    %v1191 = vpop.f32.mrf.mxu0
    %v1192 = vadd.f32 0.0, %v1191
    %1193 = vdwg.mxu0
    %1194 = vmatpush.msra.mxu0 %v1098
    %1195 = vmatpush.msra.mxu0 %v1096
    %1196 = vmatpush.msra.mxu0 %v1094
    %1197 = vmatpush.msra.mxu0 %v1092
    %1198 = vmatpush.msra.mxu0 %v1090
    %1199 = vmatpush.msra.mxu0 %v1088
    %1200 = vmatpush.msra.mxu0 %v1086
    %1201 = vmatpush.msra.mxu0 %v1084
    %1202 = vmatpush.msra.mxu0 %v1082
    %1203 = vmatpush.msra.mxu0 %v1080
    %1204 = vmatpush.msra.mxu0 %v1078
    %1205 = vmatpush.msra.mxu0 %v1076
    %1206 = vmatpush.msra.mxu0 %v1074
    %1207 = vmatpush.msra.mxu0 %v1072
    %1208 = vmatpush.msra.mxu0 %v1070
    %1209 = vmatpush.msra.mxu0 %v1068
    %1210 = vmatmul.f32.gmra.mxu0 %v1064
    %v1211 = vpop.f32.mrf.mxu0
    %v1212 = vadd.f32 %v1154, %v1211
    %1213 = vmatmul.f32.gmra.mxu0 %v1065
    %v1214 = vpop.f32.mrf.mxu0
    %v1215 = vadd.f32 %v1157, %v1214
    %1216 = vmatmul.f32.gmra.mxu0 %v1066
    %v1217 = vpop.f32.mrf.mxu0
    %v1218 = vadd.f32 %v1160, %v1217
    %1219 = vmatmul.f32.gmra.mxu0 %v1067
    %v1220 = vpop.f32.mrf.mxu0
    %v1221 = vadd.f32 %v1163, %v1220
    %1222 = vdwg.mxu0
    %1223 = vmatpush.msra.mxu0 %v1099
    %1224 = vmatpush.msra.mxu0 %v1097
    %1225 = vmatpush.msra.mxu0 %v1095
    %1226 = vmatpush.msra.mxu0 %v1093
    %1227 = vmatpush.msra.mxu0 %v1091
    %1228 = vmatpush.msra.mxu0 %v1089
    %1229 = vmatpush.msra.mxu0 %v1087
    %1230 = vmatpush.msra.mxu0 %v1085
    %1231 = vmatpush.msra.mxu0 %v1083
    %1232 = vmatpush.msra.mxu0 %v1081
    %1233 = vmatpush.msra.mxu0 %v1079
    %1234 = vmatpush.msra.mxu0 %v1077
    %1235 = vmatpush.msra.mxu0 %v1075
    %1236 = vmatpush.msra.mxu0 %v1073
    %1237 = vmatpush.msra.mxu0 %v1071
    %1238 = vmatpush.msra.mxu0 %v1069
    %1239 = vmatmul.f32.gmra.mxu0 %v1064
    %v1240 = vpop.f32.mrf.mxu0
    %v1241 = vadd.f32 %v1183, %v1240
    %1242 = vmatmul.f32.gmra.mxu0 %v1065
    %v1243 = vpop.f32.mrf.mxu0
    %v1244 = vadd.f32 %v1186, %v1243
    %1245 = vmatmul.f32.gmra.mxu0 %v1066
    %v1246 = vpop.f32.mrf.mxu0
    %v1247 = vadd.f32 %v1189, %v1246
    %1248 = vmatmul.f32.gmra.mxu0 %v1067
    %v1249 = vpop.f32.mrf.mxu0
    %v1250 = vadd.f32 %v1192, %v1249
    %1251 = vdwg.mxu0
    %v1252 = vld [vmem:[%s1063 + $0x2] sm:$0xff]
    %v1253 = vld [vmem:[%s1063 + $0xa] sm:$0xff]
    %v1254 = vld [vmem:[%s1063 + $0x12] sm:$0xff]
    %v1255 = vld [vmem:[%s1063 + $0x1a] sm:$0xf]
    %v1256 = vld [vmem:[%s271] sm:$0xff]
    %v1257 = vld [vmem:[%s271 + $0x8] sm:$0xff]
    %v1258 = vld [vmem:[%s271 + $0x10] sm:$0xff]
    %v1259 = vld [vmem:[%s271 + $0x18] sm:$0xff]
    %v1260 = vld [vmem:[%s271 + $0x20] sm:$0xff]
    %v1261 = vld [vmem:[%s271 + $0x28] sm:$0xff]
    %v1262 = vld [vmem:[%s271 + $0x30] sm:$0xff]
    %v1263 = vld [vmem:[%s271 + $0x38] sm:$0xff]
    %v1264 = vld [vmem:[%s271 + $0x40] sm:$0xff]
    %v1265 = vld [vmem:[%s271 + $0x48] sm:$0xff]
    %v1266 = vld [vmem:[%s271 + $0x50] sm:$0xff]
    %v1267 = vld [vmem:[%s271 + $0x58] sm:$0xff]
    %v1268 = vld [vmem:[%s271 + $0x60] sm:$0xff]
    %v1269 = vld [vmem:[%s271 + $0x68] sm:$0xff]
    %v1270 = vld [vmem:[%s271 + $0x70] sm:$0xff]
    %v1271 = vld [vmem:[%s271 + $0x78] sm:$0xff]
    %v1272 = vld [vmem:[%s271 + $0x80] sm:$0xff]
    %v1273 = vld [vmem:[%s271 + $0x88] sm:$0xff]
    %v1274 = vld [vmem:[%s271 + $0x90] sm:$0xff]
    %v1275 = vld [vmem:[%s271 + $0x98] sm:$0xff]
    %v1276 = vld [vmem:[%s271 + $0xa0] sm:$0xff]
    %v1277 = vld [vmem:[%s271 + $0xa8] sm:$0xff]
    %v1278 = vld [vmem:[%s271 + $0xb0] sm:$0xff]
    %v1279 = vld [vmem:[%s271 + $0xb8] sm:$0xff]
    %v1280 = vld [vmem:[%s271 + $0xc0] sm:$0xff]
    %v1281 = vld [vmem:[%s271 + $0xc8] sm:$0xff]
    %v1282 = vld [vmem:[%s271 + $0xd0] sm:$0xff]
    %v1283 = vld [vmem:[%s271 + $0xd8] sm:$0xff]
    %v1284 = vld [vmem:[%s271 + $0xe0] sm:$0xff]
    %v1285 = vld [vmem:[%s271 + $0xe8] sm:$0xff]
    %v1286 = vld [vmem:[%s271 + $0xf0] sm:$0xff]
    %v1287 = vld [vmem:[%s271 + $0xf8] sm:$0xff]
    %1288 = vmatpush.msra.mxu0 %v1286
    %1289 = vmatpush.msra.mxu0 %v1284
    %1290 = vmatpush.msra.mxu0 %v1282
    %1291 = vmatpush.msra.mxu0 %v1280
    %1292 = vmatpush.msra.mxu0 %v1278
    %1293 = vmatpush.msra.mxu0 %v1276
    %1294 = vmatpush.msra.mxu0 %v1274
    %1295 = vmatpush.msra.mxu0 %v1272
    %1296 = vmatpush.msra.mxu0 %v1270
    %1297 = vmatpush.msra.mxu0 %v1268
    %1298 = vmatpush.msra.mxu0 %v1266
    %1299 = vmatpush.msra.mxu0 %v1264
    %1300 = vmatpush.msra.mxu0 %v1262
    %1301 = vmatpush.msra.mxu0 %v1260
    %1302 = vmatpush.msra.mxu0 %v1258
    %1303 = vmatpush.msra.mxu0 %v1256
    %1304 = vmatmul.f32.gmra.mxu0 %v1252
    %v1305 = vpop.f32.mrf.mxu0
    %v1306 = vadd.f32 0.0, %v1305
    %1307 = vmatmul.f32.gmra.mxu0 %v1253
    %v1308 = vpop.f32.mrf.mxu0
    %v1309 = vadd.f32 0.0, %v1308
    %1310 = vmatmul.f32.gmra.mxu0 %v1254
    %v1311 = vpop.f32.mrf.mxu0
    %v1312 = vadd.f32 0.0, %v1311
    %1313 = vmatmul.f32.gmra.mxu0 %v1255
    %v1314 = vpop.f32.mrf.mxu0
    %v1315 = vadd.f32 0.0, %v1314
    %1316 = vdwg.mxu0
    %1317 = vmatpush.msra.mxu0 %v1287
    %1318 = vmatpush.msra.mxu0 %v1285
    %1319 = vmatpush.msra.mxu0 %v1283
    %1320 = vmatpush.msra.mxu0 %v1281
    %1321 = vmatpush.msra.mxu0 %v1279
    %1322 = vmatpush.msra.mxu0 %v1277
    %1323 = vmatpush.msra.mxu0 %v1275
    %1324 = vmatpush.msra.mxu0 %v1273
    %1325 = vmatpush.msra.mxu0 %v1271
    %1326 = vmatpush.msra.mxu0 %v1269
    %1327 = vmatpush.msra.mxu0 %v1267
    %1328 = vmatpush.msra.mxu0 %v1265
    %1329 = vmatpush.msra.mxu0 %v1263
    %1330 = vmatpush.msra.mxu0 %v1261
    %1331 = vmatpush.msra.mxu0 %v1259
    %1332 = vmatpush.msra.mxu0 %v1257
    %1333 = vmatmul.f32.gmra.mxu0 %v1252
    %v1334 = vpop.f32.mrf.mxu0
    %v1335 = vadd.f32 0.0, %v1334
    %1336 = vmatmul.f32.gmra.mxu0 %v1253
    %v1337 = vpop.f32.mrf.mxu0
    %v1338 = vadd.f32 0.0, %v1337
    %1339 = vmatmul.f32.gmra.mxu0 %v1254
    %v1340 = vpop.f32.mrf.mxu0
    %v1341 = vadd.f32 0.0, %v1340
    %1342 = vmatmul.f32.gmra.mxu0 %v1255
    %v1343 = vpop.f32.mrf.mxu0
    %v1344 = vadd.f32 0.0, %v1343
    %1345 = vdwg.mxu0
    %v1346 = vadd.f32 %v1212, %v1306
    %v1347 = vadd.f32 %v1241, %v1335
    %v1348 = vadd.f32 %v1215, %v1309
    %v1349 = vadd.f32 %v1244, %v1338
    %v1350 = vadd.f32 %v1218, %v1312
    %v1351 = vadd.f32 %v1247, %v1341
    %v1352 = vadd.f32 %v1221, %v1315
    %v1353 = vadd.f32 %v1250, %v1344
    %v1354 = vld [vmem:[%s1063 + $0x3] sm:$0xff]
    %v1355 = vld [vmem:[%s1063 + $0xb] sm:$0xff]
    %v1356 = vld [vmem:[%s1063 + $0x13] sm:$0xff]
    %v1357 = vld [vmem:[%s1063 + $0x1b] sm:$0xf]
    %v1358 = vld [vmem:[%s374] sm:$0xff]
    %v1359 = vld [vmem:[%s374 + $0x8] sm:$0xff]
    %v1360 = vld [vmem:[%s374 + $0x10] sm:$0xff]
    %v1361 = vld [vmem:[%s374 + $0x18] sm:$0xff]
    %v1362 = vld [vmem:[%s374 + $0x20] sm:$0xff]
    %v1363 = vld [vmem:[%s374 + $0x28] sm:$0xff]
    %v1364 = vld [vmem:[%s374 + $0x30] sm:$0xff]
    %v1365 = vld [vmem:[%s374 + $0x38] sm:$0xff]
    %v1366 = vld [vmem:[%s374 + $0x40] sm:$0xff]
    %v1367 = vld [vmem:[%s374 + $0x48] sm:$0xff]
    %v1368 = vld [vmem:[%s374 + $0x50] sm:$0xff]
    %v1369 = vld [vmem:[%s374 + $0x58] sm:$0xff]
    %v1370 = vld [vmem:[%s374 + $0x60] sm:$0xff]
    %v1371 = vld [vmem:[%s374 + $0x68] sm:$0xff]
    %v1372 = vld [vmem:[%s374 + $0x70] sm:$0xff]
    %v1373 = vld [vmem:[%s374 + $0x78] sm:$0xff]
    %v1374 = vld [vmem:[%s374 + $0x80] sm:$0xff]
    %v1375 = vld [vmem:[%s374 + $0x88] sm:$0xff]
    %v1376 = vld [vmem:[%s374 + $0x90] sm:$0xff]
    %v1377 = vld [vmem:[%s374 + $0x98] sm:$0xff]
    %v1378 = vld [vmem:[%s374 + $0xa0] sm:$0xff]
    %v1379 = vld [vmem:[%s374 + $0xa8] sm:$0xff]
    %v1380 = vld [vmem:[%s374 + $0xb0] sm:$0xff]
    %v1381 = vld [vmem:[%s374 + $0xb8] sm:$0xff]
    %v1382 = vld [vmem:[%s374 + $0xc0] sm:$0xff]
    %v1383 = vld [vmem:[%s374 + $0xc8] sm:$0xff]
    %v1384 = vld [vmem:[%s374 + $0xd0] sm:$0xff]
    %v1385 = vld [vmem:[%s374 + $0xd8] sm:$0xff]
    %v1386 = vld [vmem:[%s374 + $0xe0] sm:$0xff]
    %v1387 = vld [vmem:[%s374 + $0xe8] sm:$0xff]
    %v1388 = vld [vmem:[%s374 + $0xf0] sm:$0xff]
    %v1389 = vld [vmem:[%s374 + $0xf8] sm:$0xff]
    %1390 = vmatpush.msra.mxu0 %v1388
    %1391 = vmatpush.msra.mxu0 %v1386
    %1392 = vmatpush.msra.mxu0 %v1384
    %1393 = vmatpush.msra.mxu0 %v1382
    %1394 = vmatpush.msra.mxu0 %v1380
    %1395 = vmatpush.msra.mxu0 %v1378
    %1396 = vmatpush.msra.mxu0 %v1376
    %1397 = vmatpush.msra.mxu0 %v1374
    %1398 = vmatpush.msra.mxu0 %v1372
    %1399 = vmatpush.msra.mxu0 %v1370
    %1400 = vmatpush.msra.mxu0 %v1368
    %1401 = vmatpush.msra.mxu0 %v1366
    %1402 = vmatpush.msra.mxu0 %v1364
    %1403 = vmatpush.msra.mxu0 %v1362
    %1404 = vmatpush.msra.mxu0 %v1360
    %1405 = vmatpush.msra.mxu0 %v1358
    %1406 = vmatmul.f32.gmra.mxu0 %v1354
    %v1407 = vpop.f32.mrf.mxu0
    %v1408 = vadd.f32 0.0, %v1407
    %1409 = vmatmul.f32.gmra.mxu0 %v1355
    %v1410 = vpop.f32.mrf.mxu0
    %v1411 = vadd.f32 0.0, %v1410
    %1412 = vmatmul.f32.gmra.mxu0 %v1356
    %v1413 = vpop.f32.mrf.mxu0
    %v1414 = vadd.f32 0.0, %v1413
    %1415 = vmatmul.f32.gmra.mxu0 %v1357
    %v1416 = vpop.f32.mrf.mxu0
    %v1417 = vadd.f32 0.0, %v1416
    %1418 = vdwg.mxu0
    %1419 = vmatpush.msra.mxu0 %v1389
    %1420 = vmatpush.msra.mxu0 %v1387
    %1421 = vmatpush.msra.mxu0 %v1385
    %1422 = vmatpush.msra.mxu0 %v1383
    %1423 = vmatpush.msra.mxu0 %v1381
    %1424 = vmatpush.msra.mxu0 %v1379
    %1425 = vmatpush.msra.mxu0 %v1377
    %1426 = vmatpush.msra.mxu0 %v1375
    %1427 = vmatpush.msra.mxu0 %v1373
    %1428 = vmatpush.msra.mxu0 %v1371
    %1429 = vmatpush.msra.mxu0 %v1369
    %1430 = vmatpush.msra.mxu0 %v1367
    %1431 = vmatpush.msra.mxu0 %v1365
    %1432 = vmatpush.msra.mxu0 %v1363
    %1433 = vmatpush.msra.mxu0 %v1361
    %1434 = vmatpush.msra.mxu0 %v1359
    %1435 = vmatmul.f32.gmra.mxu0 %v1354
    %v1436 = vpop.f32.mrf.mxu0
    %v1437 = vadd.f32 0.0, %v1436
    %1438 = vmatmul.f32.gmra.mxu0 %v1355
    %v1439 = vpop.f32.mrf.mxu0
    %v1440 = vadd.f32 0.0, %v1439
    %1441 = vmatmul.f32.gmra.mxu0 %v1356
    %v1442 = vpop.f32.mrf.mxu0
    %v1443 = vadd.f32 0.0, %v1442
    %1444 = vmatmul.f32.gmra.mxu0 %v1357
    %v1445 = vpop.f32.mrf.mxu0
    %v1446 = vadd.f32 0.0, %v1445
    %1447 = vdwg.mxu0
    %v1448 = vadd.f32 %v1346, %v1408
    %v1449 = vadd.f32 %v1347, %v1437
    %v1450 = vadd.f32 %v1348, %v1411
    %v1451 = vadd.f32 %v1349, %v1440
    %v1452 = vadd.f32 %v1350, %v1414
    %v1453 = vadd.f32 %v1351, %v1443
    %v1454 = vadd.f32 %v1352, %v1417
    %v1455 = vadd.f32 %v1353, %v1446
    %v1456 = vld [vmem:[%s1063 + $0x4] sm:$0xff]
    %v1457 = vld [vmem:[%s1063 + $0xc] sm:$0xff]
    %v1458 = vld [vmem:[%s1063 + $0x14] sm:$0xff]
    %v1459 = vld [vmem:[%s1063 + $0x1c] sm:$0xf]
    %v1460 = vld [vmem:[%s477] sm:$0xff]
    %v1461 = vld [vmem:[%s477 + $0x8] sm:$0xff]
    %v1462 = vld [vmem:[%s477 + $0x10] sm:$0xff]
    %v1463 = vld [vmem:[%s477 + $0x18] sm:$0xff]
    %v1464 = vld [vmem:[%s477 + $0x20] sm:$0xff]
    %v1465 = vld [vmem:[%s477 + $0x28] sm:$0xff]
    %v1466 = vld [vmem:[%s477 + $0x30] sm:$0xff]
    %v1467 = vld [vmem:[%s477 + $0x38] sm:$0xff]
    %v1468 = vld [vmem:[%s477 + $0x40] sm:$0xff]
    %v1469 = vld [vmem:[%s477 + $0x48] sm:$0xff]
    %v1470 = vld [vmem:[%s477 + $0x50] sm:$0xff]
    %v1471 = vld [vmem:[%s477 + $0x58] sm:$0xff]
    %v1472 = vld [vmem:[%s477 + $0x60] sm:$0xff]
    %v1473 = vld [vmem:[%s477 + $0x68] sm:$0xff]
    %v1474 = vld [vmem:[%s477 + $0x70] sm:$0xff]
    %v1475 = vld [vmem:[%s477 + $0x78] sm:$0xff]
    %v1476 = vld [vmem:[%s477 + $0x80] sm:$0xff]
    %v1477 = vld [vmem:[%s477 + $0x88] sm:$0xff]
    %v1478 = vld [vmem:[%s477 + $0x90] sm:$0xff]
    %v1479 = vld [vmem:[%s477 + $0x98] sm:$0xff]
    %v1480 = vld [vmem:[%s477 + $0xa0] sm:$0xff]
    %v1481 = vld [vmem:[%s477 + $0xa8] sm:$0xff]
    %v1482 = vld [vmem:[%s477 + $0xb0] sm:$0xff]
    %v1483 = vld [vmem:[%s477 + $0xb8] sm:$0xff]
    %v1484 = vld [vmem:[%s477 + $0xc0] sm:$0xff]
    %v1485 = vld [vmem:[%s477 + $0xc8] sm:$0xff]
    %v1486 = vld [vmem:[%s477 + $0xd0] sm:$0xff]
    %v1487 = vld [vmem:[%s477 + $0xd8] sm:$0xff]
    %v1488 = vld [vmem:[%s477 + $0xe0] sm:$0xff]
    %v1489 = vld [vmem:[%s477 + $0xe8] sm:$0xff]
    %v1490 = vld [vmem:[%s477 + $0xf0] sm:$0xff]
    %v1491 = vld [vmem:[%s477 + $0xf8] sm:$0xff]
    %1492 = vmatpush.msra.mxu0 %v1490
    %1493 = vmatpush.msra.mxu0 %v1488
    %1494 = vmatpush.msra.mxu0 %v1486
    %1495 = vmatpush.msra.mxu0 %v1484
    %1496 = vmatpush.msra.mxu0 %v1482
    %1497 = vmatpush.msra.mxu0 %v1480
    %1498 = vmatpush.msra.mxu0 %v1478
    %1499 = vmatpush.msra.mxu0 %v1476
    %1500 = vmatpush.msra.mxu0 %v1474
    %1501 = vmatpush.msra.mxu0 %v1472
    %1502 = vmatpush.msra.mxu0 %v1470
    %1503 = vmatpush.msra.mxu0 %v1468
    %1504 = vmatpush.msra.mxu0 %v1466
    %1505 = vmatpush.msra.mxu0 %v1464
    %1506 = vmatpush.msra.mxu0 %v1462
    %1507 = vmatpush.msra.mxu0 %v1460
    %1508 = vmatmul.f32.gmra.mxu0 %v1456
    %v1509 = vpop.f32.mrf.mxu0
    %v1510 = vadd.f32 0.0, %v1509
    %1511 = vmatmul.f32.gmra.mxu0 %v1457
    %v1512 = vpop.f32.mrf.mxu0
    %v1513 = vadd.f32 0.0, %v1512
    %1514 = vmatmul.f32.gmra.mxu0 %v1458
    %v1515 = vpop.f32.mrf.mxu0
    %v1516 = vadd.f32 0.0, %v1515
    %1517 = vmatmul.f32.gmra.mxu0 %v1459
    %v1518 = vpop.f32.mrf.mxu0
    %v1519 = vadd.f32 0.0, %v1518
    %1520 = vdwg.mxu0
    %1521 = vmatpush.msra.mxu0 %v1491
    %1522 = vmatpush.msra.mxu0 %v1489
    %1523 = vmatpush.msra.mxu0 %v1487
    %1524 = vmatpush.msra.mxu0 %v1485
    %1525 = vmatpush.msra.mxu0 %v1483
    %1526 = vmatpush.msra.mxu0 %v1481
    %1527 = vmatpush.msra.mxu0 %v1479
    %1528 = vmatpush.msra.mxu0 %v1477
    %1529 = vmatpush.msra.mxu0 %v1475
    %1530 = vmatpush.msra.mxu0 %v1473
    %1531 = vmatpush.msra.mxu0 %v1471
    %1532 = vmatpush.msra.mxu0 %v1469
    %1533 = vmatpush.msra.mxu0 %v1467
    %1534 = vmatpush.msra.mxu0 %v1465
    %1535 = vmatpush.msra.mxu0 %v1463
    %1536 = vmatpush.msra.mxu0 %v1461
    %1537 = vmatmul.f32.gmra.mxu0 %v1456
    %v1538 = vpop.f32.mrf.mxu0
    %v1539 = vadd.f32 0.0, %v1538
    %1540 = vmatmul.f32.gmra.mxu0 %v1457
    %v1541 = vpop.f32.mrf.mxu0
    %v1542 = vadd.f32 0.0, %v1541
    %1543 = vmatmul.f32.gmra.mxu0 %v1458
    %v1544 = vpop.f32.mrf.mxu0
    %v1545 = vadd.f32 0.0, %v1544
    %1546 = vmatmul.f32.gmra.mxu0 %v1459
    %v1547 = vpop.f32.mrf.mxu0
    %v1548 = vadd.f32 0.0, %v1547
    %1549 = vdwg.mxu0
    %v1550 = vadd.f32 %v1448, %v1510
    %v1551 = vadd.f32 %v1449, %v1539
    %v1552 = vadd.f32 %v1450, %v1513
    %v1553 = vadd.f32 %v1451, %v1542
    %v1554 = vadd.f32 %v1452, %v1516
    %v1555 = vadd.f32 %v1453, %v1545
    %v1556 = vadd.f32 %v1454, %v1519
    %v1557 = vadd.f32 %v1455, %v1548
    %v1558 = vadd.f32 %v1550, %v577
    %v1559 = vadd.f32 %v1551, %v578
    %v1560 = vadd.f32 %v1552, %v577
    %v1561 = vadd.f32 %v1553, %v578
    %v1562 = vadd.f32 %v1554, %v577
    %v1563 = vadd.f32 %v1555, %v578
    %v1564 = vadd.f32 %v1556, %v577
    %v1565 = vadd.f32 %v1557, %v578
    %v1566 = vmax.f32 %v1558, 0.0
    %v1567 = vmax.f32 %v1559, 0.0
    %v1568 = vmax.f32 %v1560, 0.0
    %v1569 = vmax.f32 %v1561, 0.0
    %v1570 = vmax.f32 %v1562, 0.0
    %v1571 = vmax.f32 %v1563, 0.0
    %v1572 = vmax.f32 %v1564, 0.0
    %v1573 = vmax.f32 %v1565, 0.0
    %v1574 = vmax.f32 %v1566, %v1567
    %v1575 = vmax.f32 %v1568, %v1569
    %v1576 = vmax.f32 %v1570, %v1571
    %v1577 = vmax.f32 %v1572, %v1573
    %1578 = vst [vmem:[#allocation2 + $0x20] sm:$0xff] %v1574
    %1579 = vst [vmem:[#allocation2 + $0x28] sm:$0xff] %v1575
    %1580 = vst [vmem:[#allocation2 + $0x30] sm:$0xff] %v1576
    %1581 = vst [vmem:[#allocation2 + $0x38] sm:$0xf] %v1577
    %s1582 = scalar_lea.vmem [#allocation2], 32
    %v1583 = vld [vmem:[%s1582] ss:$2 sm:$0xff]
    %s1584 = scalar_lea.vmem [#allocation2], 48
    %v1585 = vld [vmem:[%s1584] ss:$2 sm:$0x3f]
    %s1586 = scalar_lea.vmem [#allocation2], 33
    %v1587 = vld [vmem:[%s1586] ss:$2 sm:$0xff]
    %s1588 = scalar_lea.vmem [#allocation2], 49
    %v1589 = vld [vmem:[%s1588] ss:$2 sm:$0x3f]
    %v1590 = vmax.f32 %v1583, %v1587
    %v1591 = vmax.f32 %v1585, %v1589
    %v1592 = vld [vmem:[#allocation7] sm:$0xff]
    %v1593 = vld [vmem:[#allocation7 + $0x8] sm:$0xff]
    %v1594 = vld [vmem:[#allocation7 + $0x10] sm:$0xff]
    %v1595 = vld [vmem:[#allocation7 + $0x18] sm:$0xff]
    %v1596 = vld [vmem:[#allocation7 + $0x20] sm:$0xff]
    %v1597 = vld [vmem:[#allocation7 + $0x28] sm:$0xff]
    %v1598 = vld [vmem:[#allocation7 + $0x30] sm:$0xff]
    %v1599 = vld [vmem:[#allocation7 + $0x38] sm:$0xff]
    %v1600 = vld [vmem:[#allocation7 + $0x40] sm:$0xff]
    %v1601 = vld [vmem:[#allocation7 + $0x48] sm:$0xff]
    %v1602 = vld [vmem:[#allocation7 + $0x50] sm:$0xff]
    %v1603 = vld [vmem:[#allocation7 + $0x58] sm:$0xff]
    %v1604 = vld [vmem:[#allocation7 + $0x60] sm:$0xff]
    %v1605 = vld [vmem:[#allocation7 + $0x68] sm:$0xff]
    %v1606 = vld [vmem:[#allocation7 + $0x70] sm:$0xff]
    %v1607 = vld [vmem:[#allocation7 + $0x78] sm:$0xff]
    %v1608 = vld [vmem:[#allocation7 + $0x80] sm:$0xff]
    %v1609 = vld [vmem:[#allocation7 + $0x88] sm:$0xff]
    %v1610 = vld [vmem:[#allocation7 + $0x90] sm:$0xff]
    %v1611 = vld [vmem:[#allocation7 + $0x98] sm:$0xff]
    %v1612 = vld [vmem:[#allocation7 + $0xa0] sm:$0xff]
    %v1613 = vld [vmem:[#allocation7 + $0xa8] sm:$0xff]
    %v1614 = vld [vmem:[#allocation7 + $0xb0] sm:$0xff]
    %v1615 = vld [vmem:[#allocation7 + $0xb8] sm:$0xff]
    %v1616 = vld [vmem:[#allocation7 + $0xc0] sm:$0xff]
    %v1617 = vld [vmem:[#allocation7 + $0xc8] sm:$0xff]
    %v1618 = vld [vmem:[#allocation7 + $0xd0] sm:$0xff]
    %v1619 = vld [vmem:[#allocation7 + $0xd8] sm:$0xff]
    %v1620 = vld [vmem:[#allocation7 + $0xe0] sm:$0xff]
    %v1621 = vld [vmem:[#allocation7 + $0xe8] sm:$0xff]
    %v1622 = vld [vmem:[#allocation7 + $0xf0] sm:$0xff]
    %v1623 = vld [vmem:[#allocation7 + $0xf8] sm:$0xff]
    %v1624 = vld [vmem:[%s646] sm:$0xff]
    %v1625 = vld [vmem:[%s646 + $0x8] sm:$0xff]
    %v1626 = vld [vmem:[%s646 + $0x10] sm:$0xff]
    %v1627 = vld [vmem:[%s646 + $0x18] sm:$0xff]
    %v1628 = vld [vmem:[%s646 + $0x20] sm:$0xff]
    %v1629 = vld [vmem:[%s646 + $0x28] sm:$0xff]
    %v1630 = vld [vmem:[%s646 + $0x30] sm:$0xff]
    %v1631 = vld [vmem:[%s646 + $0x38] sm:$0xff]
    %v1632 = vld [vmem:[%s646 + $0x40] sm:$0xff]
    %v1633 = vld [vmem:[%s646 + $0x48] sm:$0xff]
    %v1634 = vld [vmem:[%s646 + $0x50] sm:$0xff]
    %v1635 = vld [vmem:[%s646 + $0x58] sm:$0xff]
    %v1636 = vld [vmem:[%s646 + $0x60] sm:$0xff]
    %v1637 = vld [vmem:[%s646 + $0x68] sm:$0xff]
    %v1638 = vld [vmem:[%s646 + $0x70] sm:$0xff]
    %v1639 = vld [vmem:[%s646 + $0x78] sm:$0xff]
    %v1640 = vld [vmem:[%s646 + $0x80] sm:$0xff]
    %v1641 = vld [vmem:[%s646 + $0x88] sm:$0xff]
    %v1642 = vld [vmem:[%s646 + $0x90] sm:$0xff]
    %v1643 = vld [vmem:[%s646 + $0x98] sm:$0xff]
    %v1644 = vld [vmem:[%s646 + $0xa0] sm:$0xff]
    %v1645 = vld [vmem:[%s646 + $0xa8] sm:$0xff]
    %v1646 = vld [vmem:[%s646 + $0xb0] sm:$0xff]
    %v1647 = vld [vmem:[%s646 + $0xb8] sm:$0xff]
    %v1648 = vld [vmem:[%s646 + $0xc0] sm:$0xff]
    %v1649 = vld [vmem:[%s646 + $0xc8] sm:$0xff]
    %v1650 = vld [vmem:[%s646 + $0xd0] sm:$0xff]
    %v1651 = vld [vmem:[%s646 + $0xd8] sm:$0xff]
    %v1652 = vld [vmem:[%s646 + $0xe0] sm:$0xff]
    %v1653 = vld [vmem:[%s646 + $0xe8] sm:$0xff]
    %v1654 = vld [vmem:[%s646 + $0xf0] sm:$0xff]
    %v1655 = vld [vmem:[%s646 + $0xf8] sm:$0xff]
    %v1658 = vrot.slane %v1590, 1
    %v1659 = vrot.slane %v1591, 1
    %v1660 = vsel %vm681, %v1658, %v1659
    %1663 = vmatpush.msra.mxu0 %v1654
    %1664 = vmatpush.msra.mxu0 %v1652
    %1665 = vmatpush.msra.mxu0 %v1650
    %1666 = vmatpush.msra.mxu0 %v1648
    %1667 = vmatpush.msra.mxu0 %v1646
    %1668 = vmatpush.msra.mxu0 %v1644
    %1669 = vmatpush.msra.mxu0 %v1642
    %1670 = vmatpush.msra.mxu0 %v1640
    %1671 = vmatpush.msra.mxu0 %v1638
    %1672 = vmatpush.msra.mxu0 %v1636
    %1673 = vmatpush.msra.mxu0 %v1634
    %1674 = vmatpush.msra.mxu0 %v1632
    %1675 = vmatpush.msra.mxu0 %v1630
    %1676 = vmatpush.msra.mxu0 %v1628
    %1677 = vmatpush.msra.mxu0 %v1626
    %1678 = vmatpush.msra.mxu0 %v1624
    %1679 = vmatmul.f32.gmra.mxu0 %v1660
    %v1680 = vpop.f32.mrf.mxu0
    %v1681 = vadd.f32 0.0, %v1680
    %1682 = vmatmul.f32.gmra.mxu0 %v1659
    %v1683 = vpop.f32.mrf.mxu0
    %v1684 = vadd.f32 0.0, %v1683
    %1685 = vdwg.mxu0
    %1686 = vmatpush.msra.mxu0 %v1655
    %1687 = vmatpush.msra.mxu0 %v1653
    %1688 = vmatpush.msra.mxu0 %v1651
    %1689 = vmatpush.msra.mxu0 %v1649
    %1690 = vmatpush.msra.mxu0 %v1647
    %1691 = vmatpush.msra.mxu0 %v1645
    %1692 = vmatpush.msra.mxu0 %v1643
    %1693 = vmatpush.msra.mxu0 %v1641
    %1694 = vmatpush.msra.mxu0 %v1639
    %1695 = vmatpush.msra.mxu0 %v1637
    %1696 = vmatpush.msra.mxu0 %v1635
    %1697 = vmatpush.msra.mxu0 %v1633
    %1698 = vmatpush.msra.mxu0 %v1631
    %1699 = vmatpush.msra.mxu0 %v1629
    %1700 = vmatpush.msra.mxu0 %v1627
    %1701 = vmatpush.msra.mxu0 %v1625
    %1702 = vmatmul.f32.gmra.mxu0 %v1660
    %v1703 = vpop.f32.mrf.mxu0
    %v1704 = vadd.f32 0.0, %v1703
    %1705 = vmatmul.f32.gmra.mxu0 %v1659
    %v1706 = vpop.f32.mrf.mxu0
    %v1707 = vadd.f32 0.0, %v1706
    %1708 = vdwg.mxu0
    %1709 = vmatpush.msra.mxu0 %v1622
    %1710 = vmatpush.msra.mxu0 %v1620
    %1711 = vmatpush.msra.mxu0 %v1618
    %1712 = vmatpush.msra.mxu0 %v1616
    %1713 = vmatpush.msra.mxu0 %v1614
    %1714 = vmatpush.msra.mxu0 %v1612
    %1715 = vmatpush.msra.mxu0 %v1610
    %1716 = vmatpush.msra.mxu0 %v1608
    %1717 = vmatpush.msra.mxu0 %v1606
    %1718 = vmatpush.msra.mxu0 %v1604
    %1719 = vmatpush.msra.mxu0 %v1602
    %1720 = vmatpush.msra.mxu0 %v1600
    %1721 = vmatpush.msra.mxu0 %v1598
    %1722 = vmatpush.msra.mxu0 %v1596
    %1723 = vmatpush.msra.mxu0 %v1594
    %1724 = vmatpush.msra.mxu0 %v1592
    %1725 = vmatmul.f32.gmra.mxu0 %v1590
    %v1726 = vpop.f32.mrf.mxu0
    %v1727 = vadd.f32 %v1681, %v1726
    %1728 = vmatmul.f32.gmra.mxu0 %v1591
    %v1729 = vpop.f32.mrf.mxu0
    %v1730 = vadd.f32 %v1684, %v1729
    %1731 = vdwg.mxu0
    %1732 = vmatpush.msra.mxu0 %v1623
    %1733 = vmatpush.msra.mxu0 %v1621
    %1734 = vmatpush.msra.mxu0 %v1619
    %1735 = vmatpush.msra.mxu0 %v1617
    %1736 = vmatpush.msra.mxu0 %v1615
    %1737 = vmatpush.msra.mxu0 %v1613
    %1738 = vmatpush.msra.mxu0 %v1611
    %1739 = vmatpush.msra.mxu0 %v1609
    %1740 = vmatpush.msra.mxu0 %v1607
    %1741 = vmatpush.msra.mxu0 %v1605
    %1742 = vmatpush.msra.mxu0 %v1603
    %1743 = vmatpush.msra.mxu0 %v1601
    %1744 = vmatpush.msra.mxu0 %v1599
    %1745 = vmatpush.msra.mxu0 %v1597
    %1746 = vmatpush.msra.mxu0 %v1595
    %1747 = vmatpush.msra.mxu0 %v1593
    %1748 = vmatmul.f32.gmra.mxu0 %v1590
    %v1749 = vpop.f32.mrf.mxu0
    %v1750 = vadd.f32 %v1704, %v1749
    %1751 = vmatmul.f32.gmra.mxu0 %v1591
    %v1752 = vpop.f32.mrf.mxu0
    %v1753 = vadd.f32 %v1707, %v1752
    %1754 = vdwg.mxu0
    %v1755 = vld [vmem:[%s779] sm:$0xff]
    %v1756 = vld [vmem:[%s779 + $0x8] sm:$0xff]
    %v1757 = vld [vmem:[%s779 + $0x10] sm:$0xff]
    %v1758 = vld [vmem:[%s779 + $0x18] sm:$0xff]
    %v1759 = vld [vmem:[%s779 + $0x20] sm:$0xff]
    %v1760 = vld [vmem:[%s779 + $0x28] sm:$0xff]
    %v1761 = vld [vmem:[%s779 + $0x30] sm:$0xff]
    %v1762 = vld [vmem:[%s779 + $0x38] sm:$0xff]
    %v1763 = vld [vmem:[%s779 + $0x40] sm:$0xff]
    %v1764 = vld [vmem:[%s779 + $0x48] sm:$0xff]
    %v1765 = vld [vmem:[%s779 + $0x50] sm:$0xff]
    %v1766 = vld [vmem:[%s779 + $0x58] sm:$0xff]
    %v1767 = vld [vmem:[%s779 + $0x60] sm:$0xff]
    %v1768 = vld [vmem:[%s779 + $0x68] sm:$0xff]
    %v1769 = vld [vmem:[%s779 + $0x70] sm:$0xff]
    %v1770 = vld [vmem:[%s779 + $0x78] sm:$0xff]
    %v1771 = vld [vmem:[%s779 + $0x80] sm:$0xff]
    %v1772 = vld [vmem:[%s779 + $0x88] sm:$0xff]
    %v1773 = vld [vmem:[%s779 + $0x90] sm:$0xff]
    %v1774 = vld [vmem:[%s779 + $0x98] sm:$0xff]
    %v1775 = vld [vmem:[%s779 + $0xa0] sm:$0xff]
    %v1776 = vld [vmem:[%s779 + $0xa8] sm:$0xff]
    %v1777 = vld [vmem:[%s779 + $0xb0] sm:$0xff]
    %v1778 = vld [vmem:[%s779 + $0xb8] sm:$0xff]
    %v1779 = vld [vmem:[%s779 + $0xc0] sm:$0xff]
    %v1780 = vld [vmem:[%s779 + $0xc8] sm:$0xff]
    %v1781 = vld [vmem:[%s779 + $0xd0] sm:$0xff]
    %v1782 = vld [vmem:[%s779 + $0xd8] sm:$0xff]
    %v1783 = vld [vmem:[%s779 + $0xe0] sm:$0xff]
    %v1784 = vld [vmem:[%s779 + $0xe8] sm:$0xff]
    %v1785 = vld [vmem:[%s779 + $0xf0] sm:$0xff]
    %v1786 = vld [vmem:[%s779 + $0xf8] sm:$0xff]
    %v1787 = vrot.slane %v1590, 2
    %v1788 = vrot.slane %v1591, 2
    %v1789 = vsel %vm812, %v1787, %v1788
    %1792 = vmatpush.msra.mxu0 %v1785
    %1793 = vmatpush.msra.mxu0 %v1783
    %1794 = vmatpush.msra.mxu0 %v1781
    %1795 = vmatpush.msra.mxu0 %v1779
    %1796 = vmatpush.msra.mxu0 %v1777
    %1797 = vmatpush.msra.mxu0 %v1775
    %1798 = vmatpush.msra.mxu0 %v1773
    %1799 = vmatpush.msra.mxu0 %v1771
    %1800 = vmatpush.msra.mxu0 %v1769
    %1801 = vmatpush.msra.mxu0 %v1767
    %1802 = vmatpush.msra.mxu0 %v1765
    %1803 = vmatpush.msra.mxu0 %v1763
    %1804 = vmatpush.msra.mxu0 %v1761
    %1805 = vmatpush.msra.mxu0 %v1759
    %1806 = vmatpush.msra.mxu0 %v1757
    %1807 = vmatpush.msra.mxu0 %v1755
    %1808 = vmatmul.f32.gmra.mxu0 %v1789
    %v1809 = vpop.f32.mrf.mxu0
    %v1810 = vadd.f32 0.0, %v1809
    %1811 = vmatmul.f32.gmra.mxu0 %v1788
    %v1812 = vpop.f32.mrf.mxu0
    %v1813 = vadd.f32 0.0, %v1812
    %1814 = vdwg.mxu0
    %1815 = vmatpush.msra.mxu0 %v1786
    %1816 = vmatpush.msra.mxu0 %v1784
    %1817 = vmatpush.msra.mxu0 %v1782
    %1818 = vmatpush.msra.mxu0 %v1780
    %1819 = vmatpush.msra.mxu0 %v1778
    %1820 = vmatpush.msra.mxu0 %v1776
    %1821 = vmatpush.msra.mxu0 %v1774
    %1822 = vmatpush.msra.mxu0 %v1772
    %1823 = vmatpush.msra.mxu0 %v1770
    %1824 = vmatpush.msra.mxu0 %v1768
    %1825 = vmatpush.msra.mxu0 %v1766
    %1826 = vmatpush.msra.mxu0 %v1764
    %1827 = vmatpush.msra.mxu0 %v1762
    %1828 = vmatpush.msra.mxu0 %v1760
    %1829 = vmatpush.msra.mxu0 %v1758
    %1830 = vmatpush.msra.mxu0 %v1756
    %1831 = vmatmul.f32.gmra.mxu0 %v1789
    %v1832 = vpop.f32.mrf.mxu0
    %v1833 = vadd.f32 0.0, %v1832
    %1834 = vmatmul.f32.gmra.mxu0 %v1788
    %v1835 = vpop.f32.mrf.mxu0
    %v1836 = vadd.f32 0.0, %v1835
    %1837 = vdwg.mxu0
    %v1838 = vadd.f32 %v1727, %v1810
    %v1839 = vadd.f32 %v1750, %v1833
    %v1840 = vadd.f32 %v1730, %v1813
    %v1841 = vadd.f32 %v1753, %v1836
    %v1842 = vld [vmem:[%s868] sm:$0xff]
    %v1843 = vld [vmem:[%s868 + $0x8] sm:$0xff]
    %v1844 = vld [vmem:[%s868 + $0x10] sm:$0xff]
    %v1845 = vld [vmem:[%s868 + $0x18] sm:$0xff]
    %v1846 = vld [vmem:[%s868 + $0x20] sm:$0xff]
    %v1847 = vld [vmem:[%s868 + $0x28] sm:$0xff]
    %v1848 = vld [vmem:[%s868 + $0x30] sm:$0xff]
    %v1849 = vld [vmem:[%s868 + $0x38] sm:$0xff]
    %v1850 = vld [vmem:[%s868 + $0x40] sm:$0xff]
    %v1851 = vld [vmem:[%s868 + $0x48] sm:$0xff]
    %v1852 = vld [vmem:[%s868 + $0x50] sm:$0xff]
    %v1853 = vld [vmem:[%s868 + $0x58] sm:$0xff]
    %v1854 = vld [vmem:[%s868 + $0x60] sm:$0xff]
    %v1855 = vld [vmem:[%s868 + $0x68] sm:$0xff]
    %v1856 = vld [vmem:[%s868 + $0x70] sm:$0xff]
    %v1857 = vld [vmem:[%s868 + $0x78] sm:$0xff]
    %v1858 = vld [vmem:[%s868 + $0x80] sm:$0xff]
    %v1859 = vld [vmem:[%s868 + $0x88] sm:$0xff]
    %v1860 = vld [vmem:[%s868 + $0x90] sm:$0xff]
    %v1861 = vld [vmem:[%s868 + $0x98] sm:$0xff]
    %v1862 = vld [vmem:[%s868 + $0xa0] sm:$0xff]
    %v1863 = vld [vmem:[%s868 + $0xa8] sm:$0xff]
    %v1864 = vld [vmem:[%s868 + $0xb0] sm:$0xff]
    %v1865 = vld [vmem:[%s868 + $0xb8] sm:$0xff]
    %v1866 = vld [vmem:[%s868 + $0xc0] sm:$0xff]
    %v1867 = vld [vmem:[%s868 + $0xc8] sm:$0xff]
    %v1868 = vld [vmem:[%s868 + $0xd0] sm:$0xff]
    %v1869 = vld [vmem:[%s868 + $0xd8] sm:$0xff]
    %v1870 = vld [vmem:[%s868 + $0xe0] sm:$0xff]
    %v1871 = vld [vmem:[%s868 + $0xe8] sm:$0xff]
    %v1872 = vld [vmem:[%s868 + $0xf0] sm:$0xff]
    %v1873 = vld [vmem:[%s868 + $0xf8] sm:$0xff]
    %v1874 = vrot.slane %v1590, 3
    %v1875 = vrot.slane %v1591, 3
    %v1876 = vsel %vm901, %v1874, %v1875
    %1879 = vmatpush.msra.mxu0 %v1872
    %1880 = vmatpush.msra.mxu0 %v1870
    %1881 = vmatpush.msra.mxu0 %v1868
    %1882 = vmatpush.msra.mxu0 %v1866
    %1883 = vmatpush.msra.mxu0 %v1864
    %1884 = vmatpush.msra.mxu0 %v1862
    %1885 = vmatpush.msra.mxu0 %v1860
    %1886 = vmatpush.msra.mxu0 %v1858
    %1887 = vmatpush.msra.mxu0 %v1856
    %1888 = vmatpush.msra.mxu0 %v1854
    %1889 = vmatpush.msra.mxu0 %v1852
    %1890 = vmatpush.msra.mxu0 %v1850
    %1891 = vmatpush.msra.mxu0 %v1848
    %1892 = vmatpush.msra.mxu0 %v1846
    %1893 = vmatpush.msra.mxu0 %v1844
    %1894 = vmatpush.msra.mxu0 %v1842
    %1895 = vmatmul.f32.gmra.mxu0 %v1876
    %v1896 = vpop.f32.mrf.mxu0
    %v1897 = vadd.f32 0.0, %v1896
    %1898 = vmatmul.f32.gmra.mxu0 %v1875
    %v1899 = vpop.f32.mrf.mxu0
    %v1900 = vadd.f32 0.0, %v1899
    %1901 = vdwg.mxu0
    %1902 = vmatpush.msra.mxu0 %v1873
    %1903 = vmatpush.msra.mxu0 %v1871
    %1904 = vmatpush.msra.mxu0 %v1869
    %1905 = vmatpush.msra.mxu0 %v1867
    %1906 = vmatpush.msra.mxu0 %v1865
    %1907 = vmatpush.msra.mxu0 %v1863
    %1908 = vmatpush.msra.mxu0 %v1861
    %1909 = vmatpush.msra.mxu0 %v1859
    %1910 = vmatpush.msra.mxu0 %v1857
    %1911 = vmatpush.msra.mxu0 %v1855
    %1912 = vmatpush.msra.mxu0 %v1853
    %1913 = vmatpush.msra.mxu0 %v1851
    %1914 = vmatpush.msra.mxu0 %v1849
    %1915 = vmatpush.msra.mxu0 %v1847
    %1916 = vmatpush.msra.mxu0 %v1845
    %1917 = vmatpush.msra.mxu0 %v1843
    %1918 = vmatmul.f32.gmra.mxu0 %v1876
    %v1919 = vpop.f32.mrf.mxu0
    %v1920 = vadd.f32 0.0, %v1919
    %1921 = vmatmul.f32.gmra.mxu0 %v1875
    %v1922 = vpop.f32.mrf.mxu0
    %v1923 = vadd.f32 0.0, %v1922
    %1924 = vdwg.mxu0
    %v1925 = vadd.f32 %v1838, %v1897
    %v1926 = vadd.f32 %v1839, %v1920
    %v1927 = vadd.f32 %v1840, %v1900
    %v1928 = vadd.f32 %v1841, %v1923
    %v1929 = vld [vmem:[%s957] sm:$0xff]
    %v1930 = vld [vmem:[%s957 + $0x8] sm:$0xff]
    %v1931 = vld [vmem:[%s957 + $0x10] sm:$0xff]
    %v1932 = vld [vmem:[%s957 + $0x18] sm:$0xff]
    %v1933 = vld [vmem:[%s957 + $0x20] sm:$0xff]
    %v1934 = vld [vmem:[%s957 + $0x28] sm:$0xff]
    %v1935 = vld [vmem:[%s957 + $0x30] sm:$0xff]
    %v1936 = vld [vmem:[%s957 + $0x38] sm:$0xff]
    %v1937 = vld [vmem:[%s957 + $0x40] sm:$0xff]
    %v1938 = vld [vmem:[%s957 + $0x48] sm:$0xff]
    %v1939 = vld [vmem:[%s957 + $0x50] sm:$0xff]
    %v1940 = vld [vmem:[%s957 + $0x58] sm:$0xff]
    %v1941 = vld [vmem:[%s957 + $0x60] sm:$0xff]
    %v1942 = vld [vmem:[%s957 + $0x68] sm:$0xff]
    %v1943 = vld [vmem:[%s957 + $0x70] sm:$0xff]
    %v1944 = vld [vmem:[%s957 + $0x78] sm:$0xff]
    %v1945 = vld [vmem:[%s957 + $0x80] sm:$0xff]
    %v1946 = vld [vmem:[%s957 + $0x88] sm:$0xff]
    %v1947 = vld [vmem:[%s957 + $0x90] sm:$0xff]
    %v1948 = vld [vmem:[%s957 + $0x98] sm:$0xff]
    %v1949 = vld [vmem:[%s957 + $0xa0] sm:$0xff]
    %v1950 = vld [vmem:[%s957 + $0xa8] sm:$0xff]
    %v1951 = vld [vmem:[%s957 + $0xb0] sm:$0xff]
    %v1952 = vld [vmem:[%s957 + $0xb8] sm:$0xff]
    %v1953 = vld [vmem:[%s957 + $0xc0] sm:$0xff]
    %v1954 = vld [vmem:[%s957 + $0xc8] sm:$0xff]
    %v1955 = vld [vmem:[%s957 + $0xd0] sm:$0xff]
    %v1956 = vld [vmem:[%s957 + $0xd8] sm:$0xff]
    %v1957 = vld [vmem:[%s957 + $0xe0] sm:$0xff]
    %v1958 = vld [vmem:[%s957 + $0xe8] sm:$0xff]
    %v1959 = vld [vmem:[%s957 + $0xf0] sm:$0xff]
    %v1960 = vld [vmem:[%s957 + $0xf8] sm:$0xff]
    %v1961 = vrot.slane %v1590, 4
    %v1962 = vrot.slane %v1591, 4
    %v1963 = vsel %vm990, %v1961, %v1962
    %1966 = vmatpush.msra.mxu0 %v1959
    %1967 = vmatpush.msra.mxu0 %v1957
    %1968 = vmatpush.msra.mxu0 %v1955
    %1969 = vmatpush.msra.mxu0 %v1953
    %1970 = vmatpush.msra.mxu0 %v1951
    %1971 = vmatpush.msra.mxu0 %v1949
    %1972 = vmatpush.msra.mxu0 %v1947
    %1973 = vmatpush.msra.mxu0 %v1945
    %1974 = vmatpush.msra.mxu0 %v1943
    %1975 = vmatpush.msra.mxu0 %v1941
    %1976 = vmatpush.msra.mxu0 %v1939
    %1977 = vmatpush.msra.mxu0 %v1937
    %1978 = vmatpush.msra.mxu0 %v1935
    %1979 = vmatpush.msra.mxu0 %v1933
    %1980 = vmatpush.msra.mxu0 %v1931
    %1981 = vmatpush.msra.mxu0 %v1929
    %1982 = vmatmul.f32.gmra.mxu0 %v1963
    %v1983 = vpop.f32.mrf.mxu0
    %v1984 = vadd.f32 0.0, %v1983
    %1985 = vmatmul.f32.gmra.mxu0 %v1962
    %v1986 = vpop.f32.mrf.mxu0
    %v1987 = vadd.f32 0.0, %v1986
    %1988 = vdwg.mxu0
    %1989 = vmatpush.msra.mxu0 %v1960
    %1990 = vmatpush.msra.mxu0 %v1958
    %1991 = vmatpush.msra.mxu0 %v1956
    %1992 = vmatpush.msra.mxu0 %v1954
    %1993 = vmatpush.msra.mxu0 %v1952
    %1994 = vmatpush.msra.mxu0 %v1950
    %1995 = vmatpush.msra.mxu0 %v1948
    %1996 = vmatpush.msra.mxu0 %v1946
    %1997 = vmatpush.msra.mxu0 %v1944
    %1998 = vmatpush.msra.mxu0 %v1942
    %1999 = vmatpush.msra.mxu0 %v1940
    %2000 = vmatpush.msra.mxu0 %v1938
    %2001 = vmatpush.msra.mxu0 %v1936
    %2002 = vmatpush.msra.mxu0 %v1934
    %2003 = vmatpush.msra.mxu0 %v1932
    %2004 = vmatpush.msra.mxu0 %v1930
    %2005 = vmatmul.f32.gmra.mxu0 %v1963
    %v2006 = vpop.f32.mrf.mxu0
    %v2007 = vadd.f32 0.0, %v2006
    %2008 = vmatmul.f32.gmra.mxu0 %v1962
    %v2009 = vpop.f32.mrf.mxu0
    %v2010 = vadd.f32 0.0, %v2009
    %2011 = vdwg.mxu0
    %v2012 = vadd.f32 %v1925, %v1984
    %v2013 = vadd.f32 %v1926, %v2007
    %v2014 = vadd.f32 %v1927, %v1987
    %v2015 = vadd.f32 %v1928, %v2010
    %v2016 = vadd.f32 %v2012, %v1047
    %v2017 = vadd.f32 %v2013, %v1048
    %v2018 = vadd.f32 %v2014, %v1047
    %v2019 = vadd.f32 %v2015, %v1048
    %v2020 = vmax.f32 %v2016, 0.0
    %v2021 = vmax.f32 %v2017, 0.0
    %v2022 = vmax.f32 %v2018, 0.0
    %v2023 = vmax.f32 %v2019, 0.0
    %v2024 = vmax.f32 %v2020, %v2021
    %v2025 = vmax.f32 %v2022, %v2023
    %2026 = vst [vmem:[#allocation3 + $0x10] sm:$0xff] %v2024
    %2027 = vst [vmem:[#allocation3 + $0x18] sm:$0x3] %v2025
    %v2028 = vld [vmem:[#allocation3] ss:$16 sm:$0x3]
    %s2029 = scalar_lea.vmem [#allocation3], 1
    %v2030 = vld [vmem:[%s2029] ss:$16 sm:$0x3]
    %v2031 = vmax.f32 %v2028, %v2030
    %v2032 = vld [vmem:[%s3] sm:$0xff]
    %v2033 = vld [vmem:[%s3 + $0x8] sm:$0xff]
    %v2034 = vld [vmem:[%s3 + $0x10] sm:$0xff]
    %v2035 = vld [vmem:[%s3 + $0x18] sm:$0xff]
    %v2036 = vld [vmem:[%s3 + $0x20] sm:$0xff]
    %v2037 = vld [vmem:[%s3 + $0x28] sm:$0xff]
    %v2038 = vld [vmem:[%s3 + $0x30] sm:$0xff]
    %v2039 = vld [vmem:[%s3 + $0x38] sm:$0xff]
    %v2040 = vld [vmem:[%s3 + $0x40] sm:$0xff]
    %v2041 = vld [vmem:[%s3 + $0x48] sm:$0xff]
    %v2042 = vld [vmem:[%s3 + $0x50] sm:$0xff]
    %v2043 = vld [vmem:[%s3 + $0x58] sm:$0xff]
    %v2044 = vld [vmem:[%s3 + $0x60] sm:$0xff]
    %v2045 = vld [vmem:[%s3 + $0x68] sm:$0xff]
    %v2046 = vld [vmem:[%s3 + $0x70] sm:$0xff]
    %v2047 = vld [vmem:[%s3 + $0x78] sm:$0xff]
    %s2048 = scalar_lea.vmem [#allocation3], 2
    %v2049 = vld [vmem:[%s2048] ss:$16 sm:$0x3]
    %s2050 = scalar_lea.vmem [#allocation3], 3
    %v2051 = vld [vmem:[%s2050] ss:$16 sm:$0x3]
    %v2052 = vmax.f32 %v2049, %v2051
    %s2053 = scalar_lea.vmem %s3, 128
    %v2054 = vld [vmem:[%s2053] sm:$0xff]
    %v2055 = vld [vmem:[%s2053 + $0x8] sm:$0xff]
    %v2056 = vld [vmem:[%s2053 + $0x10] sm:$0xff]
    %v2057 = vld [vmem:[%s2053 + $0x18] sm:$0xff]
    %v2058 = vld [vmem:[%s2053 + $0x20] sm:$0xff]
    %v2059 = vld [vmem:[%s2053 + $0x28] sm:$0xff]
    %v2060 = vld [vmem:[%s2053 + $0x30] sm:$0xff]
    %v2061 = vld [vmem:[%s2053 + $0x38] sm:$0xff]
    %v2062 = vld [vmem:[%s2053 + $0x40] sm:$0xff]
    %v2063 = vld [vmem:[%s2053 + $0x48] sm:$0xff]
    %v2064 = vld [vmem:[%s2053 + $0x50] sm:$0xff]
    %v2065 = vld [vmem:[%s2053 + $0x58] sm:$0xff]
    %v2066 = vld [vmem:[%s2053 + $0x60] sm:$0xff]
    %v2067 = vld [vmem:[%s2053 + $0x68] sm:$0xff]
    %v2068 = vld [vmem:[%s2053 + $0x70] sm:$0xff]
    %v2069 = vld [vmem:[%s2053 + $0x78] sm:$0xff]
    %2070 = vmatpush.msra.mxu0 %v2069
    %2071 = vmatpush.msra.mxu0 %v2068
    %2072 = vmatpush.msra.mxu0 %v2067
    %2073 = vmatpush.msra.mxu0 %v2066
    %2074 = vmatpush.msra.mxu0 %v2065
    %2075 = vmatpush.msra.mxu0 %v2064
    %2076 = vmatpush.msra.mxu0 %v2063
    %2077 = vmatpush.msra.mxu0 %v2062
    %2078 = vmatpush.msra.mxu0 %v2061
    %2079 = vmatpush.msra.mxu0 %v2060
    %2080 = vmatpush.msra.mxu0 %v2059
    %2081 = vmatpush.msra.mxu0 %v2058
    %2082 = vmatpush.msra.mxu0 %v2057
    %2083 = vmatpush.msra.mxu0 %v2056
    %2084 = vmatpush.msra.mxu0 %v2055
    %2085 = vmatpush.msra.mxu0 %v2054
    %2086 = vmatmul.f32.gmra.mxu0 %v2052
    %v2087 = vpop.f32.mrf.mxu0
    %v2088 = vadd.f32 0.0, %v2087
    %2089 = vdwg.mxu0
    %2090 = vmatpush.msra.mxu0 %v2047
    %2091 = vmatpush.msra.mxu0 %v2046
    %2092 = vmatpush.msra.mxu0 %v2045
    %2093 = vmatpush.msra.mxu0 %v2044
    %2094 = vmatpush.msra.mxu0 %v2043
    %2095 = vmatpush.msra.mxu0 %v2042
    %2096 = vmatpush.msra.mxu0 %v2041
    %2097 = vmatpush.msra.mxu0 %v2040
    %2098 = vmatpush.msra.mxu0 %v2039
    %2099 = vmatpush.msra.mxu0 %v2038
    %2100 = vmatpush.msra.mxu0 %v2037
    %2101 = vmatpush.msra.mxu0 %v2036
    %2102 = vmatpush.msra.mxu0 %v2035
    %2103 = vmatpush.msra.mxu0 %v2034
    %2104 = vmatpush.msra.mxu0 %v2033
    %2105 = vmatpush.msra.mxu0 %v2032
    %2106 = vmatmul.f32.gmra.mxu0 %v2031
    %v2107 = vpop.f32.mrf.mxu0
    %v2108 = vadd.f32 %v2088, %v2107
    %2109 = vdwg.mxu0
    %s2110 = scalar_lea.vmem [#allocation3], 4
    %v2111 = vld [vmem:[%s2110] ss:$16 sm:$0x3]
    %s2112 = scalar_lea.vmem [#allocation3], 5
    %v2113 = vld [vmem:[%s2112] ss:$16 sm:$0x3]
    %v2114 = vmax.f32 %v2111, %v2113
    %s2115 = scalar_lea.vmem %s3, 256
    %v2116 = vld [vmem:[%s2115] sm:$0xff]
    %v2117 = vld [vmem:[%s2115 + $0x8] sm:$0xff]
    %v2118 = vld [vmem:[%s2115 + $0x10] sm:$0xff]
    %v2119 = vld [vmem:[%s2115 + $0x18] sm:$0xff]
    %v2120 = vld [vmem:[%s2115 + $0x20] sm:$0xff]
    %v2121 = vld [vmem:[%s2115 + $0x28] sm:$0xff]
    %v2122 = vld [vmem:[%s2115 + $0x30] sm:$0xff]
    %v2123 = vld [vmem:[%s2115 + $0x38] sm:$0xff]
    %v2124 = vld [vmem:[%s2115 + $0x40] sm:$0xff]
    %v2125 = vld [vmem:[%s2115 + $0x48] sm:$0xff]
    %v2126 = vld [vmem:[%s2115 + $0x50] sm:$0xff]
    %v2127 = vld [vmem:[%s2115 + $0x58] sm:$0xff]
    %v2128 = vld [vmem:[%s2115 + $0x60] sm:$0xff]
    %v2129 = vld [vmem:[%s2115 + $0x68] sm:$0xff]
    %v2130 = vld [vmem:[%s2115 + $0x70] sm:$0xff]
    %v2131 = vld [vmem:[%s2115 + $0x78] sm:$0xff]
    %2132 = vmatpush.msra.mxu0 %v2131
    %2133 = vmatpush.msra.mxu0 %v2130
    %2134 = vmatpush.msra.mxu0 %v2129
    %2135 = vmatpush.msra.mxu0 %v2128
    %2136 = vmatpush.msra.mxu0 %v2127
    %2137 = vmatpush.msra.mxu0 %v2126
    %2138 = vmatpush.msra.mxu0 %v2125
    %2139 = vmatpush.msra.mxu0 %v2124
    %2140 = vmatpush.msra.mxu0 %v2123
    %2141 = vmatpush.msra.mxu0 %v2122
    %2142 = vmatpush.msra.mxu0 %v2121
    %2143 = vmatpush.msra.mxu0 %v2120
    %2144 = vmatpush.msra.mxu0 %v2119
    %2145 = vmatpush.msra.mxu0 %v2118
    %2146 = vmatpush.msra.mxu0 %v2117
    %2147 = vmatpush.msra.mxu0 %v2116
    %2148 = vmatmul.f32.gmra.mxu0 %v2114
    %v2149 = vpop.f32.mrf.mxu0
    %v2150 = vadd.f32 0.0, %v2149
    %2151 = vdwg.mxu0
    %v2152 = vadd.f32 %v2108, %v2150
    %s2153 = scalar_lea.vmem [#allocation3], 6
    %v2154 = vld [vmem:[%s2153] ss:$16 sm:$0x3]
    %s2155 = scalar_lea.vmem [#allocation3], 7
    %v2156 = vld [vmem:[%s2155] ss:$16 sm:$0x3]
    %v2157 = vmax.f32 %v2154, %v2156
    %s2158 = scalar_lea.vmem %s3, 384
    %v2159 = vld [vmem:[%s2158] sm:$0xff]
    %v2160 = vld [vmem:[%s2158 + $0x8] sm:$0xff]
    %v2161 = vld [vmem:[%s2158 + $0x10] sm:$0xff]
    %v2162 = vld [vmem:[%s2158 + $0x18] sm:$0xff]
    %v2163 = vld [vmem:[%s2158 + $0x20] sm:$0xff]
    %v2164 = vld [vmem:[%s2158 + $0x28] sm:$0xff]
    %v2165 = vld [vmem:[%s2158 + $0x30] sm:$0xff]
    %v2166 = vld [vmem:[%s2158 + $0x38] sm:$0xff]
    %v2167 = vld [vmem:[%s2158 + $0x40] sm:$0xff]
    %v2168 = vld [vmem:[%s2158 + $0x48] sm:$0xff]
    %v2169 = vld [vmem:[%s2158 + $0x50] sm:$0xff]
    %v2170 = vld [vmem:[%s2158 + $0x58] sm:$0xff]
    %v2171 = vld [vmem:[%s2158 + $0x60] sm:$0xff]
    %v2172 = vld [vmem:[%s2158 + $0x68] sm:$0xff]
    %v2173 = vld [vmem:[%s2158 + $0x70] sm:$0xff]
    %v2174 = vld [vmem:[%s2158 + $0x78] sm:$0xff]
    %2175 = vmatpush.msra.mxu0 %v2174
    %2176 = vmatpush.msra.mxu0 %v2173
    %2177 = vmatpush.msra.mxu0 %v2172
    %2178 = vmatpush.msra.mxu0 %v2171
    %2179 = vmatpush.msra.mxu0 %v2170
    %2180 = vmatpush.msra.mxu0 %v2169
    %2181 = vmatpush.msra.mxu0 %v2168
    %2182 = vmatpush.msra.mxu0 %v2167
    %2183 = vmatpush.msra.mxu0 %v2166
    %2184 = vmatpush.msra.mxu0 %v2165
    %2185 = vmatpush.msra.mxu0 %v2164
    %2186 = vmatpush.msra.mxu0 %v2163
    %2187 = vmatpush.msra.mxu0 %v2162
    %2188 = vmatpush.msra.mxu0 %v2161
    %2189 = vmatpush.msra.mxu0 %v2160
    %2190 = vmatpush.msra.mxu0 %v2159
    %2191 = vmatmul.f32.gmra.mxu0 %v2157
    %v2192 = vpop.f32.mrf.mxu0
    %v2193 = vadd.f32 0.0, %v2192
    %2194 = vdwg.mxu0
    %v2195 = vadd.f32 %v2152, %v2193
    %s2196 = scalar_lea.vmem [#allocation3], 8
    %v2197 = vld [vmem:[%s2196] ss:$16 sm:$0x3]
    %s2198 = scalar_lea.vmem [#allocation3], 9
    %v2199 = vld [vmem:[%s2198] ss:$16 sm:$0x3]
    %v2200 = vmax.f32 %v2197, %v2199
    %s2201 = scalar_lea.vmem %s3, 512
    %v2202 = vld [vmem:[%s2201] sm:$0xff]
    %v2203 = vld [vmem:[%s2201 + $0x8] sm:$0xff]
    %v2204 = vld [vmem:[%s2201 + $0x10] sm:$0xff]
    %v2205 = vld [vmem:[%s2201 + $0x18] sm:$0xff]
    %v2206 = vld [vmem:[%s2201 + $0x20] sm:$0xff]
    %v2207 = vld [vmem:[%s2201 + $0x28] sm:$0xff]
    %v2208 = vld [vmem:[%s2201 + $0x30] sm:$0xff]
    %v2209 = vld [vmem:[%s2201 + $0x38] sm:$0xff]
    %v2210 = vld [vmem:[%s2201 + $0x40] sm:$0xff]
    %v2211 = vld [vmem:[%s2201 + $0x48] sm:$0xff]
    %v2212 = vld [vmem:[%s2201 + $0x50] sm:$0xff]
    %v2213 = vld [vmem:[%s2201 + $0x58] sm:$0xff]
    %v2214 = vld [vmem:[%s2201 + $0x60] sm:$0xff]
    %v2215 = vld [vmem:[%s2201 + $0x68] sm:$0xff]
    %v2216 = vld [vmem:[%s2201 + $0x70] sm:$0xff]
    %v2217 = vld [vmem:[%s2201 + $0x78] sm:$0xff]
    %2218 = vmatpush.msra.mxu0 %v2217
    %2219 = vmatpush.msra.mxu0 %v2216
    %2220 = vmatpush.msra.mxu0 %v2215
    %2221 = vmatpush.msra.mxu0 %v2214
    %2222 = vmatpush.msra.mxu0 %v2213
    %2223 = vmatpush.msra.mxu0 %v2212
    %2224 = vmatpush.msra.mxu0 %v2211
    %2225 = vmatpush.msra.mxu0 %v2210
    %2226 = vmatpush.msra.mxu0 %v2209
    %2227 = vmatpush.msra.mxu0 %v2208
    %2228 = vmatpush.msra.mxu0 %v2207
    %2229 = vmatpush.msra.mxu0 %v2206
    %2230 = vmatpush.msra.mxu0 %v2205
    %2231 = vmatpush.msra.mxu0 %v2204
    %2232 = vmatpush.msra.mxu0 %v2203
    %2233 = vmatpush.msra.mxu0 %v2202
    %2234 = vmatmul.f32.gmra.mxu0 %v2200
    %v2235 = vpop.f32.mrf.mxu0
    %v2236 = vadd.f32 0.0, %v2235
    %2237 = vdwg.mxu0
    %v2238 = vadd.f32 %v2195, %v2236
    %v2239 = vperm.slane %v75, 0
    %v2240 = vadd.f32 %v2238, %v2239
    %v2241 = vmax.f32 %v2240, 0.0
    %v2242 = vld [vmem:[%s4] sm:$0xff]
    %v2243 = vld [vmem:[%s4 + $0x8] sm:$0xff]
    %v2244 = vld [vmem:[%s4 + $0x10] sm:$0xff]
    %v2245 = vld [vmem:[%s4 + $0x18] sm:$0xff]
    %v2246 = vld [vmem:[%s4 + $0x20] sm:$0xff]
    %v2247 = vld [vmem:[%s4 + $0x28] sm:$0xff]
    %v2248 = vld [vmem:[%s4 + $0x30] sm:$0xff]
    %v2249 = vld [vmem:[%s4 + $0x38] sm:$0xff]
    %v2250 = vld [vmem:[%s4 + $0x40] sm:$0xff]
    %v2251 = vld [vmem:[%s4 + $0x48] sm:$0xff]
    %v2252 = vld [vmem:[%s4 + $0x50] sm:$0xff]
    %v2253 = vld [vmem:[%s4 + $0x58] sm:$0xff]
    %v2254 = vld [vmem:[%s4 + $0x60] sm:$0xff]
    %v2255 = vld [vmem:[%s4 + $0x68] sm:$0xff]
    %v2256 = vld [vmem:[%s4 + $0x70] sm:$0xff]
    %v2257 = vld [vmem:[%s4 + $0x78] sm:$0xff]
    %v2258 = vperm.slane %v76, 0
    %2259 = vmatpush.msra.mxu0 %v2257
    %2260 = vmatpush.msra.mxu0 %v2256
    %2261 = vmatpush.msra.mxu0 %v2255
    %2262 = vmatpush.msra.mxu0 %v2254
    %2263 = vmatpush.msra.mxu0 %v2253
    %2264 = vmatpush.msra.mxu0 %v2252
    %2265 = vmatpush.msra.mxu0 %v2251
    %2266 = vmatpush.msra.mxu0 %v2250
    %2267 = vmatpush.msra.mxu0 %v2249
    %2268 = vmatpush.msra.mxu0 %v2248
    %2269 = vmatpush.msra.mxu0 %v2247
    %2270 = vmatpush.msra.mxu0 %v2246
    %2271 = vmatpush.msra.mxu0 %v2245
    %2272 = vmatpush.msra.mxu0 %v2244
    %2273 = vmatpush.msra.mxu0 %v2243
    %2274 = vmatpush.msra.mxu0 %v2242
    %2275 = vmatmul.f32.gmra.mxu0 %v2241
    %v2276 = vpop.f32.mrf.mxu0
    %v2277 = vadd.f32 %v2258, %v2276
    %2278 = vdwg.mxu0
    %v2279 = vmax.f32 %v2277, 0.0
    %v2280 = vld [vmem:[%s5] sm:$0xff]
    %v2281 = vld [vmem:[%s5 + $0x8] sm:$0xff]
    %v2282 = vld [vmem:[%s5 + $0x10] sm:$0xff]
    %v2283 = vld [vmem:[%s5 + $0x18] sm:$0xff]
    %v2284 = vld [vmem:[%s5 + $0x20] sm:$0xff]
    %v2285 = vld [vmem:[%s5 + $0x28] sm:$0xff]
    %v2286 = vld [vmem:[%s5 + $0x30] sm:$0xff]
    %v2287 = vld [vmem:[%s5 + $0x38] sm:$0xff]
    %v2288 = vld [vmem:[%s5 + $0x40] sm:$0xff]
    %v2289 = vld [vmem:[%s5 + $0x48] sm:$0xff]
    %v2290 = vld [vmem:[%s5 + $0x50] sm:$0xff]
    %v2291 = vld [vmem:[%s5 + $0x58] sm:$0xff]
    %v2292 = vld [vmem:[%s5 + $0x60] sm:$0xff]
    %v2293 = vld [vmem:[%s5 + $0x68] sm:$0xff]
    %v2294 = vld [vmem:[%s5 + $0x70] sm:$0xff]
    %v2295 = vld [vmem:[%s5 + $0x78] sm:$0xff]
    %v2296 = vperm.slane %v77, 0
    %2297 = vmatpush.msra.mxu0 %v2295
    %2298 = vmatpush.msra.mxu0 %v2294
    %2299 = vmatpush.msra.mxu0 %v2293
    %2300 = vmatpush.msra.mxu0 %v2292
    %2301 = vmatpush.msra.mxu0 %v2291
    %2302 = vmatpush.msra.mxu0 %v2290
    %2303 = vmatpush.msra.mxu0 %v2289
    %2304 = vmatpush.msra.mxu0 %v2288
    %2305 = vmatpush.msra.mxu0 %v2287
    %2306 = vmatpush.msra.mxu0 %v2286
    %2307 = vmatpush.msra.mxu0 %v2285
    %2308 = vmatpush.msra.mxu0 %v2284
    %2309 = vmatpush.msra.mxu0 %v2283
    %2310 = vmatpush.msra.mxu0 %v2282
    %2311 = vmatpush.msra.mxu0 %v2281
    %2312 = vmatpush.msra.mxu0 %v2280
    %2313 = vmatmul.f32.gmra.mxu0 %v2279
    %v2314 = vpop.f32.mrf.mxu0
    %v2315 = vadd.f32 %v2296, %v2314
    %2316 = vdwg.mxu0
    %2317 = vst [vmem:[#allocation10] sm:$0x3] %v2315
    // Predicated region
    $region42: #{net_forward.1} parent=1 // pred_check
      _
    $region43: #{net_forward.1} parent=1 // pred_check_branch
      %2319 = sbr.rel (0) target = $region45
    $region44: #{net_forward.1} parent=1 // pred_region
      %2321 = vsyncadd [#allocation6], 0
      %s2323 = sshll.u32 [#allocation10], 4
      %s2324 = int_to_ptr.vmem [resolvable:$true] %s2323
      %s2325 = sshll.u32 %s7, 4
      %s2326 = int_to_ptr.hbm [resolvable:$true] %s2325
      %2328 = dma.vmem_to_hbm [thread:$0]  %s2324, 32, %s2326, [#allocation6]
    $region45: #{net_forward.1} parent=1 // pred_fallthru
      _
    // Predicated region
    $region46: #{net_forward.1} parent=1 // pred_check
      _
    $region47: #{net_forward.1} parent=1 // pred_check_branch
      %2330 = sbr.rel (0) target = $region49
    $region48: #{net_forward.1} parent=1 // pred_region
      %2332 = dma.done [#allocation6], 32
    $region49: #{net_forward.1} parent=1 // pred_fallthru
      _
    %2333 = vsyncpa [#allocation5], 1
    %2334 = vsyncpa [#allocation8], 1
    %2335 = vsyncpa [#allocation6], 1

</llo_original>
